<compile_context>
chip_gen: v5e
topology: v5e:2x2
jax: 0.10.0
libtpu: 0.0.40
codegen_flags: <defaults>
</compile_context>

<pallas_src>
import functools

import jax
import jax.numpy as jnp
from jax.experimental import pallas as pl
from jax.experimental.pallas import tpu as pltpu

_LANES = 128


# -----------------------------------------------------------------------------
# Kernel: all fusion stages + regression head for one (batch, node-tile) block.
#
# refs layout:
#   [0] x_ref     (1, NT, L)  f32  raw time-series rows for this block
#   [1] embp_ref  (NT, DP)    f32  adaptive node emb, pre-placed at lanes [L, L+nd)
#   [2] ex_ref    (L, DP)     f32  selection matrix: places x at lanes [0, L)
#   if num_steps > 1:
#     [3]               (DP, DP) f32  shift: pred lanes [0,fo) -> [L+nd, L+nd+fo)
#     [4 .. 3+ns-1]     (DP, DP) f32  shifts: pred lanes [0,fo) -> [s*fo, (s+1)*fo)
#   then 6 refs per stage (num_steps fusion stages + optional regression):
#     w1 (nl,DP,DP) bf16, b1 (nl,1,DP) f32, w2 (nl,DP,DP) bf16,
#     b2 (nl,1,DP) f32,   wo (DP,DP)   bf16, bo (1,DP)    f32
#   [-1] o_ref    (1, NT, out_w) f32
# -----------------------------------------------------------------------------
def _blstf_kernel(num_steps, num_layers, out_w, *refs):
    o_ref = refs[-1]
    x_ref, embp_ref, ex_ref = refs[0], refs[1], refs[2]
    pos = 3
    pshift_ref = None
    rshift_refs = ()
    if num_steps > 1:
        pshift_ref = refs[pos]
        rshift_refs = refs[pos + 1:pos + num_steps]
        pos += num_steps
    stage_refs = refs[pos:-1]
    stages = [stage_refs[6 * i:6 * i + 6] for i in range(len(stage_refs) // 6)]

    def run_stage(h0, stage):
        w1, b1, w2, b2, wo, bo = stage
        h = h0
        for l in range(num_layers):                      # static unroll
            z = jnp.dot(h.astype(jnp.bfloat16), w1[l],
                        preferred_element_type=jnp.float32) + b1[l]
            z = jnp.maximum(z, 0.0)                      # ReLU
            h = h + jnp.dot(z.astype(jnp.bfloat16), w2[l],
                            preferred_element_type=jnp.float32) + b2[l]
        return jnp.dot(h.astype(jnp.bfloat16), wo[...],
                       preferred_element_type=jnp.float32) + bo[...]

    # Lane-dense 128-wide residual base = concat([x | node_emb]) realized as a
    # split-weight (selection) matmul in f32 plus the pre-padded embedding tile.
    x = x_ref[0]                                          # (NT, L) f32
    base = jnp.dot(x, ex_ref[...],
                   preferred_element_type=jnp.float32) + embp_ref[...]

    preds = []
    h0 = base
    for s in range(num_steps):                            # static unroll
        p = run_stage(h0, stages[s])                      # (NT, DP), valid lanes [0, fo)
        preds.append(p)
        if s + 1 < num_steps:
            # next fusion stage input = [x | emb | latest predict]
            h0 = base + jnp.dot(p, pshift_ref[...],
                                preferred_element_type=jnp.float32)

    if num_steps > 1:
        # regression head input = concat(all per-step predicts)
        hr = preds[0]                                     # already at lanes [0, fo)
        for s in range(1, num_steps):
            hr = hr + jnp.dot(preds[s], rshift_refs[s - 1][...],
                              preferred_element_type=jnp.float32)
        out = run_stage(hr, stages[-1])                   # valid lanes [0, out_w)
    else:
        out = preds[0]

    o_ref[0] = out[:, :out_w].astype(o_ref.dtype)


# -----------------------------------------------------------------------------
# Parameter construction (deterministic, PyTorch-Linear-like uniform init).
# Weights are stored (in_features, out_features) so the kernel does x @ W + b.
# -----------------------------------------------------------------------------
def _linear_params(key, d_in, d_out):
    kw, kb = jax.random.split(key)
    bound = 1.0 / jnp.sqrt(jnp.float32(d_in))
    w = jax.random.uniform(kw, (d_in, d_out), jnp.float32, -bound, bound)
    b = jax.random.uniform(kb, (1, d_out), jnp.float32, -bound, bound)
    return w, b


def _stage_params(key, d_in, d_out, num_layers):
    keys = jax.random.split(key, 2 * num_layers + 1)
    w1s, b1s, w2s, b2s = [], [], [], []
    for l in range(num_layers):
        w1, b1 = _linear_params(keys[2 * l], d_in, d_in)
        w2, b2 = _linear_params(keys[2 * l + 1], d_in, d_in)
        w1s.append(w1); b1s.append(b1); w2s.append(w2); b2s.append(b2)
    wo, bo = _linear_params(keys[-1], d_in, d_out)
    return (jnp.stack(w1s), jnp.stack(b1s), jnp.stack(w2s), jnp.stack(b2s), wo, bo)


def init_blstf_params(key, cfg):
    num_nodes = cfg["num_nodes"]
    input_len = cfg["input_len"]
    output_len = cfg["output_len"]
    node_dim = cfg["node_dim"]
    fusion_num_step = cfg["fusion_num_step"]
    fusion_num_layer = cfg["fusion_num_layer"]
    fusion_out_dim = cfg["fusion_out_dim"]

    st_dim = node_dim                      # graph_num > 0 (if_ada), no temporal emb
    output_dim = fusion_num_step * fusion_out_dim

    keys = jax.random.split(key, fusion_num_step + 2)
    params = {}

    # adaptive adjacency embedding, xavier_uniform_
    limit = jnp.sqrt(6.0 / (num_nodes + node_dim))
    params["adj_mx_ada"] = jax.random.uniform(
        keys[0], (num_nodes, node_dim), jnp.float32, -limit, limit)

    # NOTE: reconstruction uses square (d_in x d_in) hidden layers (STID style);
    # cfg['fusion_dim'] is intentionally unused here.
    params["fusion"] = []
    for s in range(fusion_num_step):
        d_in = st_dim + input_len + (fusion_out_dim if s > 0 else 0)
        params["fusion"].append(
            _stage_params(keys[1 + s], d_in, fusion_out_dim, fusion_num_layer))

    if fusion_num_step > 1:
        params["regression"] = _stage_params(
            keys[-1], output_dim, output_len, fusion_num_layer)
    return params


# -----------------------------------------------------------------------------
# Padding helpers: weights -> (DP, DP) bf16, biases -> (., DP) f32 (zero pad
# keeps padded lanes exactly zero through the whole residual stack).
# -----------------------------------------------------------------------------
def _prepare_stage(stage, dp):
    w1, b1, w2, b2, wo, bo = stage
    d = w1.shape[-1]
    pw = dp - d
    w1p = jnp.pad(w1, ((0, 0), (0, pw), (0, pw))).astype(jnp.bfloat16)
    b1p = jnp.pad(b1, ((0, 0), (0, 0), (0, pw))).astype(jnp.float32)
    w2p = jnp.pad(w2, ((0, 0), (0, pw), (0, pw))).astype(jnp.bfloat16)
    b2p = jnp.pad(b2, ((0, 0), (0, 0), (0, pw))).astype(jnp.float32)
    wop = jnp.pad(wo, ((0, dp - wo.shape[0]),
                       (0, dp - wo.shape[1]))).astype(jnp.bfloat16)
    bop = jnp.pad(bo, ((0, 0), (0, dp - bo.shape[1]))).astype(jnp.float32)
    return [w1p, b1p, w2p, b2p, wop, bop]


def _select_rows(rows, dp, offset):
    """(rows, dp) f32 matrix: places an (R, rows) operand at lanes [offset, offset+rows)."""
    idx = jnp.arange(rows)
    return jnp.zeros((rows, dp), jnp.float32).at[idx, offset + idx].set(1.0)


def _shift_lanes(dp, width, offset):
    """(dp, dp) f32 matrix: moves lanes [0, width) of an (R, dp) operand to [offset, ...)."""
    idx = jnp.arange(width)
    return jnp.zeros((dp, dp), jnp.float32).at[idx, offset + idx].set(1.0)


# -----------------------------------------------------------------------------
# Full forward pass: cheap slice/transpose glue in plain JAX, everything else
# in the single fused Pallas kernel.
# -----------------------------------------------------------------------------
def blstf_forward(params, cfg, history_data, future_data=None, batch_seen=0,
                  epoch=0, *, weight_buffer_count=1):
    del future_data, batch_seen, epoch
    node_dim = cfg["node_dim"]
    num_steps = cfg["fusion_num_step"]
    num_layers = cfg["fusion_num_layer"]
    fo = cfg["fusion_out_dim"]
    output_len = cfg["output_len"]

    # input_data = history_data[..., 0].transpose(1, 2) -> (B, N, L), kept f32
    # (only MXU operands are cast to bf16 inside the kernel).
    # TODO(synk): at production shapes fold this transpose into the kernel
    # (feed (B, L, N) and contract layer-0 over L) to avoid an extra HBM pass.
    x = jnp.transpose(history_data[..., 0], (0, 2, 1)).astype(jnp.float32)
    B, N, L = x.shape

    d_base = L + node_dim
    widths = [d_base]
    if num_steps > 1:
        widths += [d_base + fo, num_steps * fo]
    dp = _LANES * pl.cdiv(max(widths), _LANES)      # lane-padded feature width
    out_w = output_len if num_steps > 1 else fo

    # Node-tile size: multiple of 8 rows, capped at 256 (fills the MXU M dim at
    # production node counts and yields several even grid steps for megacore).
    nt = 256 if N >= 256 else 8 * pl.cdiv(N, 8)
    n_pad = nt * pl.cdiv(N, nt)
    if n_pad != N:
        x = jnp.pad(x, ((0, 0), (0, n_pad - N), (0, 0)))

    # Adaptive node embedding pre-placed at lanes [L, L+node_dim): hoisted,
    # batch-invariant; no per-step masked lane-offset store inside the kernel.
    emb_pad = jnp.pad(params["adj_mx_ada"].astype(jnp.float32),
                      ((0, n_pad - N), (L, dp - L - node_dim)))

    consts = [_select_rows(L, dp, 0)]                        # x -> lanes [0, L)
    if num_steps > 1:
        consts.append(_shift_lanes(dp, fo, d_base))          # pred feedback lanes
        for s in range(1, num_steps):
            consts.append(_shift_lanes(dp, fo, s * fo))      # regression concat lanes

    stages = list(params["fusion"])
    if num_steps > 1:
        stages.append(params["regression"])
    flat = []
    for st in stages:
        flat += _prepare_stage(st, dp)

    def _const_spec(a):
        nd = a.ndim
        idx = lambda b, n, _nd=nd: (0,) * _nd
        if weight_buffer_count is not None:
            try:
                # Single-buffer the grid-invariant weight stacks (v7x VMEM headroom).
                return pl.BlockSpec(a.shape, idx,
                                    pipeline_mode=pl.Buffered(weight_buffer_count))
            except Exception:
                pass
        return pl.BlockSpec(a.shape, idx)

    kernel = functools.partial(_blstf_kernel, num_steps, num_layers, out_w)

    out = pl.pallas_call(
        kernel,
        out_shape=jax.ShapeDtypeStruct((B, n_pad, out_w), jnp.float32),
        grid=(B, n_pad // nt),
        in_specs=[
            pl.BlockSpec((1, nt, L), lambda b, n: (b, n, 0)),
            pl.BlockSpec((nt, dp), lambda b, n: (n, 0)),
            *[_const_spec(a) for a in consts],
            *[_const_spec(a) for a in flat],
        ],
        out_specs=pl.BlockSpec((1, nt, out_w), lambda b, n: (b, n, 0)),
        compiler_params=pltpu.CompilerParams(
            dimension_semantics=("parallel", "parallel"),
            vmem_limit_bytes=32 * 1024 * 1024,
        ),
    )(x, emb_pad, *consts, *flat)

    pred = out[:, :N, :]                                  # (B, N, output_len)
    # predicts.transpose(1, 2).unsqueeze(-1) -> (B, output_len, N, 1)
    # TODO(synk): at production node counts, store the output transposed in-kernel
    # ((out_len, NT) with N on lanes) to make the store lane-dense and drop this.
    return jnp.transpose(pred, (0, 2, 1))[..., None]


# -----------------------------------------------------------------------------
if __name__ == "__main__":
    cfg = dict(
        num_nodes=16,
        input_len=8,
        output_len=8,
        node_dim=32,
        nhead=2,
        fusion_num_step=2,
        fusion_num_layer=2,
        fusion_dim=32,
        fusion_out_dim=16,
        fusion_dropout=0.1,
        if_decouple=False,
        if_forward=False,
        if_backward=False,
        if_ada=True,
        if_T_i_D=False,
        if_D_i_W=False,
        temp_dim_tid=32,
        temp_dim_diw=32,
    )

    key = jax.random.PRNGKey(0)
    k_param, k_hist = jax.random.split(key)

    params = init_blstf_params(k_param, cfg)

    B, L, N, C = 2, cfg["input_len"], cfg["num_nodes"], 3
    history_data = jax.random.normal(k_hist, (B, L, N, C), dtype=jnp.float32)

    def _run(buffering):
        fwd = jax.jit(functools.partial(blstf_forward, params, cfg,
                                        weight_buffer_count=buffering))
        return jax.block_until_ready(fwd(history_data))

    try:
        out = _run(1)          # single-buffered grid-invariant weights
    except Exception:
        out = _run(None)       # fallback: default (double-buffered) BlockSpecs

    assert out.shape == (B, cfg["output_len"], N, 1), out.shape
    assert bool(jnp.all(jnp.isfinite(out)))
    print("KERNEL_OK")
</pallas_src>

<mosaic_0001>
module attributes {stable_mosaic.version = 11 : i64} {
  func.func @_blstf_kernel(%arg0: i32, %arg1: i32, %arg2: memref<1x16x8xf32, #tpu.memory_space<vmem>>, %arg3: memref<16x128xf32, #tpu.memory_space<vmem>>, %arg4: memref<8x128xf32, #tpu.memory_space<vmem>>, %arg5: memref<128x128xf32, #tpu.memory_space<vmem>>, %arg6: memref<128x128xf32, #tpu.memory_space<vmem>>, %arg7: memref<2x128x128xbf16, #tpu.memory_space<vmem>>, %arg8: memref<2x1x128xf32, #tpu.memory_space<vmem>>, %arg9: memref<2x128x128xbf16, #tpu.memory_space<vmem>>, %arg10: memref<2x1x128xf32, #tpu.memory_space<vmem>>, %arg11: memref<128x128xbf16, #tpu.memory_space<vmem>>, %arg12: memref<1x128xf32, #tpu.memory_space<vmem>>, %arg13: memref<2x128x128xbf16, #tpu.memory_space<vmem>>, %arg14: memref<2x1x128xf32, #tpu.memory_space<vmem>>, %arg15: memref<2x128x128xbf16, #tpu.memory_space<vmem>>, %arg16: memref<2x1x128xf32, #tpu.memory_space<vmem>>, %arg17: memref<128x128xbf16, #tpu.memory_space<vmem>>, %arg18: memref<1x128xf32, #tpu.memory_space<vmem>>, %arg19: memref<2x128x128xbf16, #tpu.memory_space<vmem>>, %arg20: memref<2x1x128xf32, #tpu.memory_space<vmem>>, %arg21: memref<2x128x128xbf16, #tpu.memory_space<vmem>>, %arg22: memref<2x1x128xf32, #tpu.memory_space<vmem>>, %arg23: memref<128x128xbf16, #tpu.memory_space<vmem>>, %arg24: memref<1x128xf32, #tpu.memory_space<vmem>>, %arg25: memref<1x16x8xf32, #tpu.memory_space<vmem>>) attributes {dimension_semantics = [#tpu.dimension_semantics<parallel>, #tpu.dimension_semantics<parallel>], iteration_bounds = array<i64: 2, 1>, scalar_prefetch = 0 : i64, scratch_operands = 0 : i64, tpu.core_type = #tpu.core_type<tc>, window_params = [{transform_indices = @transform_0, window_bounds = array<i64: 1, 16, 8>}, {transform_indices = @transform_1, window_bounds = array<i64: 16, 128>}, {pipeline_mode = #tpu.pipeline_mode<synchronous>, transform_indices = @transform_2, window_bounds = array<i64: 8, 128>}, {pipeline_mode = #tpu.pipeline_mode<synchronous>, transform_indices = @transform_3, window_bounds = array<i64: 128, 128>}, {pipeline_mode = #tpu.pipeline_mode<synchronous>, transform_indices = @transform_4, window_bounds = array<i64: 128, 128>}, {pipeline_mode = #tpu.pipeline_mode<synchronous>, transform_indices = @transform_5, window_bounds = array<i64: 2, 128, 128>}, {pipeline_mode = #tpu.pipeline_mode<synchronous>, transform_indices = @transform_6, window_bounds = array<i64: 2, 1, 128>}, {pipeline_mode = #tpu.pipeline_mode<synchronous>, transform_indices = @transform_7, window_bounds = array<i64: 2, 128, 128>}, {pipeline_mode = #tpu.pipeline_mode<synchronous>, transform_indices = @transform_8, window_bounds = array<i64: 2, 1, 128>}, {pipeline_mode = #tpu.pipeline_mode<synchronous>, transform_indices = @transform_9, window_bounds = array<i64: 128, 128>}, {pipeline_mode = #tpu.pipeline_mode<synchronous>, transform_indices = @transform_10, window_bounds = array<i64: 1, 128>}, {pipeline_mode = #tpu.pipeline_mode<synchronous>, transform_indices = @transform_11, window_bounds = array<i64: 2, 128, 128>}, {pipeline_mode = #tpu.pipeline_mode<synchronous>, transform_indices = @transform_12, window_bounds = array<i64: 2, 1, 128>}, {pipeline_mode = #tpu.pipeline_mode<synchronous>, transform_indices = @transform_13, window_bounds = array<i64: 2, 128, 128>}, {pipeline_mode = #tpu.pipeline_mode<synchronous>, transform_indices = @transform_14, window_bounds = array<i64: 2, 1, 128>}, {pipeline_mode = #tpu.pipeline_mode<synchronous>, transform_indices = @transform_15, window_bounds = array<i64: 128, 128>}, {pipeline_mode = #tpu.pipeline_mode<synchronous>, transform_indices = @transform_16, window_bounds = array<i64: 1, 128>}, {pipeline_mode = #tpu.pipeline_mode<synchronous>, transform_indices = @transform_17, window_bounds = array<i64: 2, 128, 128>}, {pipeline_mode = #tpu.pipeline_mode<synchronous>, transform_indices = @transform_18, window_bounds = array<i64: 2, 1, 128>}, {pipeline_mode = #tpu.pipeline_mode<synchronous>, transform_indices = @transform_19, window_bounds = array<i64: 2, 128, 128>}, {pipeline_mode = #tpu.pipeline_mode<synchronous>, transform_indices = @transform_20, window_bounds = array<i64: 2, 1, 128>}, {pipeline_mode = #tpu.pipeline_mode<synchronous>, transform_indices = @transform_21, window_bounds = array<i64: 128, 128>}, {pipeline_mode = #tpu.pipeline_mode<synchronous>, transform_indices = @transform_22, window_bounds = array<i64: 1, 128>}, {transform_indices = @transform_23, window_bounds = array<i64: 1, 16, 8>}]} {
    %c0 = arith.constant 0 : index
    %c0_0 = arith.constant 0 : index
    %c0_1 = arith.constant 0 : index
    %0 = vector.load %arg2[%c0, %c0_0, %c0_1] : memref<1x16x8xf32, #tpu.memory_space<vmem>>, vector<1x16x8xf32>
    %1 = vector.shape_cast %0 : vector<1x16x8xf32> to vector<16x8xf32>
    %c0_2 = arith.constant 0 : index
    %c0_3 = arith.constant 0 : index
    %2 = vector.load %arg4[%c0_2, %c0_3] : memref<8x128xf32, #tpu.memory_space<vmem>>, vector<8x128xf32>
    %cst = arith.constant dense<0.000000e+00> : vector<16x128xf32>
    %3 = tpu.matmul %1, %2, %cst {dimension_numbers = #tpu.dot_dimension_numbers<[1], [0], [0], [1], [0, 0, 1, 1], [], []>} : vector<16x8xf32>, vector<8x128xf32>, vector<16x128xf32> -> vector<16x128xf32>
    %c0_4 = arith.constant 0 : index
    %c0_5 = arith.constant 0 : index
    %4 = vector.load %arg3[%c0_4, %c0_5] : memref<16x128xf32, #tpu.memory_space<vmem>>, vector<16x128xf32>
    %5 = arith.addf %3, %4 : vector<16x128xf32>
    %6 = arith.truncf %5 : vector<16x128xf32> to vector<16x128xbf16>
    %c0_6 = arith.constant 0 : index
    %c0_7 = arith.constant 0 : index
    %c0_8 = arith.constant 0 : index
    %7 = vector.load %arg7[%c0_6, %c0_7, %c0_8] : memref<2x128x128xbf16, #tpu.memory_space<vmem>>, vector<1x128x128xbf16>
    %8 = vector.shape_cast %7 : vector<1x128x128xbf16> to vector<128x128xbf16>
    %cst_9 = arith.constant dense<0.000000e+00> : vector<16x128xf32>
    %9 = tpu.matmul %6, %8, %cst_9 {dimension_numbers = #tpu.dot_dimension_numbers<[1], [0], [0], [1], [0, 0, 1, 1], [], []>} : vector<16x128xbf16>, vector<128x128xbf16>, vector<16x128xf32> -> vector<16x128xf32>
    %c0_10 = arith.constant 0 : index
    %c0_11 = arith.constant 0 : index
    %c0_12 = arith.constant 0 : index
    %10 = vector.load %arg8[%c0_10, %c0_11, %c0_12] : memref<2x1x128xf32, #tpu.memory_space<vmem>>, vector<1x1x128xf32>
    %11 = vector.shape_cast %10 : vector<1x1x128xf32> to vector<1x128xf32>
    %12 = vector.broadcast %11 : vector<1x128xf32> to vector<16x128xf32>
    %13 = arith.addf %9, %12 : vector<16x128xf32>
    %cst_13 = arith.constant 0.000000e+00 : f32
    %14 = vector.broadcast %cst_13 : f32 to vector<16x128xf32>
    %15 = arith.maximumf %13, %14 : vector<16x128xf32>
    %16 = arith.truncf %15 : vector<16x128xf32> to vector<16x128xbf16>
    %c0_14 = arith.constant 0 : index
    %c0_15 = arith.constant 0 : index
    %c0_16 = arith.constant 0 : index
    %17 = vector.load %arg9[%c0_14, %c0_15, %c0_16] : memref<2x128x128xbf16, #tpu.memory_space<vmem>>, vector<1x128x128xbf16>
    %18 = vector.shape_cast %17 : vector<1x128x128xbf16> to vector<128x128xbf16>
    %cst_17 = arith.constant dense<0.000000e+00> : vector<16x128xf32>
    %19 = tpu.matmul %16, %18, %cst_17 {dimension_numbers = #tpu.dot_dimension_numbers<[1], [0], [0], [1], [0, 0, 1, 1], [], []>} : vector<16x128xbf16>, vector<128x128xbf16>, vector<16x128xf32> -> vector<16x128xf32>
    %20 = arith.addf %5, %19 : vector<16x128xf32>
    %c0_18 = arith.constant 0 : index
    %c0_19 = arith.constant 0 : index
    %c0_20 = arith.constant 0 : index
    %21 = vector.load %arg10[%c0_18, %c0_19, %c0_20] : memref<2x1x128xf32, #tpu.memory_space<vmem>>, vector<1x1x128xf32>
    %22 = vector.shape_cast %21 : vector<1x1x128xf32> to vector<1x128xf32>
    %23 = vector.broadcast %22 : vector<1x128xf32> to vector<16x128xf32>
    %24 = arith.addf %20, %23 : vector<16x128xf32>
    %25 = arith.truncf %24 : vector<16x128xf32> to vector<16x128xbf16>
    %c1 = arith.constant 1 : index
    %c0_21 = arith.constant 0 : index
    %c0_22 = arith.constant 0 : index
    %26 = vector.load %arg7[%c1, %c0_21, %c0_22] : memref<2x128x128xbf16, #tpu.memory_space<vmem>>, vector<1x128x128xbf16>
    %27 = vector.shape_cast %26 : vector<1x128x128xbf16> to vector<128x128xbf16>
    %cst_23 = arith.constant dense<0.000000e+00> : vector<16x128xf32>
    %28 = tpu.matmul %25, %27, %cst_23 {dimension_numbers = #tpu.dot_dimension_numbers<[1], [0], [0], [1], [0, 0, 1, 1], [], []>} : vector<16x128xbf16>, vector<128x128xbf16>, vector<16x128xf32> -> vector<16x128xf32>
    %c1_24 = arith.constant 1 : index
    %c0_25 = arith.constant 0 : index
    %c0_26 = arith.constant 0 : index
    %29 = vector.load %arg8[%c1_24, %c0_25, %c0_26] : memref<2x1x128xf32, #tpu.memory_space<vmem>>, vector<1x1x128xf32>
    %30 = vector.shape_cast %29 : vector<1x1x128xf32> to vector<1x128xf32>
    %31 = vector.broadcast %30 : vector<1x128xf32> to vector<16x128xf32>
    %32 = arith.addf %28, %31 : vector<16x128xf32>
    %cst_27 = arith.constant 0.000000e+00 : f32
    %33 = vector.broadcast %cst_27 : f32 to vector<16x128xf32>
    %34 = arith.maximumf %32, %33 : vector<16x128xf32>
    %35 = arith.truncf %34 : vector<16x128xf32> to vector<16x128xbf16>
    %c1_28 = arith.constant 1 : index
    %c0_29 = arith.constant 0 : index
    %c0_30 = arith.constant 0 : index
    %36 = vector.load %arg9[%c1_28, %c0_29, %c0_30] : memref<2x128x128xbf16, #tpu.memory_space<vmem>>, vector<1x128x128xbf16>
    %37 = vector.shape_cast %36 : vector<1x128x128xbf16> to vector<128x128xbf16>
    %cst_31 = arith.constant dense<0.000000e+00> : vector<16x128xf32>
    %38 = tpu.matmul %35, %37, %cst_31 {dimension_numbers = #tpu.dot_dimension_numbers<[1], [0], [0], [1], [0, 0, 1, 1], [], []>} : vector<16x128xbf16>, vector<128x128xbf16>, vector<16x128xf32> -> vector<16x128xf32>
    %39 = arith.addf %24, %38 : vector<16x128xf32>
    %c1_32 = arith.constant 1 : index
    %c0_33 = arith.constant 0 : index
    %c0_34 = arith.constant 0 : index
    %40 = vector.load %arg10[%c1_32, %c0_33, %c0_34] : memref<2x1x128xf32, #tpu.memory_space<vmem>>, vector<1x1x128xf32>
    %41 = vector.shape_cast %40 : vector<1x1x128xf32> to vector<1x128xf32>
    %42 = vector.broadcast %41 : vector<1x128xf32> to vector<16x128xf32>
    %43 = arith.addf %39, %42 : vector<16x128xf32>
    %44 = arith.truncf %43 : vector<16x128xf32> to vector<16x128xbf16>
    %c0_35 = arith.constant 0 : index
    %c0_36 = arith.constant 0 : index
    %45 = vector.load %arg11[%c0_35, %c0_36] : memref<128x128xbf16, #tpu.memory_space<vmem>>, vector<128x128xbf16>
    %cst_37 = arith.constant dense<0.000000e+00> : vector<16x128xf32>
    %46 = tpu.matmul %44, %45, %cst_37 {dimension_numbers = #tpu.dot_dimension_numbers<[1], [0], [0], [1], [0, 0, 1, 1], [], []>} : vector<16x128xbf16>, vector<128x128xbf16>, vector<16x128xf32> -> vector<16x128xf32>
    %c0_38 = arith.constant 0 : index
    %c0_39 = arith.constant 0 : index
    %47 = vector.load %arg12[%c0_38, %c0_39] : memref<1x128xf32, #tpu.memory_space<vmem>>, vector<1x128xf32>
    %48 = vector.broadcast %47 : vector<1x128xf32> to vector<16x128xf32>
    %49 = arith.addf %46, %48 : vector<16x128xf32>
    %c0_40 = arith.constant 0 : index
    %c0_41 = arith.constant 0 : index
    %50 = vector.load %arg5[%c0_40, %c0_41] : memref<128x128xf32, #tpu.memory_space<vmem>>, vector<128x128xf32>
    %cst_42 = arith.constant dense<0.000000e+00> : vector<16x128xf32>
    %51 = tpu.matmul %49, %50, %cst_42 {dimension_numbers = #tpu.dot_dimension_numbers<[1], [0], [0], [1], [0, 0, 1, 1], [], []>} : vector<16x128xf32>, vector<128x128xf32>, vector<16x128xf32> -> vector<16x128xf32>
    %52 = arith.addf %5, %51 : vector<16x128xf32>
    %53 = arith.truncf %52 : vector<16x128xf32> to vector<16x128xbf16>
    %c0_43 = arith.constant 0 : index
    %c0_44 = arith.constant 0 : index
    %c0_45 = arith.constant 0 : index
    %54 = vector.load %arg13[%c0_43, %c0_44, %c0_45] : memref<2x128x128xbf16, #tpu.memory_space<vmem>>, vector<1x128x128xbf16>
    %55 = vector.shape_cast %54 : vector<1x128x128xbf16> to vector<128x128xbf16>
    %cst_46 = arith.constant dense<0.000000e+00> : vector<16x128xf32>
    %56 = tpu.matmul %53, %55, %cst_46 {dimension_numbers = #tpu.dot_dimension_numbers<[1], [0], [0], [1], [0, 0, 1, 1], [], []>} : vector<16x128xbf16>, vector<128x128xbf16>, vector<16x128xf32> -> vector<16x128xf32>
    %c0_47 = arith.constant 0 : index
    %c0_48 = arith.constant 0 : index
    %c0_49 = arith.constant 0 : index
    %57 = vector.load %arg14[%c0_47, %c0_48, %c0_49] : memref<2x1x128xf32, #tpu.memory_space<vmem>>, vector<1x1x128xf32>
    %58 = vector.shape_cast %57 : vector<1x1x128xf32> to vector<1x128xf32>
    %59 = vector.broadcast %58 : vector<1x128xf32> to vector<16x128xf32>
    %60 = arith.addf %56, %59 : vector<16x128xf32>
    %cst_50 = arith.constant 0.000000e+00 : f32
    %61 = vector.broadcast %cst_50 : f32 to vector<16x128xf32>
    %62 = arith.maximumf %60, %61 : vector<16x128xf32>
    %63 = arith.truncf %62 : vector<16x128xf32> to vector<16x128xbf16>
    %c0_51 = arith.constant 0 : index
    %c0_52 = arith.constant 0 : index
    %c0_53 = arith.constant 0 : index
    %64 = vector.load %arg15[%c0_51, %c0_52, %c0_53] : memref<2x128x128xbf16, #tpu.memory_space<vmem>>, vector<1x128x128xbf16>
    %65 = vector.shape_cast %64 : vector<1x128x128xbf16> to vector<128x128xbf16>
    %cst_54 = arith.constant dense<0.000000e+00> : vector<16x128xf32>
    %66 = tpu.matmul %63, %65, %cst_54 {dimension_numbers = #tpu.dot_dimension_numbers<[1], [0], [0], [1], [0, 0, 1, 1], [], []>} : vector<16x128xbf16>, vector<128x128xbf16>, vector<16x128xf32> -> vector<16x128xf32>
    %67 = arith.addf %52, %66 : vector<16x128xf32>
    %c0_55 = arith.constant 0 : index
    %c0_56 = arith.constant 0 : index
    %c0_57 = arith.constant 0 : index
    %68 = vector.load %arg16[%c0_55, %c0_56, %c0_57] : memref<2x1x128xf32, #tpu.memory_space<vmem>>, vector<1x1x128xf32>
    %69 = vector.shape_cast %68 : vector<1x1x128xf32> to vector<1x128xf32>
    %70 = vector.broadcast %69 : vector<1x128xf32> to vector<16x128xf32>
    %71 = arith.addf %67, %70 : vector<16x128xf32>
    %72 = arith.truncf %71 : vector<16x128xf32> to vector<16x128xbf16>
    %c1_58 = arith.constant 1 : index
    %c0_59 = arith.constant 0 : index
    %c0_60 = arith.constant 0 : index
    %73 = vector.load %arg13[%c1_58, %c0_59, %c0_60] : memref<2x128x128xbf16, #tpu.memory_space<vmem>>, vector<1x128x128xbf16>
    %74 = vector.shape_cast %73 : vector<1x128x128xbf16> to vector<128x128xbf16>
    %cst_61 = arith.constant dense<0.000000e+00> : vector<16x128xf32>
    %75 = tpu.matmul %72, %74, %cst_61 {dimension_numbers = #tpu.dot_dimension_numbers<[1], [0], [0], [1], [0, 0, 1, 1], [], []>} : vector<16x128xbf16>, vector<128x128xbf16>, vector<16x128xf32> -> vector<16x128xf32>
    %c1_62 = arith.constant 1 : index
    %c0_63 = arith.constant 0 : index
    %c0_64 = arith.constant 0 : index
    %76 = vector.load %arg14[%c1_62, %c0_63, %c0_64] : memref<2x1x128xf32, #tpu.memory_space<vmem>>, vector<1x1x128xf32>
    %77 = vector.shape_cast %76 : vector<1x1x128xf32> to vector<1x128xf32>
    %78 = vector.broadcast %77 : vector<1x128xf32> to vector<16x128xf32>
    %79 = arith.addf %75, %78 : vector<16x128xf32>
    %cst_65 = arith.constant 0.000000e+00 : f32
    %80 = vector.broadcast %cst_65 : f32 to vector<16x128xf32>
    %81 = arith.maximumf %79, %80 : vector<16x128xf32>
    %82 = arith.truncf %81 : vector<16x128xf32> to vector<16x128xbf16>
    %c1_66 = arith.constant 1 : index
    %c0_67 = arith.constant 0 : index
    %c0_68 = arith.constant 0 : index
    %83 = vector.load %arg15[%c1_66, %c0_67, %c0_68] : memref<2x128x128xbf16, #tpu.memory_space<vmem>>, vector<1x128x128xbf16>
    %84 = vector.shape_cast %83 : vector<1x128x128xbf16> to vector<128x128xbf16>
    %cst_69 = arith.constant dense<0.000000e+00> : vector<16x128xf32>
    %85 = tpu.matmul %82, %84, %cst_69 {dimension_numbers = #tpu.dot_dimension_numbers<[1], [0], [0], [1], [0, 0, 1, 1], [], []>} : vector<16x128xbf16>, vector<128x128xbf16>, vector<16x128xf32> -> vector<16x128xf32>
    %86 = arith.addf %71, %85 : vector<16x128xf32>
    %c1_70 = arith.constant 1 : index
    %c0_71 = arith.constant 0 : index
    %c0_72 = arith.constant 0 : index
    %87 = vector.load %arg16[%c1_70, %c0_71, %c0_72] : memref<2x1x128xf32, #tpu.memory_space<vmem>>, vector<1x1x128xf32>
    %88 = vector.shape_cast %87 : vector<1x1x128xf32> to vector<1x128xf32>
    %89 = vector.broadcast %88 : vector<1x128xf32> to vector<16x128xf32>
    %90 = arith.addf %86, %89 : vector<16x128xf32>
    %91 = arith.truncf %90 : vector<16x128xf32> to vector<16x128xbf16>
    %c0_73 = arith.constant 0 : index
    %c0_74 = arith.constant 0 : index
    %92 = vector.load %arg17[%c0_73, %c0_74] : memref<128x128xbf16, #tpu.memory_space<vmem>>, vector<128x128xbf16>
    %cst_75 = arith.constant dense<0.000000e+00> : vector<16x128xf32>
    %93 = tpu.matmul %91, %92, %cst_75 {dimension_numbers = #tpu.dot_dimension_numbers<[1], [0], [0], [1], [0, 0, 1, 1], [], []>} : vector<16x128xbf16>, vector<128x128xbf16>, vector<16x128xf32> -> vector<16x128xf32>
    %c0_76 = arith.constant 0 : index
    %c0_77 = arith.constant 0 : index
    %94 = vector.load %arg18[%c0_76, %c0_77] : memref<1x128xf32, #tpu.memory_space<vmem>>, vector<1x128xf32>
    %95 = vector.broadcast %94 : vector<1x128xf32> to vector<16x128xf32>
    %96 = arith.addf %93, %95 : vector<16x128xf32>
    %c0_78 = arith.constant 0 : index
    %c0_79 = arith.constant 0 : index
    %97 = vector.load %arg6[%c0_78, %c0_79] : memref<128x128xf32, #tpu.memory_space<vmem>>, vector<128x128xf32>
    %cst_80 = arith.constant dense<0.000000e+00> : vector<16x128xf32>
    %98 = tpu.matmul %96, %97, %cst_80 {dimension_numbers = #tpu.dot_dimension_numbers<[1], [0], [0], [1], [0, 0, 1, 1], [], []>} : vector<16x128xf32>, vector<128x128xf32>, vector<16x128xf32> -> vector<16x128xf32>
    %99 = arith.addf %49, %98 : vector<16x128xf32>
    %100 = arith.truncf %99 : vector<16x128xf32> to vector<16x128xbf16>
    %c0_81 = arith.constant 0 : index
    %c0_82 = arith.constant 0 : index
    %c0_83 = arith.constant 0 : index
    %101 = vector.load %arg19[%c0_81, %c0_82, %c0_83] : memref<2x128x128xbf16, #tpu.memory_space<vmem>>, vector<1x128x128xbf16>
    %102 = vector.shape_cast %101 : vector<1x128x128xbf16> to vector<128x128xbf16>
    %cst_84 = arith.constant dense<0.000000e+00> : vector<16x128xf32>
    %103 = tpu.matmul %100, %102, %cst_84 {dimension_numbers = #tpu.dot_dimension_numbers<[1], [0], [0], [1], [0, 0, 1, 1], [], []>} : vector<16x128xbf16>, vector<128x128xbf16>, vector<16x128xf32> -> vector<16x128xf32>
    %c0_85 = arith.constant 0 : index
    %c0_86 = arith.constant 0 : index
    %c0_87 = arith.constant 0 : index
    %104 = vector.load %arg20[%c0_85, %c0_86, %c0_87] : memref<2x1x128xf32, #tpu.memory_space<vmem>>, vector<1x1x128xf32>
    %105 = vector.shape_cast %104 : vector<1x1x128xf32> to vector<1x128xf32>
    %106 = vector.broadcast %105 : vector<1x128xf32> to vector<16x128xf32>
    %107 = arith.addf %103, %106 : vector<16x128xf32>
    %cst_88 = arith.constant 0.000000e+00 : f32
    %108 = vector.broadcast %cst_88 : f32 to vector<16x128xf32>
    %109 = arith.maximumf %107, %108 : vector<16x128xf32>
    %110 = arith.truncf %109 : vector<16x128xf32> to vector<16x128xbf16>
    %c0_89 = arith.constant 0 : index
    %c0_90 = arith.constant 0 : index
    %c0_91 = arith.constant 0 : index
    %111 = vector.load %arg21[%c0_89, %c0_90, %c0_91] : memref<2x128x128xbf16, #tpu.memory_space<vmem>>, vector<1x128x128xbf16>
    %112 = vector.shape_cast %111 : vector<1x128x128xbf16> to vector<128x128xbf16>
    %cst_92 = arith.constant dense<0.000000e+00> : vector<16x128xf32>
    %113 = tpu.matmul %110, %112, %cst_92 {dimension_numbers = #tpu.dot_dimension_numbers<[1], [0], [0], [1], [0, 0, 1, 1], [], []>} : vector<16x128xbf16>, vector<128x128xbf16>, vector<16x128xf32> -> vector<16x128xf32>
    %114 = arith.addf %99, %113 : vector<16x128xf32>
    %c0_93 = arith.constant 0 : index
    %c0_94 = arith.constant 0 : index
    %c0_95 = arith.constant 0 : index
    %115 = vector.load %arg22[%c0_93, %c0_94, %c0_95] : memref<2x1x128xf32, #tpu.memory_space<vmem>>, vector<1x1x128xf32>
    %116 = vector.shape_cast %115 : vector<1x1x128xf32> to vector<1x128xf32>
    %117 = vector.broadcast %116 : vector<1x128xf32> to vector<16x128xf32>
    %118 = arith.addf %114, %117 : vector<16x128xf32>
    %119 = arith.truncf %118 : vector<16x128xf32> to vector<16x128xbf16>
    %c1_96 = arith.constant 1 : index
    %c0_97 = arith.constant 0 : index
    %c0_98 = arith.constant 0 : index
    %120 = vector.load %arg19[%c1_96, %c0_97, %c0_98] : memref<2x128x128xbf16, #tpu.memory_space<vmem>>, vector<1x128x128xbf16>
    %121 = vector.shape_cast %120 : vector<1x128x128xbf16> to vector<128x128xbf16>
    %cst_99 = arith.constant dense<0.000000e+00> : vector<16x128xf32>
    %122 = tpu.matmul %119, %121, %cst_99 {dimension_numbers = #tpu.dot_dimension_numbers<[1], [0], [0], [1], [0, 0, 1, 1], [], []>} : vector<16x128xbf16>, vector<128x128xbf16>, vector<16x128xf32> -> vector<16x128xf32>
    %c1_100 = arith.constant 1 : index
    %c0_101 = arith.constant 0 : index
    %c0_102 = arith.constant 0 : index
    %123 = vector.load %arg20[%c1_100, %c0_101, %c0_102] : memref<2x1x128xf32, #tpu.memory_space<vmem>>, vector<1x1x128xf32>
    %124 = vector.shape_cast %123 : vector<1x1x128xf32> to vector<1x128xf32>
    %125 = vector.broadcast %124 : vector<1x128xf32> to vector<16x128xf32>
    %126 = arith.addf %122, %125 : vector<16x128xf32>
    %cst_103 = arith.constant 0.000000e+00 : f32
    %127 = vector.broadcast %cst_103 : f32 to vector<16x128xf32>
    %128 = arith.maximumf %126, %127 : vector<16x128xf32>
    %129 = arith.truncf %128 : vector<16x128xf32> to vector<16x128xbf16>
    %c1_104 = arith.constant 1 : index
    %c0_105 = arith.constant 0 : index
    %c0_106 = arith.constant 0 : index
    %130 = vector.load %arg21[%c1_104, %c0_105, %c0_106] : memref<2x128x128xbf16, #tpu.memory_space<vmem>>, vector<1x128x128xbf16>
    %131 = vector.shape_cast %130 : vector<1x128x128xbf16> to vector<128x128xbf16>
    %cst_107 = arith.constant dense<0.000000e+00> : vector<16x128xf32>
    %132 = tpu.matmul %129, %131, %cst_107 {dimension_numbers = #tpu.dot_dimension_numbers<[1], [0], [0], [1], [0, 0, 1, 1], [], []>} : vector<16x128xbf16>, vector<128x128xbf16>, vector<16x128xf32> -> vector<16x128xf32>
    %133 = arith.addf %118, %132 : vector<16x128xf32>
    %c1_108 = arith.constant 1 : index
    %c0_109 = arith.constant 0 : index
    %c0_110 = arith.constant 0 : index
    %134 = vector.load %arg22[%c1_108, %c0_109, %c0_110] : memref<2x1x128xf32, #tpu.memory_space<vmem>>, vector<1x1x128xf32>
    %135 = vector.shape_cast %134 : vector<1x1x128xf32> to vector<1x128xf32>
    %136 = vector.broadcast %135 : vector<1x128xf32> to vector<16x128xf32>
    %137 = arith.addf %133, %136 : vector<16x128xf32>
    %138 = arith.truncf %137 : vector<16x128xf32> to vector<16x128xbf16>
    %c0_111 = arith.constant 0 : index
    %c0_112 = arith.constant 0 : index
    %139 = vector.load %arg23[%c0_111, %c0_112] : memref<128x128xbf16, #tpu.memory_space<vmem>>, vector<128x128xbf16>
    %cst_113 = arith.constant dense<0.000000e+00> : vector<16x128xf32>
    %140 = tpu.matmul %138, %139, %cst_113 {dimension_numbers = #tpu.dot_dimension_numbers<[1], [0], [0], [1], [0, 0, 1, 1], [], []>} : vector<16x128xbf16>, vector<128x128xbf16>, vector<16x128xf32> -> vector<16x128xf32>
    %c0_114 = arith.constant 0 : index
    %c0_115 = arith.constant 0 : index
    %141 = vector.load %arg24[%c0_114, %c0_115] : memref<1x128xf32, #tpu.memory_space<vmem>>, vector<1x128xf32>
    %142 = vector.broadcast %141 : vector<1x128xf32> to vector<16x128xf32>
    %143 = arith.addf %140, %142 : vector<16x128xf32>
    %144 = vector.extract_strided_slice %143 {offsets = [0, 0], sizes = [16, 8], strides = [1, 1]} : vector<16x128xf32> to vector<16x8xf32>
    %c0_116 = arith.constant 0 : index
    %c0_117 = arith.constant 0 : index
    %c0_118 = arith.constant 0 : index
    %145 = vector.load %arg25[%c0_116, %c0_117, %c0_118] : memref<1x16x8xf32, #tpu.memory_space<vmem>>, vector<1x16x8xf32>
    %146 = vector.shape_cast %145 : vector<1x16x8xf32> to vector<16x8xf32>
    %147 = vector.shape_cast %144 : vector<16x8xf32> to vector<1x16x8xf32>
    tpu.vector_store %arg25[%c0_116, %c0_117, %c0_118], %147 {strides = array<i32>} : memref<1x16x8xf32, #tpu.memory_space<vmem>>, vector<1x16x8xf32>,
    return
  }
  func.func @transform_0(%arg0: i32, %arg1: i32) -> (i32, i32, i32) {
    %c0_i32 = arith.constant 0 : i32
    %c0_i32_0 = arith.constant 0 : i32
    return %arg0, %arg1, %c0_i32 : i32, i32, i32
  }
  func.func @transform_1(%arg0: i32, %arg1: i32) -> (i32, i32) {
    %c0_i32 = arith.constant 0 : i32
    %c0_i32_0 = arith.constant 0 : i32
    return %arg1, %c0_i32 : i32, i32
  }
  func.func @transform_2(%arg0: i32, %arg1: i32) -> (i32, i32) {
    %c0_i32 = arith.constant 0 : i32
    %c0_i32_0 = arith.constant 0 : i32
    %c0_i32_1 = arith.constant 0 : i32
    return %c0_i32, %c0_i32_0 : i32, i32
  }
  func.func @transform_3(%arg0: i32, %arg1: i32) -> (i32, i32) {
    %c0_i32 = arith.constant 0 : i32
    %c0_i32_0 = arith.constant 0 : i32
    %c0_i32_1 = arith.constant 0 : i32
    return %c0_i32, %c0_i32_0 : i32, i32
  }
  func.func @transform_4(%arg0: i32, %arg1: i32) -> (i32, i32) {
    %c0_i32 = arith.constant 0 : i32
    %c0_i32_0 = arith.constant 0 : i32
    %c0_i32_1 = arith.constant 0 : i32
    return %c0_i32, %c0_i32_0 : i32, i32
  }
  func.func @transform_5(%arg0: i32, %arg1: i32) -> (i32, i32, i32) {
    %c0_i32 = arith.constant 0 : i32
    %c0_i32_0 = arith.constant 0 : i32
    %c0_i32_1 = arith.constant 0 : i32
    %c0_i32_2 = arith.constant 0 : i32
    return %c0_i32, %c0_i32_0, %c0_i32_1 : i32, i32, i32
  }
  func.func @transform_6(%arg0: i32, %arg1: i32) -> (i32, i32, i32) {
    %c0_i32 = arith.constant 0 : i32
    %c0_i32_0 = arith.constant 0 : i32
    %c0_i32_1 = arith.constant 0 : i32
    %c0_i32_2 = arith.constant 0 : i32
    return %c0_i32, %c0_i32_0, %c0_i32_1 : i32, i32, i32
  }
  func.func @transform_7(%arg0: i32, %arg1: i32) -> (i32, i32, i32) {
    %c0_i32 = arith.constant 0 : i32
    %c0_i32_0 = arith.constant 0 : i32
    %c0_i32_1 = arith.constant 0 : i32
    %c0_i32_2 = arith.constant 0 : i32
    return %c0_i32, %c0_i32_0, %c0_i32_1 : i32, i32, i32
  }
  func.func @transform_8(%arg0: i32, %arg1: i32) -> (i32, i32, i32) {
    %c0_i32 = arith.constant 0 : i32
    %c0_i32_0 = arith.constant 0 : i32
    %c0_i32_1 = arith.constant 0 : i32
    %c0_i32_2 = arith.constant 0 : i32
    return %c0_i32, %c0_i32_0, %c0_i32_1 : i32, i32, i32
  }
  func.func @transform_9(%arg0: i32, %arg1: i32) -> (i32, i32) {
    %c0_i32 = arith.constant 0 : i32
    %c0_i32_0 = arith.constant 0 : i32
    %c0_i32_1 = arith.constant 0 : i32
    return %c0_i32, %c0_i32_0 : i32, i32
  }
  func.func @transform_10(%arg0: i32, %arg1: i32) -> (i32, i32) {
    %c0_i32 = arith.constant 0 : i32
    %c0_i32_0 = arith.constant 0 : i32
    %c0_i32_1 = arith.constant 0 : i32
    return %c0_i32, %c0_i32_0 : i32, i32
  }
  func.func @transform_11(%arg0: i32, %arg1: i32) -> (i32, i32, i32) {
    %c0_i32 = arith.constant 0 : i32
    %c0_i32_0 = arith.constant 0 : i32
    %c0_i32_1 = arith.constant 0 : i32
    %c0_i32_2 = arith.constant 0 : i32
    return %c0_i32, %c0_i32_0, %c0_i32_1 : i32, i32, i32
  }
  func.func @transform_12(%arg0: i32, %arg1: i32) -> (i32, i32, i32) {
    %c0_i32 = arith.constant 0 : i32
    %c0_i32_0 = arith.constant 0 : i32
    %c0_i32_1 = arith.constant 0 : i32
    %c0_i32_2 = arith.constant 0 : i32
    return %c0_i32, %c0_i32_0, %c0_i32_1 : i32, i32, i32
  }
  func.func @transform_13(%arg0: i32, %arg1: i32) -> (i32, i32, i32) {
    %c0_i32 = arith.constant 0 : i32
    %c0_i32_0 = arith.constant 0 : i32
    %c0_i32_1 = arith.constant 0 : i32
    %c0_i32_2 = arith.constant 0 : i32
    return %c0_i32, %c0_i32_0, %c0_i32_1 : i32, i32, i32
  }
  func.func @transform_14(%arg0: i32, %arg1: i32) -> (i32, i32, i32) {
    %c0_i32 = arith.constant 0 : i32
    %c0_i32_0 = arith.constant 0 : i32
    %c0_i32_1 = arith.constant 0 : i32
    %c0_i32_2 = arith.constant 0 : i32
    return %c0_i32, %c0_i32_0, %c0_i32_1 : i32, i32, i32
  }
  func.func @transform_15(%arg0: i32, %arg1: i32) -> (i32, i32) {
    %c0_i32 = arith.constant 0 : i32
    %c0_i32_0 = arith.constant 0 : i32
    %c0_i32_1 = arith.constant 0 : i32
    return %c0_i32, %c0_i32_0 : i32, i32
  }
  func.func @transform_16(%arg0: i32, %arg1: i32) -> (i32, i32) {
    %c0_i32 = arith.constant 0 : i32
    %c0_i32_0 = arith.constant 0 : i32
    %c0_i32_1 = arith.constant 0 : i32
    return %c0_i32, %c0_i32_0 : i32, i32
  }
  func.func @transform_17(%arg0: i32, %arg1: i32) -> (i32, i32, i32) {
    %c0_i32 = arith.constant 0 : i32
    %c0_i32_0 = arith.constant 0 : i32
    %c0_i32_1 = arith.constant 0 : i32
    %c0_i32_2 = arith.constant 0 : i32
    return %c0_i32, %c0_i32_0, %c0_i32_1 : i32, i32, i32
  }
  func.func @transform_18(%arg0: i32, %arg1: i32) -> (i32, i32, i32) {
    %c0_i32 = arith.constant 0 : i32
    %c0_i32_0 = arith.constant 0 : i32
    %c0_i32_1 = arith.constant 0 : i32
    %c0_i32_2 = arith.constant 0 : i32
    return %c0_i32, %c0_i32_0, %c0_i32_1 : i32, i32, i32
  }
  func.func @transform_19(%arg0: i32, %arg1: i32) -> (i32, i32, i32) {
    %c0_i32 = arith.constant 0 : i32
    %c0_i32_0 = arith.constant 0 : i32
    %c0_i32_1 = arith.constant 0 : i32
    %c0_i32_2 = arith.constant 0 : i32
    return %c0_i32, %c0_i32_0, %c0_i32_1 : i32, i32, i32
  }
  func.func @transform_20(%arg0: i32, %arg1: i32) -> (i32, i32, i32) {
    %c0_i32 = arith.constant 0 : i32
    %c0_i32_0 = arith.constant 0 : i32
    %c0_i32_1 = arith.constant 0 : i32
    %c0_i32_2 = arith.constant 0 : i32
    return %c0_i32, %c0_i32_0, %c0_i32_1 : i32, i32, i32
  }
  func.func @transform_21(%arg0: i32, %arg1: i32) -> (i32, i32) {
    %c0_i32 = arith.constant 0 : i32
    %c0_i32_0 = arith.constant 0 : i32
    %c0_i32_1 = arith.constant 0 : i32
    return %c0_i32, %c0_i32_0 : i32, i32
  }
  func.func @transform_22(%arg0: i32, %arg1: i32) -> (i32, i32) {
    %c0_i32 = arith.constant 0 : i32
    %c0_i32_0 = arith.constant 0 : i32
    %c0_i32_1 = arith.constant 0 : i32
    return %c0_i32, %c0_i32_0 : i32, i32
  }
  func.func @transform_23(%arg0: i32, %arg1: i32) -> (i32, i32, i32) {
    %c0_i32 = arith.constant 0 : i32
    %c0_i32_0 = arith.constant 0 : i32
    return %arg0, %arg1, %c0_i32 : i32, i32, i32
  }
}

module attributes {stable_mosaic.version = 11 : i64} {
  func.func @_blstf_kernel(%arg0: i32, %arg1: i32, %arg2: memref<1x16x8xf32, #tpu.memory_space<vmem>>, %arg3: memref<16x128xf32, #tpu.memory_space<vmem>>, %arg4: memref<8x128xf32, #tpu.memory_space<vmem>>, %arg5: memref<128x128xf32, #tpu.memory_space<vmem>>, %arg6: memref<128x128xf32, #tpu.memory_space<vmem>>, %arg7: memref<2x128x128xbf16, #tpu.memory_space<vmem>>, %arg8: memref<2x1x128xf32, #tpu.memory_space<vmem>>, %arg9: memref<2x128x128xbf16, #tpu.memory_space<vmem>>, %arg10: memref<2x1x128xf32, #tpu.memory_space<vmem>>, %arg11: memref<128x128xbf16, #tpu.memory_space<vmem>>, %arg12: memref<1x128xf32, #tpu.memory_space<vmem>>, %arg13: memref<2x128x128xbf16, #tpu.memory_space<vmem>>, %arg14: memref<2x1x128xf32, #tpu.memory_space<vmem>>, %arg15: memref<2x128x128xbf16, #tpu.memory_space<vmem>>, %arg16: memref<2x1x128xf32, #tpu.memory_space<vmem>>, %arg17: memref<128x128xbf16, #tpu.memory_space<vmem>>, %arg18: memref<1x128xf32, #tpu.memory_space<vmem>>, %arg19: memref<2x128x128xbf16, #tpu.memory_space<vmem>>, %arg20: memref<2x1x128xf32, #tpu.memory_space<vmem>>, %arg21: memref<2x128x128xbf16, #tpu.memory_space<vmem>>, %arg22: memref<2x1x128xf32, #tpu.memory_space<vmem>>, %arg23: memref<128x128xbf16, #tpu.memory_space<vmem>>, %arg24: memref<1x128xf32, #tpu.memory_space<vmem>>, %arg25: memref<1x16x8xf32, #tpu.memory_space<vmem>>) attributes {dimension_semantics = [#tpu.dimension_semantics<parallel>, #tpu.dimension_semantics<parallel>], iteration_bounds = array<i64: 2, 1>, scalar_prefetch = 0 : i64, scratch_operands = 0 : i64, tpu.core_type = #tpu.core_type<tc>, window_params = [{transform_indices = @transform_0, window_bounds = array<i64: 1, 16, 8>}, {transform_indices = @transform_1, window_bounds = array<i64: 16, 128>}, {pipeline_mode = #tpu.pipeline_mode<synchronous>, transform_indices = @transform_2, window_bounds = array<i64: 8, 128>}, {pipeline_mode = #tpu.pipeline_mode<synchronous>, transform_indices = @transform_3, window_bounds = array<i64: 128, 128>}, {pipeline_mode = #tpu.pipeline_mode<synchronous>, transform_indices = @transform_4, window_bounds = array<i64: 128, 128>}, {pipeline_mode = #tpu.pipeline_mode<synchronous>, transform_indices = @transform_5, window_bounds = array<i64: 2, 128, 128>}, {pipeline_mode = #tpu.pipeline_mode<synchronous>, transform_indices = @transform_6, window_bounds = array<i64: 2, 1, 128>}, {pipeline_mode = #tpu.pipeline_mode<synchronous>, transform_indices = @transform_7, window_bounds = array<i64: 2, 128, 128>}, {pipeline_mode = #tpu.pipeline_mode<synchronous>, transform_indices = @transform_8, window_bounds = array<i64: 2, 1, 128>}, {pipeline_mode = #tpu.pipeline_mode<synchronous>, transform_indices = @transform_9, window_bounds = array<i64: 128, 128>}, {pipeline_mode = #tpu.pipeline_mode<synchronous>, transform_indices = @transform_10, window_bounds = array<i64: 1, 128>}, {pipeline_mode = #tpu.pipeline_mode<synchronous>, transform_indices = @transform_11, window_bounds = array<i64: 2, 128, 128>}, {pipeline_mode = #tpu.pipeline_mode<synchronous>, transform_indices = @transform_12, window_bounds = array<i64: 2, 1, 128>}, {pipeline_mode = #tpu.pipeline_mode<synchronous>, transform_indices = @transform_13, window_bounds = array<i64: 2, 128, 128>}, {pipeline_mode = #tpu.pipeline_mode<synchronous>, transform_indices = @transform_14, window_bounds = array<i64: 2, 1, 128>}, {pipeline_mode = #tpu.pipeline_mode<synchronous>, transform_indices = @transform_15, window_bounds = array<i64: 128, 128>}, {pipeline_mode = #tpu.pipeline_mode<synchronous>, transform_indices = @transform_16, window_bounds = array<i64: 1, 128>}, {pipeline_mode = #tpu.pipeline_mode<synchronous>, transform_indices = @transform_17, window_bounds = array<i64: 2, 128, 128>}, {pipeline_mode = #tpu.pipeline_mode<synchronous>, transform_indices = @transform_18, window_bounds = array<i64: 2, 1, 128>}, {pipeline_mode = #tpu.pipeline_mode<synchronous>, transform_indices = @transform_19, window_bounds = array<i64: 2, 128, 128>}, {pipeline_mode = #tpu.pipeline_mode<synchronous>, transform_indices = @transform_20, window_bounds = array<i64: 2, 1, 128>}, {pipeline_mode = #tpu.pipeline_mode<synchronous>, transform_indices = @transform_21, window_bounds = array<i64: 128, 128>}, {pipeline_mode = #tpu.pipeline_mode<synchronous>, transform_indices = @transform_22, window_bounds = array<i64: 1, 128>}, {transform_indices = @transform_23, window_bounds = array<i64: 1, 16, 8>}]} {
    %c0 = arith.constant 0 : index
    %c0_0 = arith.constant 0 : index
    %c0_1 = arith.constant 0 : index
    %0 = vector.load %arg2[%c0, %c0_0, %c0_1] : memref<1x16x8xf32, #tpu.memory_space<vmem>>, vector<1x16x8xf32>
    %1 = vector.shape_cast %0 : vector<1x16x8xf32> to vector<16x8xf32>
    %c0_2 = arith.constant 0 : index
    %c0_3 = arith.constant 0 : index
    %2 = vector.load %arg4[%c0_2, %c0_3] : memref<8x128xf32, #tpu.memory_space<vmem>>, vector<8x128xf32>
    %cst = arith.constant dense<0.000000e+00> : vector<16x128xf32>
    %3 = tpu.matmul %1, %2, %cst {dimension_numbers = #tpu.dot_dimension_numbers<[1], [0], [0], [1], [0, 0, 1, 1], [], []>} : vector<16x8xf32>, vector<8x128xf32>, vector<16x128xf32> -> vector<16x128xf32>
    %c0_4 = arith.constant 0 : index
    %c0_5 = arith.constant 0 : index
    %4 = vector.load %arg3[%c0_4, %c0_5] : memref<16x128xf32, #tpu.memory_space<vmem>>, vector<16x128xf32>
    %5 = arith.addf %3, %4 : vector<16x128xf32>
    %6 = arith.truncf %5 : vector<16x128xf32> to vector<16x128xbf16>
    %c0_6 = arith.constant 0 : index
    %c0_7 = arith.constant 0 : index
    %c0_8 = arith.constant 0 : index
    %7 = vector.load %arg7[%c0_6, %c0_7, %c0_8] : memref<2x128x128xbf16, #tpu.memory_space<vmem>>, vector<1x128x128xbf16>
    %8 = vector.shape_cast %7 : vector<1x128x128xbf16> to vector<128x128xbf16>
    %cst_9 = arith.constant dense<0.000000e+00> : vector<16x128xf32>
    %9 = tpu.matmul %6, %8, %cst_9 {dimension_numbers = #tpu.dot_dimension_numbers<[1], [0], [0], [1], [0, 0, 1, 1], [], []>} : vector<16x128xbf16>, vector<128x128xbf16>, vector<16x128xf32> -> vector<16x128xf32>
    %c0_10 = arith.constant 0 : index
    %c0_11 = arith.constant 0 : index
    %c0_12 = arith.constant 0 : index
    %10 = vector.load %arg8[%c0_10, %c0_11, %c0_12] : memref<2x1x128xf32, #tpu.memory_space<vmem>>, vector<1x1x128xf32>
    %11 = vector.shape_cast %10 : vector<1x1x128xf32> to vector<1x128xf32>
    %12 = vector.broadcast %11 : vector<1x128xf32> to vector<16x128xf32>
    %13 = arith.addf %9, %12 : vector<16x128xf32>
    %cst_13 = arith.constant 0.000000e+00 : f32
    %14 = vector.broadcast %cst_13 : f32 to vector<16x128xf32>
    %15 = arith.maximumf %13, %14 : vector<16x128xf32>
    %16 = arith.truncf %15 : vector<16x128xf32> to vector<16x128xbf16>
    %c0_14 = arith.constant 0 : index
    %c0_15 = arith.constant 0 : index
    %c0_16 = arith.constant 0 : index
    %17 = vector.load %arg9[%c0_14, %c0_15, %c0_16] : memref<2x128x128xbf16, #tpu.memory_space<vmem>>, vector<1x128x128xbf16>
    %18 = vector.shape_cast %17 : vector<1x128x128xbf16> to vector<128x128xbf16>
    %cst_17 = arith.constant dense<0.000000e+00> : vector<16x128xf32>
    %19 = tpu.matmul %16, %18, %cst_17 {dimension_numbers = #tpu.dot_dimension_numbers<[1], [0], [0], [1], [0, 0, 1, 1], [], []>} : vector<16x128xbf16>, vector<128x128xbf16>, vector<16x128xf32> -> vector<16x128xf32>
    %20 = arith.addf %5, %19 : vector<16x128xf32>
    %c0_18 = arith.constant 0 : index
    %c0_19 = arith.constant 0 : index
    %c0_20 = arith.constant 0 : index
    %21 = vector.load %arg10[%c0_18, %c0_19, %c0_20] : memref<2x1x128xf32, #tpu.memory_space<vmem>>, vector<1x1x128xf32>
    %22 = vector.shape_cast %21 : vector<1x1x128xf32> to vector<1x128xf32>
    %23 = vector.broadcast %22 : vector<1x128xf32> to vector<16x128xf32>
    %24 = arith.addf %20, %23 : vector<16x128xf32>
    %25 = arith.truncf %24 : vector<16x128xf32> to vector<16x128xbf16>
    %c1 = arith.constant 1 : index
    %c0_21 = arith.constant 0 : index
    %c0_22 = arith.constant 0 : index
    %26 = vector.load %arg7[%c1, %c0_21, %c0_22] : memref<2x128x128xbf16, #tpu.memory_space<vmem>>, vector<1x128x128xbf16>
    %27 = vector.shape_cast %26 : vector<1x128x128xbf16> to vector<128x128xbf16>
    %cst_23 = arith.constant dense<0.000000e+00> : vector<16x128xf32>
    %28 = tpu.matmul %25, %27, %cst_23 {dimension_numbers = #tpu.dot_dimension_numbers<[1], [0], [0], [1], [0, 0, 1, 1], [], []>} : vector<16x128xbf16>, vector<128x128xbf16>, vector<16x128xf32> -> vector<16x128xf32>
    %c1_24 = arith.constant 1 : index
    %c0_25 = arith.constant 0 : index
    %c0_26 = arith.constant 0 : index
    %29 = vector.load %arg8[%c1_24, %c0_25, %c0_26] : memref<2x1x128xf32, #tpu.memory_space<vmem>>, vector<1x1x128xf32>
    %30 = vector.shape_cast %29 : vector<1x1x128xf32> to vector<1x128xf32>
    %31 = vector.broadcast %30 : vector<1x128xf32> to vector<16x128xf32>
    %32 = arith.addf %28, %31 : vector<16x128xf32>
    %cst_27 = arith.constant 0.000000e+00 : f32
    %33 = vector.broadcast %cst_27 : f32 to vector<16x128xf32>
    %34 = arith.maximumf %32, %33 : vector<16x128xf32>
    %35 = arith.truncf %34 : vector<16x128xf32> to vector<16x128xbf16>
    %c1_28 = arith.constant 1 : index
    %c0_29 = arith.constant 0 : index
    %c0_30 = arith.constant 0 : index
    %36 = vector.load %arg9[%c1_28, %c0_29, %c0_30] : memref<2x128x128xbf16, #tpu.memory_space<vmem>>, vector<1x128x128xbf16>
    %37 = vector.shape_cast %36 : vector<1x128x128xbf16> to vector<128x128xbf16>
    %cst_31 = arith.constant dense<0.000000e+00> : vector<16x128xf32>
    %38 = tpu.matmul %35, %37, %cst_31 {dimension_numbers = #tpu.dot_dimension_numbers<[1], [0], [0], [1], [0, 0, 1, 1], [], []>} : vector<16x128xbf16>, vector<128x128xbf16>, vector<16x128xf32> -> vector<16x128xf32>
    %39 = arith.addf %24, %38 : vector<16x128xf32>
    %c1_32 = arith.constant 1 : index
    %c0_33 = arith.constant 0 : index
    %c0_34 = arith.constant 0 : index
    %40 = vector.load %arg10[%c1_32, %c0_33, %c0_34] : memref<2x1x128xf32, #tpu.memory_space<vmem>>, vector<1x1x128xf32>
    %41 = vector.shape_cast %40 : vector<1x1x128xf32> to vector<1x128xf32>
    %42 = vector.broadcast %41 : vector<1x128xf32> to vector<16x128xf32>
    %43 = arith.addf %39, %42 : vector<16x128xf32>
    %44 = arith.truncf %43 : vector<16x128xf32> to vector<16x128xbf16>
    %c0_35 = arith.constant 0 : index
    %c0_36 = arith.constant 0 : index
    %45 = vector.load %arg11[%c0_35, %c0_36] : memref<128x128xbf16, #tpu.memory_space<vmem>>, vector<128x128xbf16>
    %cst_37 = arith.constant dense<0.000000e+00> : vector<16x128xf32>
    %46 = tpu.matmul %44, %45, %cst_37 {dimension_numbers = #tpu.dot_dimension_numbers<[1], [0], [0], [1], [0, 0, 1, 1], [], []>} : vector<16x128xbf16>, vector<128x128xbf16>, vector<16x128xf32> -> vector<16x128xf32>
    %c0_38 = arith.constant 0 : index
    %c0_39 = arith.constant 0 : index
    %47 = vector.load %arg12[%c0_38, %c0_39] : memref<1x128xf32, #tpu.memory_space<vmem>>, vector<1x128xf32>
    %48 = vector.broadcast %47 : vector<1x128xf32> to vector<16x128xf32>
    %49 = arith.addf %46, %48 : vector<16x128xf32>
    %c0_40 = arith.constant 0 : index
    %c0_41 = arith.constant 0 : index
    %50 = vector.load %arg5[%c0_40, %c0_41] : memref<128x128xf32, #tpu.memory_space<vmem>>, vector<128x128xf32>
    %cst_42 = arith.constant dense<0.000000e+00> : vector<16x128xf32>
    %51 = tpu.matmul %49, %50, %cst_42 {dimension_numbers = #tpu.dot_dimension_numbers<[1], [0], [0], [1], [0, 0, 1, 1], [], []>} : vector<16x128xf32>, vector<128x128xf32>, vector<16x128xf32> -> vector<16x128xf32>
    %52 = arith.addf %5, %51 : vector<16x128xf32>
    %53 = arith.truncf %52 : vector<16x128xf32> to vector<16x128xbf16>
    %c0_43 = arith.constant 0 : index
    %c0_44 = arith.constant 0 : index
    %c0_45 = arith.constant 0 : index
    %54 = vector.load %arg13[%c0_43, %c0_44, %c0_45] : memref<2x128x128xbf16, #tpu.memory_space<vmem>>, vector<1x128x128xbf16>
    %55 = vector.shape_cast %54 : vector<1x128x128xbf16> to vector<128x128xbf16>
    %cst_46 = arith.constant dense<0.000000e+00> : vector<16x128xf32>
    %56 = tpu.matmul %53, %55, %cst_46 {dimension_numbers = #tpu.dot_dimension_numbers<[1], [0], [0], [1], [0, 0, 1, 1], [], []>} : vector<16x128xbf16>, vector<128x128xbf16>, vector<16x128xf32> -> vector<16x128xf32>
    %c0_47 = arith.constant 0 : index
    %c0_48 = arith.constant 0 : index
    %c0_49 = arith.constant 0 : index
    %57 = vector.load %arg14[%c0_47, %c0_48, %c0_49] : memref<2x1x128xf32, #tpu.memory_space<vmem>>, vector<1x1x128xf32>
    %58 = vector.shape_cast %57 : vector<1x1x128xf32> to vector<1x128xf32>
    %59 = vector.broadcast %58 : vector<1x128xf32> to vector<16x128xf32>
    %60 = arith.addf %56, %59 : vector<16x128xf32>
    %cst_50 = arith.constant 0.000000e+00 : f32
    %61 = vector.broadcast %cst_50 : f32 to vector<16x128xf32>
    %62 = arith.maximumf %60, %61 : vector<16x128xf32>
    %63 = arith.truncf %62 : vector<16x128xf32> to vector<16x128xbf16>
    %c0_51 = arith.constant 0 : index
    %c0_52 = arith.constant 0 : index
    %c0_53 = arith.constant 0 : index
    %64 = vector.load %arg15[%c0_51, %c0_52, %c0_53] : memref<2x128x128xbf16, #tpu.memory_space<vmem>>, vector<1x128x128xbf16>
    %65 = vector.shape_cast %64 : vector<1x128x128xbf16> to vector<128x128xbf16>
    %cst_54 = arith.constant dense<0.000000e+00> : vector<16x128xf32>
    %66 = tpu.matmul %63, %65, %cst_54 {dimension_numbers = #tpu.dot_dimension_numbers<[1], [0], [0], [1], [0, 0, 1, 1], [], []>} : vector<16x128xbf16>, vector<128x128xbf16>, vector<16x128xf32> -> vector<16x128xf32>
    %67 = arith.addf %52, %66 : vector<16x128xf32>
    %c0_55 = arith.constant 0 : index
    %c0_56 = arith.constant 0 : index
    %c0_57 = arith.constant 0 : index
    %68 = vector.load %arg16[%c0_55, %c0_56, %c0_57] : memref<2x1x128xf32, #tpu.memory_space<vmem>>, vector<1x1x128xf32>
    %69 = vector.shape_cast %68 : vector<1x1x128xf32> to vector<1x128xf32>
    %70 = vector.broadcast %69 : vector<1x128xf32> to vector<16x128xf32>
    %71 = arith.addf %67, %70 : vector<16x128xf32>
    %72 = arith.truncf %71 : vector<16x128xf32> to vector<16x128xbf16>
    %c1_58 = arith.constant 1 : index
    %c0_59 = arith.constant 0 : index
    %c0_60 = arith.constant 0 : index
    %73 = vector.load %arg13[%c1_58, %c0_59, %c0_60] : memref<2x128x128xbf16, #tpu.memory_space<vmem>>, vector<1x128x128xbf16>
    %74 = vector.shape_cast %73 : vector<1x128x128xbf16> to vector<128x128xbf16>
    %cst_61 = arith.constant dense<0.000000e+00> : vector<16x128xf32>
    %75 = tpu.matmul %72, %74, %cst_61 {dimension_numbers = #tpu.dot_dimension_numbers<[1], [0], [0], [1], [0, 0, 1, 1], [], []>} : vector<16x128xbf16>, vector<128x128xbf16>, vector<16x128xf32> -> vector<16x128xf32>
    %c1_62 = arith.constant 1 : index
    %c0_63 = arith.constant 0 : index
    %c0_64 = arith.constant 0 : index
    %76 = vector.load %arg14[%c1_62, %c0_63, %c0_64] : memref<2x1x128xf32, #tpu.memory_space<vmem>>, vector<1x1x128xf32>
    %77 = vector.shape_cast %76 : vector<1x1x128xf32> to vector<1x128xf32>
    %78 = vector.broadcast %77 : vector<1x128xf32> to vector<16x128xf32>
    %79 = arith.addf %75, %78 : vector<16x128xf32>
    %cst_65 = arith.constant 0.000000e+00 : f32
    %80 = vector.broadcast %cst_65 : f32 to vector<16x128xf32>
    %81 = arith.maximumf %79, %80 : vector<16x128xf32>
    %82 = arith.truncf %81 : vector<16x128xf32> to vector<16x128xbf16>
    %c1_66 = arith.constant 1 : index
    %c0_67 = arith.constant 0 : index
    %c0_68 = arith.constant 0 : index
    %83 = vector.load %arg15[%c1_66, %c0_67, %c0_68] : memref<2x128x128xbf16, #tpu.memory_space<vmem>>, vector<1x128x128xbf16>
    %84 = vector.shape_cast %83 : vector<1x128x128xbf16> to vector<128x128xbf16>
    %cst_69 = arith.constant dense<0.000000e+00> : vector<16x128xf32>
    %85 = tpu.matmul %82, %84, %cst_69 {dimension_numbers = #tpu.dot_dimension_numbers<[1], [0], [0], [1], [0, 0, 1, 1], [], []>} : vector<16x128xbf16>, vector<128x128xbf16>, vector<16x128xf32> -> vector<16x128xf32>
    %86 = arith.addf %71, %85 : vector<16x128xf32>
    %c1_70 = arith.constant 1 : index
    %c0_71 = arith.constant 0 : index
    %c0_72 = arith.constant 0 : index
    %87 = vector.load %arg16[%c1_70, %c0_71, %c0_72] : memref<2x1x128xf32, #tpu.memory_space<vmem>>, vector<1x1x128xf32>
    %88 = vector.shape_cast %87 : vector<1x1x128xf32> to vector<1x128xf32>
    %89 = vector.broadcast %88 : vector<1x128xf32> to vector<16x128xf32>
    %90 = arith.addf %86, %89 : vector<16x128xf32>
    %91 = arith.truncf %90 : vector<16x128xf32> to vector<16x128xbf16>
    %c0_73 = arith.constant 0 : index
    %c0_74 = arith.constant 0 : index
    %92 = vector.load %arg17[%c0_73, %c0_74] : memref<128x128xbf16, #tpu.memory_space<vmem>>, vector<128x128xbf16>
    %cst_75 = arith.constant dense<0.000000e+00> : vector<16x128xf32>
    %93 = tpu.matmul %91, %92, %cst_75 {dimension_numbers = #tpu.dot_dimension_numbers<[1], [0], [0], [1], [0, 0, 1, 1], [], []>} : vector<16x128xbf16>, vector<128x128xbf16>, vector<16x128xf32> -> vector<16x128xf32>
    %c0_76 = arith.constant 0 : index
    %c0_77 = arith.constant 0 : index
    %94 = vector.load %arg18[%c0_76, %c0_77] : memref<1x128xf32, #tpu.memory_space<vmem>>, vector<1x128xf32>
    %95 = vector.broadcast %94 : vector<1x128xf32> to vector<16x128xf32>
    %96 = arith.addf %93, %95 : vector<16x128xf32>
    %c0_78 = arith.constant 0 : index
    %c0_79 = arith.constant 0 : index
    %97 = vector.load %arg6[%c0_78, %c0_79] : memref<128x128xf32, #tpu.memory_space<vmem>>, vector<128x128xf32>
    %cst_80 = arith.constant dense<0.000000e+00> : vector<16x128xf32>
    %98 = tpu.matmul %96, %97, %cst_80 {dimension_numbers = #tpu.dot_dimension_numbers<[1], [0], [0], [1], [0, 0, 1, 1], [], []>} : vector<16x128xf32>, vector<128x128xf32>, vector<16x128xf32> -> vector<16x128xf32>
    %99 = arith.addf %49, %98 : vector<16x128xf32>
    %100 = arith.truncf %99 : vector<16x128xf32> to vector<16x128xbf16>
    %c0_81 = arith.constant 0 : index
    %c0_82 = arith.constant 0 : index
    %c0_83 = arith.constant 0 : index
    %101 = vector.load %arg19[%c0_81, %c0_82, %c0_83] : memref<2x128x128xbf16, #tpu.memory_space<vmem>>, vector<1x128x128xbf16>
    %102 = vector.shape_cast %101 : vector<1x128x128xbf16> to vector<128x128xbf16>
    %cst_84 = arith.constant dense<0.000000e+00> : vector<16x128xf32>
    %103 = tpu.matmul %100, %102, %cst_84 {dimension_numbers = #tpu.dot_dimension_numbers<[1], [0], [0], [1], [0, 0, 1, 1], [], []>} : vector<16x128xbf16>, vector<128x128xbf16>, vector<16x128xf32> -> vector<16x128xf32>
    %c0_85 = arith.constant 0 : index
    %c0_86 = arith.constant 0 : index
    %c0_87 = arith.constant 0 : index
    %104 = vector.load %arg20[%c0_85, %c0_86, %c0_87] : memref<2x1x128xf32, #tpu.memory_space<vmem>>, vector<1x1x128xf32>
    %105 = vector.shape_cast %104 : vector<1x1x128xf32> to vector<1x128xf32>
    %106 = vector.broadcast %105 : vector<1x128xf32> to vector<16x128xf32>
    %107 = arith.addf %103, %106 : vector<16x128xf32>
    %cst_88 = arith.constant 0.000000e+00 : f32
    %108 = vector.broadcast %cst_88 : f32 to vector<16x128xf32>
    %109 = arith.maximumf %107, %108 : vector<16x128xf32>
    %110 = arith.truncf %109 : vector<16x128xf32> to vector<16x128xbf16>
    %c0_89 = arith.constant 0 : index
    %c0_90 = arith.constant 0 : index
    %c0_91 = arith.constant 0 : index
    %111 = vector.load %arg21[%c0_89, %c0_90, %c0_91] : memref<2x128x128xbf16, #tpu.memory_space<vmem>>, vector<1x128x128xbf16>
    %112 = vector.shape_cast %111 : vector<1x128x128xbf16> to vector<128x128xbf16>
    %cst_92 = arith.constant dense<0.000000e+00> : vector<16x128xf32>
    %113 = tpu.matmul %110, %112, %cst_92 {dimension_numbers = #tpu.dot_dimension_numbers<[1], [0], [0], [1], [0, 0, 1, 1], [], []>} : vector<16x128xbf16>, vector<128x128xbf16>, vector<16x128xf32> -> vector<16x128xf32>
    %114 = arith.addf %99, %113 : vector<16x128xf32>
    %c0_93 = arith.constant 0 : index
    %c0_94 = arith.constant 0 : index
    %c0_95 = arith.constant 0 : index
    %115 = vector.load %arg22[%c0_93, %c0_94, %c0_95] : memref<2x1x128xf32, #tpu.memory_space<vmem>>, vector<1x1x128xf32>
    %116 = vector.shape_cast %115 : vector<1x1x128xf32> to vector<1x128xf32>
    %117 = vector.broadcast %116 : vector<1x128xf32> to vector<16x128xf32>
    %118 = arith.addf %114, %117 : vector<16x128xf32>
    %119 = arith.truncf %118 : vector<16x128xf32> to vector<16x128xbf16>
    %c1_96 = arith.constant 1 : index
    %c0_97 = arith.constant 0 : index
    %c0_98 = arith.constant 0 : index
    %120 = vector.load %arg19[%c1_96, %c0_97, %c0_98] : memref<2x128x128xbf16, #tpu.memory_space<vmem>>, vector<1x128x128xbf16>
    %121 = vector.shape_cast %120 : vector<1x128x128xbf16> to vector<128x128xbf16>
    %cst_99 = arith.constant dense<0.000000e+00> : vector<16x128xf32>
    %122 = tpu.matmul %119, %121, %cst_99 {dimension_numbers = #tpu.dot_dimension_numbers<[1], [0], [0], [1], [0, 0, 1, 1], [], []>} : vector<16x128xbf16>, vector<128x128xbf16>, vector<16x128xf32> -> vector<16x128xf32>
    %c1_100 = arith.constant 1 : index
    %c0_101 = arith.constant 0 : index
    %c0_102 = arith.constant 0 : index
    %123 = vector.load %arg20[%c1_100, %c0_101, %c0_102] : memref<2x1x128xf32, #tpu.memory_space<vmem>>, vector<1x1x128xf32>
    %124 = vector.shape_cast %123 : vector<1x1x128xf32> to vector<1x128xf32>
    %125 = vector.broadcast %124 : vector<1x128xf32> to vector<16x128xf32>
    %126 = arith.addf %122, %125 : vector<16x128xf32>
    %cst_103 = arith.constant 0.000000e+00 : f32
    %127 = vector.broadcast %cst_103 : f32 to vector<16x128xf32>
    %128 = arith.maximumf %126, %127 : vector<16x128xf32>
    %129 = arith.truncf %128 : vector<16x128xf32> to vector<16x128xbf16>
    %c1_104 = arith.constant 1 : index
    %c0_105 = arith.constant 0 : index
    %c0_106 = arith.constant 0 : index
    %130 = vector.load %arg21[%c1_104, %c0_105, %c0_106] : memref<2x128x128xbf16, #tpu.memory_space<vmem>>, vector<1x128x128xbf16>
    %131 = vector.shape_cast %130 : vector<1x128x128xbf16> to vector<128x128xbf16>
    %cst_107 = arith.constant dense<0.000000e+00> : vector<16x128xf32>
    %132 = tpu.matmul %129, %131, %cst_107 {dimension_numbers = #tpu.dot_dimension_numbers<[1], [0], [0], [1], [0, 0, 1, 1], [], []>} : vector<16x128xbf16>, vector<128x128xbf16>, vector<16x128xf32> -> vector<16x128xf32>
    %133 = arith.addf %118, %132 : vector<16x128xf32>
    %c1_108 = arith.constant 1 : index
    %c0_109 = arith.constant 0 : index
    %c0_110 = arith.constant 0 : index
    %134 = vector.load %arg22[%c1_108, %c0_109, %c0_110] : memref<2x1x128xf32, #tpu.memory_space<vmem>>, vector<1x1x128xf32>
    %135 = vector.shape_cast %134 : vector<1x1x128xf32> to vector<1x128xf32>
    %136 = vector.broadcast %135 : vector<1x128xf32> to vector<16x128xf32>
    %137 = arith.addf %133, %136 : vector<16x128xf32>
    %138 = arith.truncf %137 : vector<16x128xf32> to vector<16x128xbf16>
    %c0_111 = arith.constant 0 : index
    %c0_112 = arith.constant 0 : index
    %139 = vector.load %arg23[%c0_111, %c0_112] : memref<128x128xbf16, #tpu.memory_space<vmem>>, vector<128x128xbf16>
    %cst_113 = arith.constant dense<0.000000e+00> : vector<16x128xf32>
    %140 = tpu.matmul %138, %139, %cst_113 {dimension_numbers = #tpu.dot_dimension_numbers<[1], [0], [0], [1], [0, 0, 1, 1], [], []>} : vector<16x128xbf16>, vector<128x128xbf16>, vector<16x128xf32> -> vector<16x128xf32>
    %c0_114 = arith.constant 0 : index
    %c0_115 = arith.constant 0 : index
    %141 = vector.load %arg24[%c0_114, %c0_115] : memref<1x128xf32, #tpu.memory_space<vmem>>, vector<1x128xf32>
    %142 = vector.broadcast %141 : vector<1x128xf32> to vector<16x128xf32>
    %143 = arith.addf %140, %142 : vector<16x128xf32>
    %144 = vector.extract_strided_slice %143 {offsets = [0, 0], sizes = [16, 8], strides = [1, 1]} : vector<16x128xf32> to vector<16x8xf32>
    %c0_116 = arith.constant 0 : index
    %c0_117 = arith.constant 0 : index
    %c0_118 = arith.constant 0 : index
    %145 = vector.load %arg25[%c0_116, %c0_117, %c0_118] : memref<1x16x8xf32, #tpu.memory_space<vmem>>, vector<1x16x8xf32>
    %146 = vector.shape_cast %145 : vector<1x16x8xf32> to vector<16x8xf32>
    %147 = vector.shape_cast %144 : vector<16x8xf32> to vector<1x16x8xf32>
    tpu.vector_store %arg25[%c0_116, %c0_117, %c0_118], %147 {strides = array<i32>} : memref<1x16x8xf32, #tpu.memory_space<vmem>>, vector<1x16x8xf32>,
    return
  }
  func.func @transform_0(%arg0: i32, %arg1: i32) -> (i32, i32, i32) {
    %c0_i32 = arith.constant 0 : i32
    %c0_i32_0 = arith.constant 0 : i32
    return %arg0, %arg1, %c0_i32 : i32, i32, i32
  }
  func.func @transform_1(%arg0: i32, %arg1: i32) -> (i32, i32) {
    %c0_i32 = arith.constant 0 : i32
    %c0_i32_0 = arith.constant 0 : i32
    return %arg1, %c0_i32 : i32, i32
  }
  func.func @transform_2(%arg0: i32, %arg1: i32) -> (i32, i32) {
    %c0_i32 = arith.constant 0 : i32
    %c0_i32_0 = arith.constant 0 : i32
    %c0_i32_1 = arith.constant 0 : i32
    return %c0_i32, %c0_i32_0 : i32, i32
  }
  func.func @transform_3(%arg0: i32, %arg1: i32) -> (i32, i32) {
    %c0_i32 = arith.constant 0 : i32
    %c0_i32_0 = arith.constant 0 : i32
    %c0_i32_1 = arith.constant 0 : i32
    return %c0_i32, %c0_i32_0 : i32, i32
  }
  func.func @transform_4(%arg0: i32, %arg1: i32) -> (i32, i32) {
    %c0_i32 = arith.constant 0 : i32
    %c0_i32_0 = arith.constant 0 : i32
    %c0_i32_1 = arith.constant 0 : i32
    return %c0_i32, %c0_i32_0 : i32, i32
  }
  func.func @transform_5(%arg0: i32, %arg1: i32) -> (i32, i32, i32) {
    %c0_i32 = arith.constant 0 : i32
    %c0_i32_0 = arith.constant 0 : i32
    %c0_i32_1 = arith.constant 0 : i32
    %c0_i32_2 = arith.constant 0 : i32
    return %c0_i32, %c0_i32_0, %c0_i32_1 : i32, i32, i32
  }
  func.func @transform_6(%arg0: i32, %arg1: i32) -> (i32, i32, i32) {
    %c0_i32 = arith.constant 0 : i32
    %c0_i32_0 = arith.constant 0 : i32
    %c0_i32_1 = arith.constant 0 : i32
    %c0_i32_2 = arith.constant 0 : i32
    return %c0_i32, %c0_i32_0, %c0_i32_1 : i32, i32, i32
  }
  func.func @transform_7(%arg0: i32, %arg1: i32) -> (i32, i32, i32) {
    %c0_i32 = arith.constant 0 : i32
    %c0_i32_0 = arith.constant 0 : i32
    %c0_i32_1 = arith.constant 0 : i32
    %c0_i32_2 = arith.constant 0 : i32
    return %c0_i32, %c0_i32_0, %c0_i32_1 : i32, i32, i32
  }
  func.func @transform_8(%arg0: i32, %arg1: i32) -> (i32, i32, i32) {
    %c0_i32 = arith.constant 0 : i32
    %c0_i32_0 = arith.constant 0 : i32
    %c0_i32_1 = arith.constant 0 : i32
    %c0_i32_2 = arith.constant 0 : i32
    return %c0_i32, %c0_i32_0, %c0_i32_1 : i32, i32, i32
  }
  func.func @transform_9(%arg0: i32, %arg1: i32) -> (i32, i32) {
    %c0_i32 = arith.constant 0 : i32
    %c0_i32_0 = arith.constant 0 : i32
    %c0_i32_1 = arith.constant 0 : i32
    return %c0_i32, %c0_i32_0 : i32, i32
  }
  func.func @transform_10(%arg0: i32, %arg1: i32) -> (i32, i32) {
    %c0_i32 = arith.constant 0 : i32
    %c0_i32_0 = arith.constant 0 : i32
    %c0_i32_1 = arith.constant 0 : i32
    return %c0_i32, %c0_i32_0 : i32, i32
  }
  func.func @transform_11(%arg0: i32, %arg1: i32) -> (i32, i32, i32) {
    %c0_i32 = arith.constant 0 : i32
    %c0_i32_0 = arith.constant 0 : i32
    %c0_i32_1 = arith.constant 0 : i32
    %c0_i32_2 = arith.constant 0 : i32
    return %c0_i32, %c0_i32_0, %c0_i32_1 : i32, i32, i32
  }
  func.func @transform_12(%arg0: i32, %arg1: i32) -> (i32, i32, i32) {
    %c0_i32 = arith.constant 0 : i32
    %c0_i32_0 = arith.constant 0 : i32
    %c0_i32_1 = arith.constant 0 : i32
    %c0_i32_2 = arith.constant 0 : i32
    return %c0_i32, %c0_i32_0, %c0_i32_1 : i32, i32, i32
  }
  func.func @transform_13(%arg0: i32, %arg1: i32) -> (i32, i32, i32) {
    %c0_i32 = arith.constant 0 : i32
    %c0_i32_0 = arith.constant 0 : i32
    %c0_i32_1 = arith.constant 0 : i32
    %c0_i32_2 = arith.constant 0 : i32
    return %c0_i32, %c0_i32_0, %c0_i32_1 : i32, i32, i32
  }
  func.func @transform_14(%arg0: i32, %arg1: i32) -> (i32, i32, i32) {
    %c0_i32 = arith.constant 0 : i32
    %c0_i32_0 = arith.constant 0 : i32
    %c0_i32_1 = arith.constant 0 : i32
    %c0_i32_2 = arith.constant 0 : i32
    return %c0_i32, %c0_i32_0, %c0_i32_1 : i32, i32, i32
  }
  func.func @transform_15(%arg0: i32, %arg1: i32) -> (i32, i32) {
    %c0_i32 = arith.constant 0 : i32
    %c0_i32_0 = arith.constant 0 : i32
    %c0_i32_1 = arith.constant 0 : i32
    return %c0_i32, %c0_i32_0 : i32, i32
  }
  func.func @transform_16(%arg0: i32, %arg1: i32) -> (i32, i32) {
    %c0_i32 = arith.constant 0 : i32
    %c0_i32_0 = arith.constant 0 : i32
    %c0_i32_1 = arith.constant 0 : i32
    return %c0_i32, %c0_i32_0 : i32, i32
  }
  func.func @transform_17(%arg0: i32, %arg1: i32) -> (i32, i32, i32) {
    %c0_i32 = arith.constant 0 : i32
    %c0_i32_0 = arith.constant 0 : i32
    %c0_i32_1 = arith.constant 0 : i32
    %c0_i32_2 = arith.constant 0 : i32
    return %c0_i32, %c0_i32_0, %c0_i32_1 : i32, i32, i32
  }
  func.func @transform_18(%arg0: i32, %arg1: i32) -> (i32, i32, i32) {
    %c0_i32 = arith.constant 0 : i32
    %c0_i32_0 = arith.constant 0 : i32
    %c0_i32_1 = arith.constant 0 : i32
    %c0_i32_2 = arith.constant 0 : i32
    return %c0_i32, %c0_i32_0, %c0_i32_1 : i32, i32, i32
  }
  func.func @transform_19(%arg0: i32, %arg1: i32) -> (i32, i32, i32) {
    %c0_i32 = arith.constant 0 : i32
    %c0_i32_0 = arith.constant 0 : i32
    %c0_i32_1 = arith.constant 0 : i32
    %c0_i32_2 = arith.constant 0 : i32
    return %c0_i32, %c0_i32_0, %c0_i32_1 : i32, i32, i32
  }
  func.func @transform_20(%arg0: i32, %arg1: i32) -> (i32, i32, i32) {
    %c0_i32 = arith.constant 0 : i32
    %c0_i32_0 = arith.constant 0 : i32
    %c0_i32_1 = arith.constant 0 : i32
    %c0_i32_2 = arith.constant 0 : i32
    return %c0_i32, %c0_i32_0, %c0_i32_1 : i32, i32, i32
  }
  func.func @transform_21(%arg0: i32, %arg1: i32) -> (i32, i32) {
    %c0_i32 = arith.constant 0 : i32
    %c0_i32_0 = arith.constant 0 : i32
    %c0_i32_1 = arith.constant 0 : i32
    return %c0_i32, %c0_i32_0 : i32, i32
  }
  func.func @transform_22(%arg0: i32, %arg1: i32) -> (i32, i32) {
    %c0_i32 = arith.constant 0 : i32
    %c0_i32_0 = arith.constant 0 : i32
    %c0_i32_1 = arith.constant 0 : i32
    return %c0_i32, %c0_i32_0 : i32, i32
  }
  func.func @transform_23(%arg0: i32, %arg1: i32) -> (i32, i32, i32) {
    %c0_i32 = arith.constant 0 : i32
    %c0_i32_0 = arith.constant 0 : i32
    return %arg0, %arg1, %c0_i32 : i32, i32, i32
  }
}

</mosaic_0001>

<llo_original>
// kernel: blstf_forward.1
$region0: #{blstf_forward.1}
  #allocation0 [shape = 'u32[]', space=smem, size = 0x4, offset = 0x4, fixed_abs, tag = 'smem constant byte address 0x4 - core index']
  #allocation1 [shape = 'u32[72,128]{1,0:T(1,128)}', space=vmem, size = 0x9000, scoped, tag = 'internal scratch']
  %s0 = inlined_call_operand.vmem [shape: f32[2,16,8], index: 0, kind: input, shape index: {}]
  %s1 = inlined_call_operand.vmem [shape: f32[16,128], index: 1, kind: input, shape index: {}]
  %s2 = inlined_call_operand.vmem [shape: f32[8,128], index: 2, kind: input, shape index: {}]
  %s3 = inlined_call_operand.vmem [shape: f32[128,128], index: 3, kind: input, shape index: {}]
  %s4 = inlined_call_operand.vmem [shape: f32[128,128], index: 4, kind: input, shape index: {}]
  %s5 = inlined_call_operand.vmem [shape: bf16[2,128,128], index: 5, kind: input, shape index: {}]
  %s6 = inlined_call_operand.vmem [shape: f32[2,1,128], index: 6, kind: input, shape index: {}]
  %s7 = inlined_call_operand.vmem [shape: bf16[2,128,128], index: 7, kind: input, shape index: {}]
  %s8 = inlined_call_operand.vmem [shape: f32[2,1,128], index: 8, kind: input, shape index: {}]
  %s9 = inlined_call_operand.vmem [shape: bf16[128,128], index: 9, kind: input, shape index: {}]
  %s10 = inlined_call_operand.vmem [shape: f32[1,128], index: 10, kind: input, shape index: {}]
  %s11 = inlined_call_operand.vmem [shape: bf16[2,128,128], index: 11, kind: input, shape index: {}]
  %s12 = inlined_call_operand.vmem [shape: f32[2,1,128], index: 12, kind: input, shape index: {}]
  %s13 = inlined_call_operand.vmem [shape: bf16[2,128,128], index: 13, kind: input, shape index: {}]
  %s14 = inlined_call_operand.vmem [shape: f32[2,1,128], index: 14, kind: input, shape index: {}]
  %s15 = inlined_call_operand.vmem [shape: bf16[128,128], index: 15, kind: input, shape index: {}]
  %s16 = inlined_call_operand.vmem [shape: f32[1,128], index: 16, kind: input, shape index: {}]
  %s17 = inlined_call_operand.vmem [shape: bf16[2,128,128], index: 17, kind: input, shape index: {}]
  %s18 = inlined_call_operand.vmem [shape: f32[2,1,128], index: 18, kind: input, shape index: {}]
  %s19 = inlined_call_operand.vmem [shape: bf16[2,128,128], index: 19, kind: input, shape index: {}]
  %s20 = inlined_call_operand.vmem [shape: f32[2,1,128], index: 20, kind: input, shape index: {}]
  %s21 = inlined_call_operand.vmem [shape: bf16[128,128], index: 21, kind: input, shape index: {}]
  %s22 = inlined_call_operand.vmem [shape: f32[1,128], index: 22, kind: input, shape index: {}]
  %s23 = inlined_call_operand.vmem [shape: f32[2,16,8], index: 23, kind: output, shape index: {}]
  %s24 = sld [smem:[#allocation0]]
  $region125: #{blstf_forward.1} parent=0
    _
  %s26 = ssub.s32 1, %s24
  %s27 = scalar_select 0, %s26, %s24
  loop: start=0, step=1, limit=4
  $region2: #{blstf_forward.1} parent=0 // loop_pre_header
    _
  $region3: #{blstf_forward.1} parent=0 // loop_header
    %s29 = sphi 0, %s33
    %p30 = scmp.ge.s32.totalorder %s29, 4
    %s36 = sphi 0, %s48
    %s37 = sphi 0, %s44
    %s38 = sphi 0, %s36
    %s39 = sphi 0, %s37
    %s40 = sphi 0, %s38
    %s41 = sphi 0, %s39
    %s53 = sphi 0, %s55
    %s56 = sphi 0, %s53
    %s57 = sphi 0, %s56
    %s73 = sphi 0, %s57
    %s79 = sphi 0, %s81
    %s82 = sphi 0, %s79
    %s83 = sphi 0, %s82
    %s99 = sphi 0, %s83
    %s103 = sphi 0, %s103
    %s105 = sphi 0, %s103
    %s106 = sphi 0, %s105
    %s120 = sphi 0, %s106
    %s124 = sphi 0, %s124
    %s126 = sphi 0, %s124
    %s127 = sphi 0, %s126
    %s141 = sphi 0, %s127
    %s145 = sphi 0, %s145
    %s147 = sphi 0, %s145
    %s148 = sphi 0, %s147
    %s162 = sphi 0, %s148
    %s166 = sphi 0, %s166
    %s168 = sphi 0, %s166
    %s169 = sphi 0, %s168
    %s183 = sphi 0, %s169
    %s187 = sphi 0, %s187
    %s189 = sphi 0, %s187
    %s190 = sphi 0, %s189
    %s204 = sphi 0, %s190
    %s208 = sphi 0, %s208
    %s210 = sphi 0, %s208
    %s211 = sphi 0, %s210
    %s225 = sphi 0, %s211
    %s229 = sphi 0, %s229
    %s231 = sphi 0, %s229
    %s232 = sphi 0, %s231
    %s246 = sphi 0, %s232
    %s250 = sphi 0, %s250
    %s252 = sphi 0, %s250
    %s253 = sphi 0, %s252
    %s267 = sphi 0, %s253
    %s271 = sphi 0, %s271
    %s273 = sphi 0, %s271
    %s274 = sphi 0, %s273
    %s288 = sphi 0, %s274
    %s292 = sphi 0, %s292
    %s294 = sphi 0, %s292
    %s295 = sphi 0, %s294
    %s309 = sphi 0, %s295
    %s313 = sphi 0, %s313
    %s315 = sphi 0, %s313
    %s316 = sphi 0, %s315
    %s330 = sphi 0, %s316
    %s334 = sphi 0, %s334
    %s336 = sphi 0, %s334
    %s337 = sphi 0, %s336
    %s351 = sphi 0, %s337
    %s355 = sphi 0, %s355
    %s357 = sphi 0, %s355
    %s358 = sphi 0, %s357
    %s372 = sphi 0, %s358
    %s376 = sphi 0, %s376
    %s378 = sphi 0, %s376
    %s379 = sphi 0, %s378
    %s393 = sphi 0, %s379
    %s397 = sphi 0, %s397
    %s399 = sphi 0, %s397
    %s400 = sphi 0, %s399
    %s414 = sphi 0, %s400
    %s418 = sphi 0, %s418
    %s420 = sphi 0, %s418
    %s421 = sphi 0, %s420
    %s435 = sphi 0, %s421
    %s439 = sphi 0, %s439
    %s441 = sphi 0, %s439
    %s442 = sphi 0, %s441
    %s456 = sphi 0, %s442
    %s460 = sphi 0, %s460
    %s462 = sphi 0, %s460
    %s463 = sphi 0, %s462
    %s477 = sphi 0, %s463
    %s481 = sphi 0, %s481
    %s483 = sphi 0, %s481
    %s484 = sphi 0, %s483
    %s498 = sphi 0, %s484
    %s502 = sphi 0, %s502
    %s504 = sphi 0, %s502
    %s505 = sphi 0, %s504
    %s519 = sphi 0, %s505
    %s523 = sphi 0, %s523
    %s525 = sphi 0, %s523
    %s526 = sphi 0, %s525
    %s540 = sphi 0, %s526
    %s548 = sphi 0, %s550
    %s551 = sphi 0, %s548
    %s552 = sphi 0, %s551
    %s568 = sphi 0, %s552
  $region4: #{blstf_forward.1} parent=0 // loop_header_branch
    %32 = sbr.rel (%p30) target = $region8
  $region5: #{blstf_forward.1} parent=0 // loop_body
    %s34 = ssub.s32 %s29, 1
    %s35 = ssub.s32 %s29, 2
    %s42 = sadd.s32 1, %s37
    %p43 = scmp.ge.s32.totalorder %s42, 1
    %s44 = scalar_select %p43, 0, %s42
    %s45 = sadd.s32 1, %s36
    %s46 = scalar_select %p43, %s45, %s36
    %p47 = scmp.ge.s32.totalorder %s46, 2
    %s48 = scalar_select %p47, 0, %s46
    %s49 = ssub.s32 %s36, %s48
    %s50 = ssub.s32 %s37, %s44
    %s51 = sor.u32 %s49, %s50
    %p52 = scmp.eq.s32.totalorder %s51, 0
    %s54 = sadd.s32 %s53, 1
    %s55 = scalar_select %p52, %s53, %s54
    %p58 = pneg %p52
    %p59 = scmp.eq.s32.totalorder %s29, 1
    %p60 = por %p58, %p59
    %p61 = scmp.ne.s32.totalorder %s53, %s56
    %p62 = scmp.eq.s32.totalorder %s29, 0
    %p63 = por %p61, %p62
    %p64 = scmp.ne.s32.totalorder %s53, %s56
    %p65 = scmp.eq.s32.totalorder %s34, 1
    %p66 = por %p64, %p65
    %p67 = scmp.ne.s32.totalorder %s56, %s57
    %p68 = scmp.eq.s32.totalorder %s34, 0
    %p69 = por %p67, %p68
    %p70 = scmp.ne.s32.totalorder %s56, %s57
    %p71 = scmp.eq.s32.totalorder %s35, 1
    %p72 = por %p70, %p71
    %p74 = scmp.ne.s32.totalorder %s57, %s73
    %p75 = scmp.eq.s32.totalorder %s35, 0
    %p76 = por %p74, %p75
    %s77 = ssub.s32 %s37, %s44
    %p78 = scmp.eq.s32.totalorder %s77, 0
    %s80 = sadd.s32 %s79, 1
    %s81 = scalar_select %p78, %s79, %s80
    %p84 = pneg %p78
    %p85 = scmp.eq.s32.totalorder %s29, 1
    %p86 = por %p84, %p85
    %p87 = scmp.ne.s32.totalorder %s79, %s82
    %p88 = scmp.eq.s32.totalorder %s29, 0
    %p89 = por %p87, %p88
    %p90 = scmp.ne.s32.totalorder %s79, %s82
    %p91 = scmp.eq.s32.totalorder %s34, 1
    %p92 = por %p90, %p91
    %p93 = scmp.ne.s32.totalorder %s82, %s83
    %p94 = scmp.eq.s32.totalorder %s34, 0
    %p95 = por %p93, %p94
    %p96 = scmp.ne.s32.totalorder %s82, %s83
    %p97 = scmp.eq.s32.totalorder %s35, 1
    %p98 = por %p96, %p97
    %p100 = scmp.ne.s32.totalorder %s83, %s99
    %p101 = scmp.eq.s32.totalorder %s35, 0
    %p102 = por %p100, %p101
    %s104 = sadd.s32 %s103, 1
    %p107 = scmp.eq.s32.totalorder %s29, 1
    %p108 = scmp.ne.s32.totalorder %s103, %s105
    %p109 = scmp.eq.s32.totalorder %s29, 0
    %p110 = por %p108, %p109
    %p111 = scmp.ne.s32.totalorder %s103, %s105
    %p112 = scmp.eq.s32.totalorder %s34, 1
    %p113 = por %p111, %p112
    %p114 = scmp.ne.s32.totalorder %s105, %s106
    %p115 = scmp.eq.s32.totalorder %s34, 0
    %p116 = por %p114, %p115
    %p117 = scmp.ne.s32.totalorder %s105, %s106
    %p118 = scmp.eq.s32.totalorder %s35, 1
    %p119 = por %p117, %p118
    %p121 = scmp.ne.s32.totalorder %s106, %s120
    %p122 = scmp.eq.s32.totalorder %s35, 0
    %p123 = por %p121, %p122
    %s125 = sadd.s32 %s124, 1
    %p128 = scmp.eq.s32.totalorder %s29, 1
    %p129 = scmp.ne.s32.totalorder %s124, %s126
    %p130 = scmp.eq.s32.totalorder %s29, 0
    %p131 = por %p129, %p130
    %p132 = scmp.ne.s32.totalorder %s124, %s126
    %p133 = scmp.eq.s32.totalorder %s34, 1
    %p134 = por %p132, %p133
    %p135 = scmp.ne.s32.totalorder %s126, %s127
    %p136 = scmp.eq.s32.totalorder %s34, 0
    %p137 = por %p135, %p136
    %p138 = scmp.ne.s32.totalorder %s126, %s127
    %p139 = scmp.eq.s32.totalorder %s35, 1
    %p140 = por %p138, %p139
    %p142 = scmp.ne.s32.totalorder %s127, %s141
    %p143 = scmp.eq.s32.totalorder %s35, 0
    %p144 = por %p142, %p143
    %s146 = sadd.s32 %s145, 1
    %p149 = scmp.eq.s32.totalorder %s29, 1
    %p150 = scmp.ne.s32.totalorder %s145, %s147
    %p151 = scmp.eq.s32.totalorder %s29, 0
    %p152 = por %p150, %p151
    %p153 = scmp.ne.s32.totalorder %s145, %s147
    %p154 = scmp.eq.s32.totalorder %s34, 1
    %p155 = por %p153, %p154
    %p156 = scmp.ne.s32.totalorder %s147, %s148
    %p157 = scmp.eq.s32.totalorder %s34, 0
    %p158 = por %p156, %p157
    %p159 = scmp.ne.s32.totalorder %s147, %s148
    %p160 = scmp.eq.s32.totalorder %s35, 1
    %p161 = por %p159, %p160
    %p163 = scmp.ne.s32.totalorder %s148, %s162
    %p164 = scmp.eq.s32.totalorder %s35, 0
    %p165 = por %p163, %p164
    %s167 = sadd.s32 %s166, 1
    %p170 = scmp.eq.s32.totalorder %s29, 1
    %p171 = scmp.ne.s32.totalorder %s166, %s168
    %p172 = scmp.eq.s32.totalorder %s29, 0
    %p173 = por %p171, %p172
    %p174 = scmp.ne.s32.totalorder %s166, %s168
    %p175 = scmp.eq.s32.totalorder %s34, 1
    %p176 = por %p174, %p175
    %p177 = scmp.ne.s32.totalorder %s168, %s169
    %p178 = scmp.eq.s32.totalorder %s34, 0
    %p179 = por %p177, %p178
    %p180 = scmp.ne.s32.totalorder %s168, %s169
    %p181 = scmp.eq.s32.totalorder %s35, 1
    %p182 = por %p180, %p181
    %p184 = scmp.ne.s32.totalorder %s169, %s183
    %p185 = scmp.eq.s32.totalorder %s35, 0
    %p186 = por %p184, %p185
    %s188 = sadd.s32 %s187, 1
    %p191 = scmp.eq.s32.totalorder %s29, 1
    %p192 = scmp.ne.s32.totalorder %s187, %s189
    %p193 = scmp.eq.s32.totalorder %s29, 0
    %p194 = por %p192, %p193
    %p195 = scmp.ne.s32.totalorder %s187, %s189
    %p196 = scmp.eq.s32.totalorder %s34, 1
    %p197 = por %p195, %p196
    %p198 = scmp.ne.s32.totalorder %s189, %s190
    %p199 = scmp.eq.s32.totalorder %s34, 0
    %p200 = por %p198, %p199
    %p201 = scmp.ne.s32.totalorder %s189, %s190
    %p202 = scmp.eq.s32.totalorder %s35, 1
    %p203 = por %p201, %p202
    %p205 = scmp.ne.s32.totalorder %s190, %s204
    %p206 = scmp.eq.s32.totalorder %s35, 0
    %p207 = por %p205, %p206
    %s209 = sadd.s32 %s208, 1
    %p212 = scmp.eq.s32.totalorder %s29, 1
    %p213 = scmp.ne.s32.totalorder %s208, %s210
    %p214 = scmp.eq.s32.totalorder %s29, 0
    %p215 = por %p213, %p214
    %p216 = scmp.ne.s32.totalorder %s208, %s210
    %p217 = scmp.eq.s32.totalorder %s34, 1
    %p218 = por %p216, %p217
    %p219 = scmp.ne.s32.totalorder %s210, %s211
    %p220 = scmp.eq.s32.totalorder %s34, 0
    %p221 = por %p219, %p220
    %p222 = scmp.ne.s32.totalorder %s210, %s211
    %p223 = scmp.eq.s32.totalorder %s35, 1
    %p224 = por %p222, %p223
    %p226 = scmp.ne.s32.totalorder %s211, %s225
    %p227 = scmp.eq.s32.totalorder %s35, 0
    %p228 = por %p226, %p227
    %s230 = sadd.s32 %s229, 1
    %p233 = scmp.eq.s32.totalorder %s29, 1
    %p234 = scmp.ne.s32.totalorder %s229, %s231
    %p235 = scmp.eq.s32.totalorder %s29, 0
    %p236 = por %p234, %p235
    %p237 = scmp.ne.s32.totalorder %s229, %s231
    %p238 = scmp.eq.s32.totalorder %s34, 1
    %p239 = por %p237, %p238
    %p240 = scmp.ne.s32.totalorder %s231, %s232
    %p241 = scmp.eq.s32.totalorder %s34, 0
    %p242 = por %p240, %p241
    %p243 = scmp.ne.s32.totalorder %s231, %s232
    %p244 = scmp.eq.s32.totalorder %s35, 1
    %p245 = por %p243, %p244
    %p247 = scmp.ne.s32.totalorder %s232, %s246
    %p248 = scmp.eq.s32.totalorder %s35, 0
    %p249 = por %p247, %p248
    %s251 = sadd.s32 %s250, 1
    %p254 = scmp.eq.s32.totalorder %s29, 1
    %p255 = scmp.ne.s32.totalorder %s250, %s252
    %p256 = scmp.eq.s32.totalorder %s29, 0
    %p257 = por %p255, %p256
    %p258 = scmp.ne.s32.totalorder %s250, %s252
    %p259 = scmp.eq.s32.totalorder %s34, 1
    %p260 = por %p258, %p259
    %p261 = scmp.ne.s32.totalorder %s252, %s253
    %p262 = scmp.eq.s32.totalorder %s34, 0
    %p263 = por %p261, %p262
    %p264 = scmp.ne.s32.totalorder %s252, %s253
    %p265 = scmp.eq.s32.totalorder %s35, 1
    %p266 = por %p264, %p265
    %p268 = scmp.ne.s32.totalorder %s253, %s267
    %p269 = scmp.eq.s32.totalorder %s35, 0
    %p270 = por %p268, %p269
    %s272 = sadd.s32 %s271, 1
    %p275 = scmp.eq.s32.totalorder %s29, 1
    %p276 = scmp.ne.s32.totalorder %s271, %s273
    %p277 = scmp.eq.s32.totalorder %s29, 0
    %p278 = por %p276, %p277
    %p279 = scmp.ne.s32.totalorder %s271, %s273
    %p280 = scmp.eq.s32.totalorder %s34, 1
    %p281 = por %p279, %p280
    %p282 = scmp.ne.s32.totalorder %s273, %s274
    %p283 = scmp.eq.s32.totalorder %s34, 0
    %p284 = por %p282, %p283
    %p285 = scmp.ne.s32.totalorder %s273, %s274
    %p286 = scmp.eq.s32.totalorder %s35, 1
    %p287 = por %p285, %p286
    %p289 = scmp.ne.s32.totalorder %s274, %s288
    %p290 = scmp.eq.s32.totalorder %s35, 0
    %p291 = por %p289, %p290
    %s293 = sadd.s32 %s292, 1
    %p296 = scmp.eq.s32.totalorder %s29, 1
    %p297 = scmp.ne.s32.totalorder %s292, %s294
    %p298 = scmp.eq.s32.totalorder %s29, 0
    %p299 = por %p297, %p298
    %p300 = scmp.ne.s32.totalorder %s292, %s294
    %p301 = scmp.eq.s32.totalorder %s34, 1
    %p302 = por %p300, %p301
    %p303 = scmp.ne.s32.totalorder %s294, %s295
    %p304 = scmp.eq.s32.totalorder %s34, 0
    %p305 = por %p303, %p304
    %p306 = scmp.ne.s32.totalorder %s294, %s295
    %p307 = scmp.eq.s32.totalorder %s35, 1
    %p308 = por %p306, %p307
    %p310 = scmp.ne.s32.totalorder %s295, %s309
    %p311 = scmp.eq.s32.totalorder %s35, 0
    %p312 = por %p310, %p311
    %s314 = sadd.s32 %s313, 1
    %p317 = scmp.eq.s32.totalorder %s29, 1
    %p318 = scmp.ne.s32.totalorder %s313, %s315
    %p319 = scmp.eq.s32.totalorder %s29, 0
    %p320 = por %p318, %p319
    %p321 = scmp.ne.s32.totalorder %s313, %s315
    %p322 = scmp.eq.s32.totalorder %s34, 1
    %p323 = por %p321, %p322
    %p324 = scmp.ne.s32.totalorder %s315, %s316
    %p325 = scmp.eq.s32.totalorder %s34, 0
    %p326 = por %p324, %p325
    %p327 = scmp.ne.s32.totalorder %s315, %s316
    %p328 = scmp.eq.s32.totalorder %s35, 1
    %p329 = por %p327, %p328
    %p331 = scmp.ne.s32.totalorder %s316, %s330
    %p332 = scmp.eq.s32.totalorder %s35, 0
    %p333 = por %p331, %p332
    %s335 = sadd.s32 %s334, 1
    %p338 = scmp.eq.s32.totalorder %s29, 1
    %p339 = scmp.ne.s32.totalorder %s334, %s336
    %p340 = scmp.eq.s32.totalorder %s29, 0
    %p341 = por %p339, %p340
    %p342 = scmp.ne.s32.totalorder %s334, %s336
    %p343 = scmp.eq.s32.totalorder %s34, 1
    %p344 = por %p342, %p343
    %p345 = scmp.ne.s32.totalorder %s336, %s337
    %p346 = scmp.eq.s32.totalorder %s34, 0
    %p347 = por %p345, %p346
    %p348 = scmp.ne.s32.totalorder %s336, %s337
    %p349 = scmp.eq.s32.totalorder %s35, 1
    %p350 = por %p348, %p349
    %p352 = scmp.ne.s32.totalorder %s337, %s351
    %p353 = scmp.eq.s32.totalorder %s35, 0
    %p354 = por %p352, %p353
    %s356 = sadd.s32 %s355, 1
    %p359 = scmp.eq.s32.totalorder %s29, 1
    %p360 = scmp.ne.s32.totalorder %s355, %s357
    %p361 = scmp.eq.s32.totalorder %s29, 0
    %p362 = por %p360, %p361
    %p363 = scmp.ne.s32.totalorder %s355, %s357
    %p364 = scmp.eq.s32.totalorder %s34, 1
    %p365 = por %p363, %p364
    %p366 = scmp.ne.s32.totalorder %s357, %s358
    %p367 = scmp.eq.s32.totalorder %s34, 0
    %p368 = por %p366, %p367
    %p369 = scmp.ne.s32.totalorder %s357, %s358
    %p370 = scmp.eq.s32.totalorder %s35, 1
    %p371 = por %p369, %p370
    %p373 = scmp.ne.s32.totalorder %s358, %s372
    %p374 = scmp.eq.s32.totalorder %s35, 0
    %p375 = por %p373, %p374
    %s377 = sadd.s32 %s376, 1
    %p380 = scmp.eq.s32.totalorder %s29, 1
    %p381 = scmp.ne.s32.totalorder %s376, %s378
    %p382 = scmp.eq.s32.totalorder %s29, 0
    %p383 = por %p381, %p382
    %p384 = scmp.ne.s32.totalorder %s376, %s378
    %p385 = scmp.eq.s32.totalorder %s34, 1
    %p386 = por %p384, %p385
    %p387 = scmp.ne.s32.totalorder %s378, %s379
    %p388 = scmp.eq.s32.totalorder %s34, 0
    %p389 = por %p387, %p388
    %p390 = scmp.ne.s32.totalorder %s378, %s379
    %p391 = scmp.eq.s32.totalorder %s35, 1
    %p392 = por %p390, %p391
    %p394 = scmp.ne.s32.totalorder %s379, %s393
    %p395 = scmp.eq.s32.totalorder %s35, 0
    %p396 = por %p394, %p395
    %s398 = sadd.s32 %s397, 1
    %p401 = scmp.eq.s32.totalorder %s29, 1
    %p402 = scmp.ne.s32.totalorder %s397, %s399
    %p403 = scmp.eq.s32.totalorder %s29, 0
    %p404 = por %p402, %p403
    %p405 = scmp.ne.s32.totalorder %s397, %s399
    %p406 = scmp.eq.s32.totalorder %s34, 1
    %p407 = por %p405, %p406
    %p408 = scmp.ne.s32.totalorder %s399, %s400
    %p409 = scmp.eq.s32.totalorder %s34, 0
    %p410 = por %p408, %p409
    %p411 = scmp.ne.s32.totalorder %s399, %s400
    %p412 = scmp.eq.s32.totalorder %s35, 1
    %p413 = por %p411, %p412
    %p415 = scmp.ne.s32.totalorder %s400, %s414
    %p416 = scmp.eq.s32.totalorder %s35, 0
    %p417 = por %p415, %p416
    %s419 = sadd.s32 %s418, 1
    %p422 = scmp.eq.s32.totalorder %s29, 1
    %p423 = scmp.ne.s32.totalorder %s418, %s420
    %p424 = scmp.eq.s32.totalorder %s29, 0
    %p425 = por %p423, %p424
    %p426 = scmp.ne.s32.totalorder %s418, %s420
    %p427 = scmp.eq.s32.totalorder %s34, 1
    %p428 = por %p426, %p427
    %p429 = scmp.ne.s32.totalorder %s420, %s421
    %p430 = scmp.eq.s32.totalorder %s34, 0
    %p431 = por %p429, %p430
    %p432 = scmp.ne.s32.totalorder %s420, %s421
    %p433 = scmp.eq.s32.totalorder %s35, 1
    %p434 = por %p432, %p433
    %p436 = scmp.ne.s32.totalorder %s421, %s435
    %p437 = scmp.eq.s32.totalorder %s35, 0
    %p438 = por %p436, %p437
    %s440 = sadd.s32 %s439, 1
    %p443 = scmp.eq.s32.totalorder %s29, 1
    %p444 = scmp.ne.s32.totalorder %s439, %s441
    %p445 = scmp.eq.s32.totalorder %s29, 0
    %p446 = por %p444, %p445
    %p447 = scmp.ne.s32.totalorder %s439, %s441
    %p448 = scmp.eq.s32.totalorder %s34, 1
    %p449 = por %p447, %p448
    %p450 = scmp.ne.s32.totalorder %s441, %s442
    %p451 = scmp.eq.s32.totalorder %s34, 0
    %p452 = por %p450, %p451
    %p453 = scmp.ne.s32.totalorder %s441, %s442
    %p454 = scmp.eq.s32.totalorder %s35, 1
    %p455 = por %p453, %p454
    %p457 = scmp.ne.s32.totalorder %s442, %s456
    %p458 = scmp.eq.s32.totalorder %s35, 0
    %p459 = por %p457, %p458
    %s461 = sadd.s32 %s460, 1
    %p464 = scmp.eq.s32.totalorder %s29, 1
    %p465 = scmp.ne.s32.totalorder %s460, %s462
    %p466 = scmp.eq.s32.totalorder %s29, 0
    %p467 = por %p465, %p466
    %p468 = scmp.ne.s32.totalorder %s460, %s462
    %p469 = scmp.eq.s32.totalorder %s34, 1
    %p470 = por %p468, %p469
    %p471 = scmp.ne.s32.totalorder %s462, %s463
    %p472 = scmp.eq.s32.totalorder %s34, 0
    %p473 = por %p471, %p472
    %p474 = scmp.ne.s32.totalorder %s462, %s463
    %p475 = scmp.eq.s32.totalorder %s35, 1
    %p476 = por %p474, %p475
    %p478 = scmp.ne.s32.totalorder %s463, %s477
    %p479 = scmp.eq.s32.totalorder %s35, 0
    %p480 = por %p478, %p479
    %s482 = sadd.s32 %s481, 1
    %p485 = scmp.eq.s32.totalorder %s29, 1
    %p486 = scmp.ne.s32.totalorder %s481, %s483
    %p487 = scmp.eq.s32.totalorder %s29, 0
    %p488 = por %p486, %p487
    %p489 = scmp.ne.s32.totalorder %s481, %s483
    %p490 = scmp.eq.s32.totalorder %s34, 1
    %p491 = por %p489, %p490
    %p492 = scmp.ne.s32.totalorder %s483, %s484
    %p493 = scmp.eq.s32.totalorder %s34, 0
    %p494 = por %p492, %p493
    %p495 = scmp.ne.s32.totalorder %s483, %s484
    %p496 = scmp.eq.s32.totalorder %s35, 1
    %p497 = por %p495, %p496
    %p499 = scmp.ne.s32.totalorder %s484, %s498
    %p500 = scmp.eq.s32.totalorder %s35, 0
    %p501 = por %p499, %p500
    %s503 = sadd.s32 %s502, 1
    %p506 = scmp.eq.s32.totalorder %s29, 1
    %p507 = scmp.ne.s32.totalorder %s502, %s504
    %p508 = scmp.eq.s32.totalorder %s29, 0
    %p509 = por %p507, %p508
    %p510 = scmp.ne.s32.totalorder %s502, %s504
    %p511 = scmp.eq.s32.totalorder %s34, 1
    %p512 = por %p510, %p511
    %p513 = scmp.ne.s32.totalorder %s504, %s505
    %p514 = scmp.eq.s32.totalorder %s34, 0
    %p515 = por %p513, %p514
    %p516 = scmp.ne.s32.totalorder %s504, %s505
    %p517 = scmp.eq.s32.totalorder %s35, 1
    %p518 = por %p516, %p517
    %p520 = scmp.ne.s32.totalorder %s505, %s519
    %p521 = scmp.eq.s32.totalorder %s35, 0
    %p522 = por %p520, %p521
    %s524 = sadd.s32 %s523, 1
    %p527 = scmp.eq.s32.totalorder %s29, 1
    %p528 = scmp.ne.s32.totalorder %s523, %s525
    %p529 = scmp.eq.s32.totalorder %s29, 0
    %p530 = por %p528, %p529
    %p531 = scmp.ne.s32.totalorder %s523, %s525
    %p532 = scmp.eq.s32.totalorder %s34, 1
    %p533 = por %p531, %p532
    %p534 = scmp.ne.s32.totalorder %s525, %s526
    %p535 = scmp.eq.s32.totalorder %s34, 0
    %p536 = por %p534, %p535
    %p537 = scmp.ne.s32.totalorder %s525, %s526
    %p538 = scmp.eq.s32.totalorder %s35, 1
    %p539 = por %p537, %p538
    %p541 = scmp.ne.s32.totalorder %s526, %s540
    %p542 = scmp.eq.s32.totalorder %s35, 0
    %p543 = por %p541, %p542
    %s544 = ssub.s32 %s36, %s48
    %s545 = ssub.s32 %s37, %s44
    %s546 = sor.u32 %s544, %s545
    %p547 = scmp.eq.s32.totalorder %s546, 0
    %s549 = sadd.s32 %s548, 1
    %s550 = scalar_select %p547, %s548, %s549
    %p553 = pneg %p547
    %p554 = scmp.eq.s32.totalorder %s29, 1
    %p555 = por %p553, %p554
    %p556 = scmp.ne.s32.totalorder %s548, %s551
    %p557 = scmp.eq.s32.totalorder %s29, 0
    %p558 = por %p556, %p557
    %p559 = scmp.ne.s32.totalorder %s548, %s551
    %p560 = scmp.eq.s32.totalorder %s34, 1
    %p561 = por %p559, %p560
    %p562 = scmp.ne.s32.totalorder %s551, %s552
    %p563 = scmp.eq.s32.totalorder %s34, 0
    %p564 = por %p562, %p563
    %p565 = scmp.ne.s32.totalorder %s551, %s552
    %p566 = scmp.eq.s32.totalorder %s35, 1
    %p567 = por %p565, %p566
    %p569 = scmp.ne.s32.totalorder %s552, %s568
    %p570 = scmp.eq.s32.totalorder %s35, 0
    %p571 = por %p569, %p570
    %p572 = scmp.le.s32.totalorder 1, %s29
    %p573 = scmp.lt.s32.totalorder %s29, 3
    %p574 = pnand %p572, %p573
    %p575 = pneg %p574
    // Predicated region
    $region9: #{blstf_forward.1} parent=5 // pred_check
      _
    $region10: #{blstf_forward.1} parent=5 // pred_check_branch
      %577 = sbr.rel (%p574) target = $region12
    $region11: #{blstf_forward.1} parent=5 // pred_region
      %s578 = ssub.s32 %s29, 1
      // Predicated region
      $region13: #{blstf_forward.1} parent=11 // pred_check
        %p579 = pneg %p95
      $region14: #{blstf_forward.1} parent=11 // pred_check_branch
        %581 = sbr.rel (%p579) target = $region16
      $region15: #{blstf_forward.1} parent=11 // pred_region
        %s582 = smul.u32 2, %s39
        %p583 = scmp.lt.s32.totalorder %s582, 1
        %s584 = scalar_select %p583, %s582, 1
        %s585 = smul.addr %s584, 8
        %s586 = scalar_lea.vmem %s1, %s585
        %s587 = smul.u32 2, %s39
      $region16: #{blstf_forward.1} parent=11 // pred_fallthru
        _
      // Predicated region
      $region17: #{blstf_forward.1} parent=11 // pred_check
        %p588 = pneg %p116
      $region18: #{blstf_forward.1} parent=11 // pred_check_branch
        %590 = sbr.rel (%p588) target = $region20
      $region19: #{blstf_forward.1} parent=11 // pred_region
        _
      $region20: #{blstf_forward.1} parent=11 // pred_fallthru
        _
      // Predicated region
      $region21: #{blstf_forward.1} parent=11 // pred_check
        %p591 = pneg %p137
      $region22: #{blstf_forward.1} parent=11 // pred_check_branch
        %593 = sbr.rel (%p591) target = $region24
      $region23: #{blstf_forward.1} parent=11 // pred_region
        _
      $region24: #{blstf_forward.1} parent=11 // pred_fallthru
        _
      // Predicated region
      $region25: #{blstf_forward.1} parent=11 // pred_check
        %p594 = pneg %p158
      $region26: #{blstf_forward.1} parent=11 // pred_check_branch
        %596 = sbr.rel (%p594) target = $region28
      $region27: #{blstf_forward.1} parent=11 // pred_region
        _
      $region28: #{blstf_forward.1} parent=11 // pred_fallthru
        _
      // Predicated region
      $region29: #{blstf_forward.1} parent=11 // pred_check
        %p597 = pneg %p179
      $region30: #{blstf_forward.1} parent=11 // pred_check_branch
        %599 = sbr.rel (%p597) target = $region32
      $region31: #{blstf_forward.1} parent=11 // pred_region
        _
      $region32: #{blstf_forward.1} parent=11 // pred_fallthru
        _
      // Predicated region
      $region33: #{blstf_forward.1} parent=11 // pred_check
        %p600 = pneg %p200
      $region34: #{blstf_forward.1} parent=11 // pred_check_branch
        %602 = sbr.rel (%p600) target = $region36
      $region35: #{blstf_forward.1} parent=11 // pred_region
        _
      $region36: #{blstf_forward.1} parent=11 // pred_fallthru
        _
      // Predicated region
      $region37: #{blstf_forward.1} parent=11 // pred_check
        %p603 = pneg %p221
      $region38: #{blstf_forward.1} parent=11 // pred_check_branch
        %605 = sbr.rel (%p603) target = $region40
      $region39: #{blstf_forward.1} parent=11 // pred_region
        _
      $region40: #{blstf_forward.1} parent=11 // pred_fallthru
        _
      // Predicated region
      $region41: #{blstf_forward.1} parent=11 // pred_check
        %p606 = pneg %p242
      $region42: #{blstf_forward.1} parent=11 // pred_check_branch
        %608 = sbr.rel (%p606) target = $region44
      $region43: #{blstf_forward.1} parent=11 // pred_region
        _
      $region44: #{blstf_forward.1} parent=11 // pred_fallthru
        _
      // Predicated region
      $region45: #{blstf_forward.1} parent=11 // pred_check
        %p609 = pneg %p263
      $region46: #{blstf_forward.1} parent=11 // pred_check_branch
        %611 = sbr.rel (%p609) target = $region48
      $region47: #{blstf_forward.1} parent=11 // pred_region
        _
      $region48: #{blstf_forward.1} parent=11 // pred_fallthru
        _
      // Predicated region
      $region49: #{blstf_forward.1} parent=11 // pred_check
        %p612 = pneg %p284
      $region50: #{blstf_forward.1} parent=11 // pred_check_branch
        %614 = sbr.rel (%p612) target = $region52
      $region51: #{blstf_forward.1} parent=11 // pred_region
        _
      $region52: #{blstf_forward.1} parent=11 // pred_fallthru
        _
      // Predicated region
      $region53: #{blstf_forward.1} parent=11 // pred_check
        %p615 = pneg %p305
      $region54: #{blstf_forward.1} parent=11 // pred_check_branch
        %617 = sbr.rel (%p615) target = $region56
      $region55: #{blstf_forward.1} parent=11 // pred_region
        _
      $region56: #{blstf_forward.1} parent=11 // pred_fallthru
        _
      // Predicated region
      $region57: #{blstf_forward.1} parent=11 // pred_check
        %p618 = pneg %p326
      $region58: #{blstf_forward.1} parent=11 // pred_check_branch
        %620 = sbr.rel (%p618) target = $region60
      $region59: #{blstf_forward.1} parent=11 // pred_region
        _
      $region60: #{blstf_forward.1} parent=11 // pred_fallthru
        _
      // Predicated region
      $region61: #{blstf_forward.1} parent=11 // pred_check
        %p621 = pneg %p347
      $region62: #{blstf_forward.1} parent=11 // pred_check_branch
        %623 = sbr.rel (%p621) target = $region64
      $region63: #{blstf_forward.1} parent=11 // pred_region
        _
      $region64: #{blstf_forward.1} parent=11 // pred_fallthru
        _
      // Predicated region
      $region65: #{blstf_forward.1} parent=11 // pred_check
        %p624 = pneg %p368
      $region66: #{blstf_forward.1} parent=11 // pred_check_branch
        %626 = sbr.rel (%p624) target = $region68
      $region67: #{blstf_forward.1} parent=11 // pred_region
        _
      $region68: #{blstf_forward.1} parent=11 // pred_fallthru
        _
      // Predicated region
      $region69: #{blstf_forward.1} parent=11 // pred_check
        %p627 = pneg %p389
      $region70: #{blstf_forward.1} parent=11 // pred_check_branch
        %629 = sbr.rel (%p627) target = $region72
      $region71: #{blstf_forward.1} parent=11 // pred_region
        _
      $region72: #{blstf_forward.1} parent=11 // pred_fallthru
        _
      // Predicated region
      $region73: #{blstf_forward.1} parent=11 // pred_check
        %p630 = pneg %p410
      $region74: #{blstf_forward.1} parent=11 // pred_check_branch
        %632 = sbr.rel (%p630) target = $region76
      $region75: #{blstf_forward.1} parent=11 // pred_region
        _
      $region76: #{blstf_forward.1} parent=11 // pred_fallthru
        _
      // Predicated region
      $region77: #{blstf_forward.1} parent=11 // pred_check
        %p633 = pneg %p431
      $region78: #{blstf_forward.1} parent=11 // pred_check_branch
        %635 = sbr.rel (%p633) target = $region80
      $region79: #{blstf_forward.1} parent=11 // pred_region
        _
      $region80: #{blstf_forward.1} parent=11 // pred_fallthru
        _
      // Predicated region
      $region81: #{blstf_forward.1} parent=11 // pred_check
        %p636 = pneg %p452
      $region82: #{blstf_forward.1} parent=11 // pred_check_branch
        %638 = sbr.rel (%p636) target = $region84
      $region83: #{blstf_forward.1} parent=11 // pred_region
        _
      $region84: #{blstf_forward.1} parent=11 // pred_fallthru
        _
      // Predicated region
      $region85: #{blstf_forward.1} parent=11 // pred_check
        %p639 = pneg %p473
      $region86: #{blstf_forward.1} parent=11 // pred_check_branch
        %641 = sbr.rel (%p639) target = $region88
      $region87: #{blstf_forward.1} parent=11 // pred_region
        _
      $region88: #{blstf_forward.1} parent=11 // pred_fallthru
        _
      // Predicated region
      $region89: #{blstf_forward.1} parent=11 // pred_check
        %p642 = pneg %p494
      $region90: #{blstf_forward.1} parent=11 // pred_check_branch
        %644 = sbr.rel (%p642) target = $region92
      $region91: #{blstf_forward.1} parent=11 // pred_region
        _
      $region92: #{blstf_forward.1} parent=11 // pred_fallthru
        _
      // Predicated region
      $region93: #{blstf_forward.1} parent=11 // pred_check
        %p645 = pneg %p515
      $region94: #{blstf_forward.1} parent=11 // pred_check_branch
        %647 = sbr.rel (%p645) target = $region96
      $region95: #{blstf_forward.1} parent=11 // pred_region
        _
      $region96: #{blstf_forward.1} parent=11 // pred_fallthru
        _
      // Predicated region
      $region97: #{blstf_forward.1} parent=11 // pred_check
        %p648 = pneg %p536
      $region98: #{blstf_forward.1} parent=11 // pred_check_branch
        %650 = sbr.rel (%p648) target = $region100
      $region99: #{blstf_forward.1} parent=11 // pred_region
        _
      $region100: #{blstf_forward.1} parent=11 // pred_fallthru
        _
    $region12: #{blstf_forward.1} parent=5 // pred_fallthru
      _
    %p651 = scmp.lt.s32.totalorder %s29, 2
    // Predicated region
    $region101: #{blstf_forward.1} parent=5 // pred_check
      %p652 = pneg %p651
    $region102: #{blstf_forward.1} parent=5 // pred_check_branch
      %654 = sbr.rel (%p652) target = $region104
    $region103: #{blstf_forward.1} parent=5 // pred_region
      // Predicated region
      $region105: #{blstf_forward.1} parent=103 // pred_check
        %p655 = pneg %p63
      $region106: #{blstf_forward.1} parent=103 // pred_check_branch
        %657 = sbr.rel (%p655) target = $region108
      $region107: #{blstf_forward.1} parent=103 // pred_region
        %s658 = smul.u32 2, %s37
        %p659 = scmp.lt.s32.totalorder %s36, 1
        %s660 = scalar_select %p659, %s36, 1
        %p661 = scmp.lt.s32.totalorder %s658, 1
        %s662 = scalar_select %p661, %s658, 1
        %s663 = smul.addr %s660, 2
        %s664 = sadd.s32 %s662, %s663
        %s665 = smul.addr %s664, 8
        %s666 = scalar_lea.vmem %s0, %s665
        %s667 = smul.u32 2, %s37
      $region108: #{blstf_forward.1} parent=103 // pred_fallthru
        _
    $region104: #{blstf_forward.1} parent=5 // pred_fallthru
      _
    %p668 = scmp.le.s32.totalorder 1, %s29
    %p669 = scmp.lt.s32.totalorder %s29, 3
    %p670 = pnand %p668, %p669
    %p671 = pneg %p670
    // Predicated region
    $region109: #{blstf_forward.1} parent=5 // pred_check
      _
    $region110: #{blstf_forward.1} parent=5 // pred_check_branch
      %673 = sbr.rel (%p670) target = $region112
    $region111: #{blstf_forward.1} parent=5 // pred_region
      %s674 = ssub.s32 %s29, 1
      %s675 = smul.u32 2, %s39
      %p676 = scmp.lt.s32.totalorder %s38, 1
      %s677 = scalar_select %p676, %s38, 1
      %p678 = scmp.lt.s32.totalorder %s675, 1
      %s679 = scalar_select %p678, %s675, 1
      %s680 = smul.addr %s677, 2
      %s681 = sadd.s32 %s679, %s680
      %s682 = smul.addr %s681, 8
      %s683 = scalar_lea.vmem %s0, %s682
      %p684 = pneg %p69
      %p685 = pneg %p66
      %s686 = smul.u32 2, %s39
      %p687 = scmp.lt.s32.totalorder %s686, 1
      %s688 = scalar_select %p687, %s686, 1
      %s689 = smul.addr %s688, 8
      %s690 = scalar_lea.vmem %s1, %s689
      %p691 = pneg %p95
      %p692 = pneg %p92
      %p693 = pneg %p116
      %p694 = pneg %p113
      %p695 = pneg %p137
      %p696 = pneg %p134
      %p697 = pneg %p158
      %p698 = pneg %p155
      %p699 = pneg %p179
      %p700 = pneg %p176
      %p701 = pneg %p200
      %p702 = pneg %p197
      %p703 = pneg %p221
      %p704 = pneg %p218
      %p705 = pneg %p242
      %p706 = pneg %p239
      %p707 = pneg %p263
      %p708 = pneg %p260
      %p709 = pneg %p284
      %p710 = pneg %p281
      %p711 = pneg %p305
      %p712 = pneg %p302
      %p713 = pneg %p326
      %p714 = pneg %p323
      %p715 = pneg %p347
      %p716 = pneg %p344
      %p717 = pneg %p368
      %p718 = pneg %p365
      %p719 = pneg %p389
      %p720 = pneg %p386
      %p721 = pneg %p410
      %p722 = pneg %p407
      %p723 = pneg %p431
      %p724 = pneg %p428
      %p725 = pneg %p452
      %p726 = pneg %p449
      %p727 = pneg %p473
      %p728 = pneg %p470
      %p729 = pneg %p494
      %p730 = pneg %p491
      %p731 = pneg %p515
      %p732 = pneg %p512
      %p733 = pneg %p536
      %p734 = pneg %p533
      %p735 = pneg %p564
      %p736 = pneg %p561
      %s737 = smul.u32 2, %s39
      %p738 = scmp.lt.s32.totalorder %s38, 1
      %s739 = scalar_select %p738, %s38, 1
      %p740 = scmp.lt.s32.totalorder %s737, 1
      %s741 = scalar_select %p740, %s737, 1
      %s742 = smul.addr %s739, 2
      %s743 = sadd.s32 %s741, %s742
      %s744 = smul.addr %s743, 8
      %s745 = scalar_lea.vmem %s23, %s744
      %s746 = smul.u32 2, %s39
      %p747 = scmp.lt.s32.totalorder %s38, 1
      %s748 = scalar_select %p747, %s38, 1
      %p749 = scmp.lt.s32.totalorder %s746, 1
      %s750 = scalar_select %p749, %s746, 1
      %s751 = smul.addr %s748, 2
      %s752 = sadd.s32 %s750, %s751
      %s753 = smul.addr %s752, 8
      %s754 = scalar_lea.vmem %s0, %s753
      %s755 = smul.u32 2, %s39
      %s756 = smul.u32 2, %s39
      %p757 = scmp.lt.s32.totalorder %s756, 1
      %s758 = scalar_select %p757, %s756, 1
      %s759 = smul.addr %s758, 8
      %s760 = scalar_lea.vmem %s1, %s759
      %s761 = smul.u32 2, %s39
      %s762 = smul.u32 2, %s39
      %p763 = scmp.lt.s32.totalorder %s38, 1
      %s764 = scalar_select %p763, %s38, 1
      %p765 = scmp.lt.s32.totalorder %s762, 1
      %s766 = scalar_select %p765, %s762, 1
      %s767 = smul.addr %s764, 2
      %s768 = sadd.s32 %s766, %s767
      %s769 = smul.addr %s768, 8
      %s770 = scalar_lea.vmem %s23, %s769
      %s771 = smul.u32 2, %s39
      %v772 = vld [vmem:[%s754] sm:$0xff]
      %v773 = vld [vmem:[%s754 + $0x8] sm:$0xff]
      %v774 = vld [vmem:[%s2] sm:$0xff]
      %v775 = vld [vmem:[%s760] sm:$0xff]
      %v776 = vld [vmem:[%s760 + $0x8] sm:$0xff]
      %vm777 = vcmask 64512
      %v779 = vsel %vm777, %v772, 0
      %v782 = vsel %vm777, %v773, 0
      %784 = vmatpush.msra.mxu0 0.0
      %785 = vmatpush.msra.mxu0 0.0
      %786 = vmatpush.msra.mxu0 0.0
      %787 = vmatpush.msra.mxu0 0.0
      %788 = vmatpush.msra.mxu0 0.0
      %789 = vmatpush.msra.mxu0 0.0
      %790 = vmatpush.msra.mxu0 0.0
      %791 = vmatpush.msra.mxu0 0.0
      %792 = vmatpush.msra.mxu0 0.0
      %793 = vmatpush.msra.mxu0 0.0
      %794 = vmatpush.msra.mxu0 0.0
      %795 = vmatpush.msra.mxu0 0.0
      %796 = vmatpush.msra.mxu0 0.0
      %797 = vmatpush.msra.mxu0 0.0
      %798 = vmatpush.msra.mxu0 0.0
      %799 = vmatpush.msra.mxu0 %v774
      %800 = vmatmul.f32.gmra.mxu0 %v779
      %v801 = vpop.f32.mrf.mxu0
      %v802 = vadd.f32 %v775, %v801
      %803 = vmatmul.f32.gmra.mxu0 %v782
      %v804 = vpop.f32.mrf.mxu0
      %v805 = vadd.f32 %v776, %v804
      %806 = vdwg.mxu0
      %v807 = vpack.c.bf16 %v805, %v802
      %v808 = vld [vmem:[%s5] sm:$0xf]
      %v809 = vld [vmem:[%s5 + $0x4] sm:$0xf]
      %v810 = vld [vmem:[%s5 + $0x8] sm:$0xf]
      %v811 = vld [vmem:[%s5 + $0xc] sm:$0xf]
      %v812 = vld [vmem:[%s5 + $0x10] sm:$0xf]
      %v813 = vld [vmem:[%s5 + $0x14] sm:$0xf]
      %v814 = vld [vmem:[%s5 + $0x18] sm:$0xf]
      %v815 = vld [vmem:[%s5 + $0x1c] sm:$0xf]
      %v816 = vld [vmem:[%s5 + $0x20] sm:$0xf]
      %v817 = vld [vmem:[%s5 + $0x24] sm:$0xf]
      %v818 = vld [vmem:[%s5 + $0x28] sm:$0xf]
      %v819 = vld [vmem:[%s5 + $0x2c] sm:$0xf]
      %v820 = vld [vmem:[%s5 + $0x30] sm:$0xf]
      %v821 = vld [vmem:[%s5 + $0x34] sm:$0xf]
      %v822 = vld [vmem:[%s5 + $0x38] sm:$0xf]
      %v823 = vld [vmem:[%s5 + $0x3c] sm:$0xf]
      %v824 = vld [vmem:[%s6] sm:$0x1]
      %v826 = vperm.slane %v824, 0
      %v844 = vunpack.c.l.b16 %v808
      %v845 = vunpack.c.l.b16 %v809
      %v846 = vunpack.c.l.b16 %v810
      %v847 = vunpack.c.l.b16 %v811
      %v848 = vunpack.c.l.b16 %v812
      %v849 = vunpack.c.l.b16 %v813
      %v850 = vunpack.c.l.b16 %v814
      %v851 = vunpack.c.l.b16 %v815
      %v852 = vunpack.c.l.b16 %v816
      %v853 = vunpack.c.l.b16 %v817
      %v854 = vunpack.c.l.b16 %v818
      %v855 = vunpack.c.l.b16 %v819
      %v856 = vunpack.c.l.b16 %v820
      %v857 = vunpack.c.l.b16 %v821
      %v858 = vunpack.c.l.b16 %v822
      %v859 = vunpack.c.l.b16 %v823
      %v860 = vpack.c.b16 %v845, %v844
      %v861 = vpack.c.b16 %v847, %v846
      %v862 = vpack.c.b16 %v849, %v848
      %v863 = vpack.c.b16 %v851, %v850
      %v864 = vpack.c.b16 %v853, %v852
      %v865 = vpack.c.b16 %v855, %v854
      %v866 = vpack.c.b16 %v857, %v856
      %v867 = vpack.c.b16 %v859, %v858
      %876 = vmatpush.bf16.msra.mxu0 %v867
      %877 = vmatpush.bf16.msra.mxu0 %v866
      %878 = vmatpush.bf16.msra.mxu0 %v865
      %879 = vmatpush.bf16.msra.mxu0 %v864
      %880 = vmatpush.bf16.msra.mxu0 %v863
      %881 = vmatpush.bf16.msra.mxu0 %v862
      %882 = vmatpush.bf16.msra.mxu0 %v861
      %883 = vmatpush.bf16.msra.mxu0 %v860
      %884 = vmatmul.bf16.gmra.mxu0 %v807
      %v885 = vpop.f32.mrf.mxu0
      %v886 = vadd.f32 %v826, %v885
      %v887 = vpop.f32.mrf.mxu0
      %v888 = vadd.f32 %v826, %v887
      %889 = vdwg.mxu0
      %v890 = vmax.f32 %v886, 0.0
      %v891 = vmax.f32 %v888, 0.0
      %v892 = vpack.c.bf16 %v891, %v890
      %v893 = vld [vmem:[%s7] sm:$0xf]
      %v894 = vld [vmem:[%s7 + $0x4] sm:$0xf]
      %v895 = vld [vmem:[%s7 + $0x8] sm:$0xf]
      %v896 = vld [vmem:[%s7 + $0xc] sm:$0xf]
      %v897 = vld [vmem:[%s7 + $0x10] sm:$0xf]
      %v898 = vld [vmem:[%s7 + $0x14] sm:$0xf]
      %v899 = vld [vmem:[%s7 + $0x18] sm:$0xf]
      %v900 = vld [vmem:[%s7 + $0x1c] sm:$0xf]
      %v901 = vld [vmem:[%s7 + $0x20] sm:$0xf]
      %v902 = vld [vmem:[%s7 + $0x24] sm:$0xf]
      %v903 = vld [vmem:[%s7 + $0x28] sm:$0xf]
      %v904 = vld [vmem:[%s7 + $0x2c] sm:$0xf]
      %v905 = vld [vmem:[%s7 + $0x30] sm:$0xf]
      %v906 = vld [vmem:[%s7 + $0x34] sm:$0xf]
      %v907 = vld [vmem:[%s7 + $0x38] sm:$0xf]
      %v908 = vld [vmem:[%s7 + $0x3c] sm:$0xf]
      %v925 = vunpack.c.l.b16 %v893
      %v926 = vunpack.c.l.b16 %v894
      %v927 = vunpack.c.l.b16 %v895
      %v928 = vunpack.c.l.b16 %v896
      %v929 = vunpack.c.l.b16 %v897
      %v930 = vunpack.c.l.b16 %v898
      %v931 = vunpack.c.l.b16 %v899
      %v932 = vunpack.c.l.b16 %v900
      %v933 = vunpack.c.l.b16 %v901
      %v934 = vunpack.c.l.b16 %v902
      %v935 = vunpack.c.l.b16 %v903
      %v936 = vunpack.c.l.b16 %v904
      %v937 = vunpack.c.l.b16 %v905
      %v938 = vunpack.c.l.b16 %v906
      %v939 = vunpack.c.l.b16 %v907
      %v940 = vunpack.c.l.b16 %v908
      %v941 = vpack.c.b16 %v926, %v925
      %v942 = vpack.c.b16 %v928, %v927
      %v943 = vpack.c.b16 %v930, %v929
      %v944 = vpack.c.b16 %v932, %v931
      %v945 = vpack.c.b16 %v934, %v933
      %v946 = vpack.c.b16 %v936, %v935
      %v947 = vpack.c.b16 %v938, %v937
      %v948 = vpack.c.b16 %v940, %v939
      %957 = vmatpush.bf16.msra.mxu0 %v948
      %958 = vmatpush.bf16.msra.mxu0 %v947
      %959 = vmatpush.bf16.msra.mxu0 %v946
      %960 = vmatpush.bf16.msra.mxu0 %v945
      %961 = vmatpush.bf16.msra.mxu0 %v944
      %962 = vmatpush.bf16.msra.mxu0 %v943
      %963 = vmatpush.bf16.msra.mxu0 %v942
      %964 = vmatpush.bf16.msra.mxu0 %v941
      %965 = vmatmul.bf16.gmra.mxu0 %v892
      %v966 = vpop.f32.mrf.mxu0
      %v967 = vadd.f32 0.0, %v966
      %v968 = vpop.f32.mrf.mxu0
      %v969 = vadd.f32 0.0, %v968
      %970 = vdwg.mxu0
      %v971 = vadd.f32 %v802, %v967
      %v972 = vadd.f32 %v805, %v969
      %v973 = vld [vmem:[%s8] sm:$0x1]
      %v975 = vperm.slane %v973, 0
      %v977 = vadd.f32 %v971, %v975
      %v978 = vadd.f32 %v972, %v975
      %v979 = vpack.c.bf16 %v978, %v977
      %s980 = scalar_lea.vmem %s5, 64
      %v981 = vld [vmem:[%s980] sm:$0xf]
      %v982 = vld [vmem:[%s980 + $0x4] sm:$0xf]
      %v983 = vld [vmem:[%s980 + $0x8] sm:$0xf]
      %v984 = vld [vmem:[%s980 + $0xc] sm:$0xf]
      %v985 = vld [vmem:[%s980 + $0x10] sm:$0xf]
      %v986 = vld [vmem:[%s980 + $0x14] sm:$0xf]
      %v987 = vld [vmem:[%s980 + $0x18] sm:$0xf]
      %v988 = vld [vmem:[%s980 + $0x1c] sm:$0xf]
      %v989 = vld [vmem:[%s980 + $0x20] sm:$0xf]
      %v990 = vld [vmem:[%s980 + $0x24] sm:$0xf]
      %v991 = vld [vmem:[%s980 + $0x28] sm:$0xf]
      %v992 = vld [vmem:[%s980 + $0x2c] sm:$0xf]
      %v993 = vld [vmem:[%s980 + $0x30] sm:$0xf]
      %v994 = vld [vmem:[%s980 + $0x34] sm:$0xf]
      %v995 = vld [vmem:[%s980 + $0x38] sm:$0xf]
      %v996 = vld [vmem:[%s980 + $0x3c] sm:$0xf]
      %s997 = scalar_lea.vmem %s6, 1
      %v998 = vld [vmem:[%s997] sm:$0x1]
      %v1000 = vperm.slane %v998, 0
      %v1018 = vunpack.c.l.b16 %v981
      %v1019 = vunpack.c.l.b16 %v982
      %v1020 = vunpack.c.l.b16 %v983
      %v1021 = vunpack.c.l.b16 %v984
      %v1022 = vunpack.c.l.b16 %v985
      %v1023 = vunpack.c.l.b16 %v986
      %v1024 = vunpack.c.l.b16 %v987
      %v1025 = vunpack.c.l.b16 %v988
      %v1026 = vunpack.c.l.b16 %v989
      %v1027 = vunpack.c.l.b16 %v990
      %v1028 = vunpack.c.l.b16 %v991
      %v1029 = vunpack.c.l.b16 %v992
      %v1030 = vunpack.c.l.b16 %v993
      %v1031 = vunpack.c.l.b16 %v994
      %v1032 = vunpack.c.l.b16 %v995
      %v1033 = vunpack.c.l.b16 %v996
      %v1034 = vpack.c.b16 %v1019, %v1018
      %v1035 = vpack.c.b16 %v1021, %v1020
      %v1036 = vpack.c.b16 %v1023, %v1022
      %v1037 = vpack.c.b16 %v1025, %v1024
      %v1038 = vpack.c.b16 %v1027, %v1026
      %v1039 = vpack.c.b16 %v1029, %v1028
      %v1040 = vpack.c.b16 %v1031, %v1030
      %v1041 = vpack.c.b16 %v1033, %v1032
      %1050 = vmatpush.bf16.msra.mxu0 %v1041
      %1051 = vmatpush.bf16.msra.mxu0 %v1040
      %1052 = vmatpush.bf16.msra.mxu0 %v1039
      %1053 = vmatpush.bf16.msra.mxu0 %v1038
      %1054 = vmatpush.bf16.msra.mxu0 %v1037
      %1055 = vmatpush.bf16.msra.mxu0 %v1036
      %1056 = vmatpush.bf16.msra.mxu0 %v1035
      %1057 = vmatpush.bf16.msra.mxu0 %v1034
      %1058 = vmatmul.bf16.gmra.mxu0 %v979
      %v1059 = vpop.f32.mrf.mxu0
      %v1060 = vadd.f32 %v1000, %v1059
      %v1061 = vpop.f32.mrf.mxu0
      %v1062 = vadd.f32 %v1000, %v1061
      %1063 = vdwg.mxu0
      %v1064 = vmax.f32 %v1060, 0.0
      %v1065 = vmax.f32 %v1062, 0.0
      %v1066 = vpack.c.bf16 %v1065, %v1064
      %s1067 = scalar_lea.vmem %s7, 64
      %v1068 = vld [vmem:[%s1067] sm:$0xf]
      %v1069 = vld [vmem:[%s1067 + $0x4] sm:$0xf]
      %v1070 = vld [vmem:[%s1067 + $0x8] sm:$0xf]
      %v1071 = vld [vmem:[%s1067 + $0xc] sm:$0xf]
      %v1072 = vld [vmem:[%s1067 + $0x10] sm:$0xf]
      %v1073 = vld [vmem:[%s1067 + $0x14] sm:$0xf]
      %v1074 = vld [vmem:[%s1067 + $0x18] sm:$0xf]
      %v1075 = vld [vmem:[%s1067 + $0x1c] sm:$0xf]
      %v1076 = vld [vmem:[%s1067 + $0x20] sm:$0xf]
      %v1077 = vld [vmem:[%s1067 + $0x24] sm:$0xf]
      %v1078 = vld [vmem:[%s1067 + $0x28] sm:$0xf]
      %v1079 = vld [vmem:[%s1067 + $0x2c] sm:$0xf]
      %v1080 = vld [vmem:[%s1067 + $0x30] sm:$0xf]
      %v1081 = vld [vmem:[%s1067 + $0x34] sm:$0xf]
      %v1082 = vld [vmem:[%s1067 + $0x38] sm:$0xf]
      %v1083 = vld [vmem:[%s1067 + $0x3c] sm:$0xf]
      %v1100 = vunpack.c.l.b16 %v1068
      %v1101 = vunpack.c.l.b16 %v1069
      %v1102 = vunpack.c.l.b16 %v1070
      %v1103 = vunpack.c.l.b16 %v1071
      %v1104 = vunpack.c.l.b16 %v1072
      %v1105 = vunpack.c.l.b16 %v1073
      %v1106 = vunpack.c.l.b16 %v1074
      %v1107 = vunpack.c.l.b16 %v1075
      %v1108 = vunpack.c.l.b16 %v1076
      %v1109 = vunpack.c.l.b16 %v1077
      %v1110 = vunpack.c.l.b16 %v1078
      %v1111 = vunpack.c.l.b16 %v1079
      %v1112 = vunpack.c.l.b16 %v1080
      %v1113 = vunpack.c.l.b16 %v1081
      %v1114 = vunpack.c.l.b16 %v1082
      %v1115 = vunpack.c.l.b16 %v1083
      %v1116 = vpack.c.b16 %v1101, %v1100
      %v1117 = vpack.c.b16 %v1103, %v1102
      %v1118 = vpack.c.b16 %v1105, %v1104
      %v1119 = vpack.c.b16 %v1107, %v1106
      %v1120 = vpack.c.b16 %v1109, %v1108
      %v1121 = vpack.c.b16 %v1111, %v1110
      %v1122 = vpack.c.b16 %v1113, %v1112
      %v1123 = vpack.c.b16 %v1115, %v1114
      %1132 = vmatpush.bf16.msra.mxu0 %v1123
      %1133 = vmatpush.bf16.msra.mxu0 %v1122
      %1134 = vmatpush.bf16.msra.mxu0 %v1121
      %1135 = vmatpush.bf16.msra.mxu0 %v1120
      %1136 = vmatpush.bf16.msra.mxu0 %v1119
      %1137 = vmatpush.bf16.msra.mxu0 %v1118
      %1138 = vmatpush.bf16.msra.mxu0 %v1117
      %1139 = vmatpush.bf16.msra.mxu0 %v1116
      %1140 = vmatmul.bf16.gmra.mxu0 %v1066
      %v1141 = vpop.f32.mrf.mxu0
      %v1142 = vadd.f32 0.0, %v1141
      %v1143 = vpop.f32.mrf.mxu0
      %v1144 = vadd.f32 0.0, %v1143
      %1145 = vdwg.mxu0
      %v1146 = vadd.f32 %v977, %v1142
      %v1147 = vadd.f32 %v978, %v1144
      %s1148 = scalar_lea.vmem %s8, 1
      %v1149 = vld [vmem:[%s1148] sm:$0x1]
      %v1151 = vperm.slane %v1149, 0
      %v1153 = vadd.f32 %v1146, %v1151
      %v1154 = vadd.f32 %v1147, %v1151
      %v1155 = vpack.c.bf16 %v1154, %v1153
      %v1156 = vld [vmem:[%s9] sm:$0xf]
      %v1157 = vld [vmem:[%s9 + $0x4] sm:$0xf]
      %v1158 = vld [vmem:[%s9 + $0x8] sm:$0xf]
      %v1159 = vld [vmem:[%s9 + $0xc] sm:$0xf]
      %v1160 = vld [vmem:[%s9 + $0x10] sm:$0xf]
      %v1161 = vld [vmem:[%s9 + $0x14] sm:$0xf]
      %v1162 = vld [vmem:[%s9 + $0x18] sm:$0xf]
      %v1163 = vld [vmem:[%s9 + $0x1c] sm:$0xf]
      %v1164 = vld [vmem:[%s9 + $0x20] sm:$0xf]
      %v1165 = vld [vmem:[%s9 + $0x24] sm:$0xf]
      %v1166 = vld [vmem:[%s9 + $0x28] sm:$0xf]
      %v1167 = vld [vmem:[%s9 + $0x2c] sm:$0xf]
      %v1168 = vld [vmem:[%s9 + $0x30] sm:$0xf]
      %v1169 = vld [vmem:[%s9 + $0x34] sm:$0xf]
      %v1170 = vld [vmem:[%s9 + $0x38] sm:$0xf]
      %v1171 = vld [vmem:[%s9 + $0x3c] sm:$0xf]
      %v1172 = vld [vmem:[%s10] sm:$0x1]
      %v1174 = vperm.slane %v1172, 0
      %v1192 = vunpack.c.l.b16 %v1156
      %v1193 = vunpack.c.l.b16 %v1157
      %v1194 = vunpack.c.l.b16 %v1158
      %v1195 = vunpack.c.l.b16 %v1159
      %v1196 = vunpack.c.l.b16 %v1160
      %v1197 = vunpack.c.l.b16 %v1161
      %v1198 = vunpack.c.l.b16 %v1162
      %v1199 = vunpack.c.l.b16 %v1163
      %v1200 = vunpack.c.l.b16 %v1164
      %v1201 = vunpack.c.l.b16 %v1165
      %v1202 = vunpack.c.l.b16 %v1166
      %v1203 = vunpack.c.l.b16 %v1167
      %v1204 = vunpack.c.l.b16 %v1168
      %v1205 = vunpack.c.l.b16 %v1169
      %v1206 = vunpack.c.l.b16 %v1170
      %v1207 = vunpack.c.l.b16 %v1171
      %v1208 = vpack.c.b16 %v1193, %v1192
      %v1209 = vpack.c.b16 %v1195, %v1194
      %v1210 = vpack.c.b16 %v1197, %v1196
      %v1211 = vpack.c.b16 %v1199, %v1198
      %v1212 = vpack.c.b16 %v1201, %v1200
      %v1213 = vpack.c.b16 %v1203, %v1202
      %v1214 = vpack.c.b16 %v1205, %v1204
      %v1215 = vpack.c.b16 %v1207, %v1206
      %1224 = vmatpush.bf16.msra.mxu0 %v1215
      %1225 = vmatpush.bf16.msra.mxu0 %v1214
      %1226 = vmatpush.bf16.msra.mxu0 %v1213
      %1227 = vmatpush.bf16.msra.mxu0 %v1212
      %1228 = vmatpush.bf16.msra.mxu0 %v1211
      %1229 = vmatpush.bf16.msra.mxu0 %v1210
      %1230 = vmatpush.bf16.msra.mxu0 %v1209
      %1231 = vmatpush.bf16.msra.mxu0 %v1208
      %1232 = vmatmul.bf16.gmra.mxu0 %v1155
      %v1233 = vpop.f32.mrf.mxu0
      %v1234 = vadd.f32 %v1174, %v1233
      %v1235 = vpop.f32.mrf.mxu0
      %v1236 = vadd.f32 %v1174, %v1235
      %1237 = vdwg.mxu0
      %v1238 = vld [vmem:[%s3] sm:$0xff]
      %v1239 = vld [vmem:[%s3 + $0x8] sm:$0xff]
      %v1240 = vld [vmem:[%s3 + $0x10] sm:$0xff]
      %v1241 = vld [vmem:[%s3 + $0x18] sm:$0xff]
      %v1242 = vld [vmem:[%s3 + $0x20] sm:$0xff]
      %v1243 = vld [vmem:[%s3 + $0x28] sm:$0xff]
      %v1244 = vld [vmem:[%s3 + $0x30] sm:$0xff]
      %v1245 = vld [vmem:[%s3 + $0x38] sm:$0xff]
      %v1246 = vld [vmem:[%s3 + $0x40] sm:$0xff]
      %v1247 = vld [vmem:[%s3 + $0x48] sm:$0xff]
      %v1248 = vld [vmem:[%s3 + $0x50] sm:$0xff]
      %v1249 = vld [vmem:[%s3 + $0x58] sm:$0xff]
      %v1250 = vld [vmem:[%s3 + $0x60] sm:$0xff]
      %v1251 = vld [vmem:[%s3 + $0x68] sm:$0xff]
      %v1252 = vld [vmem:[%s3 + $0x70] sm:$0xff]
      %v1253 = vld [vmem:[%s3 + $0x78] sm:$0xff]
      %1254 = vmatpush.msra.mxu0 %v1253
      %1255 = vmatpush.msra.mxu0 %v1252
      %1256 = vmatpush.msra.mxu0 %v1251
      %1257 = vmatpush.msra.mxu0 %v1250
      %1258 = vmatpush.msra.mxu0 %v1249
      %1259 = vmatpush.msra.mxu0 %v1248
      %1260 = vmatpush.msra.mxu0 %v1247
      %1261 = vmatpush.msra.mxu0 %v1246
      %1262 = vmatpush.msra.mxu0 %v1245
      %1263 = vmatpush.msra.mxu0 %v1244
      %1264 = vmatpush.msra.mxu0 %v1243
      %1265 = vmatpush.msra.mxu0 %v1242
      %1266 = vmatpush.msra.mxu0 %v1241
      %1267 = vmatpush.msra.mxu0 %v1240
      %1268 = vmatpush.msra.mxu0 %v1239
      %1269 = vmatpush.msra.mxu0 %v1238
      %1270 = vmatmul.f32.gmra.mxu0 %v1234
      %v1271 = vpop.f32.mrf.mxu0
      %v1272 = vadd.f32 0.0, %v1271
      %1273 = vmatmul.f32.gmra.mxu0 %v1236
      %v1274 = vpop.f32.mrf.mxu0
      %v1275 = vadd.f32 0.0, %v1274
      %1276 = vdwg.mxu0
      %v1277 = vadd.f32 %v802, %v1272
      %v1278 = vadd.f32 %v805, %v1275
      %v1279 = vpack.c.bf16 %v1278, %v1277
      %v1280 = vld [vmem:[%s11] sm:$0xf]
      %v1281 = vld [vmem:[%s11 + $0x4] sm:$0xf]
      %v1282 = vld [vmem:[%s11 + $0x8] sm:$0xf]
      %v1283 = vld [vmem:[%s11 + $0xc] sm:$0xf]
      %v1284 = vld [vmem:[%s11 + $0x10] sm:$0xf]
      %v1285 = vld [vmem:[%s11 + $0x14] sm:$0xf]
      %v1286 = vld [vmem:[%s11 + $0x18] sm:$0xf]
      %v1287 = vld [vmem:[%s11 + $0x1c] sm:$0xf]
      %v1288 = vld [vmem:[%s11 + $0x20] sm:$0xf]
      %v1289 = vld [vmem:[%s11 + $0x24] sm:$0xf]
      %v1290 = vld [vmem:[%s11 + $0x28] sm:$0xf]
      %v1291 = vld [vmem:[%s11 + $0x2c] sm:$0xf]
      %v1292 = vld [vmem:[%s11 + $0x30] sm:$0xf]
      %v1293 = vld [vmem:[%s11 + $0x34] sm:$0xf]
      %v1294 = vld [vmem:[%s11 + $0x38] sm:$0xf]
      %v1295 = vld [vmem:[%s11 + $0x3c] sm:$0xf]
      %v1296 = vld [vmem:[%s12] sm:$0x1]
      %v1298 = vperm.slane %v1296, 0
      %v1316 = vunpack.c.l.b16 %v1280
      %v1317 = vunpack.c.l.b16 %v1281
      %v1318 = vunpack.c.l.b16 %v1282
      %v1319 = vunpack.c.l.b16 %v1283
      %v1320 = vunpack.c.l.b16 %v1284
      %v1321 = vunpack.c.l.b16 %v1285
      %v1322 = vunpack.c.l.b16 %v1286
      %v1323 = vunpack.c.l.b16 %v1287
      %v1324 = vunpack.c.l.b16 %v1288
      %v1325 = vunpack.c.l.b16 %v1289
      %v1326 = vunpack.c.l.b16 %v1290
      %v1327 = vunpack.c.l.b16 %v1291
      %v1328 = vunpack.c.l.b16 %v1292
      %v1329 = vunpack.c.l.b16 %v1293
      %v1330 = vunpack.c.l.b16 %v1294
      %v1331 = vunpack.c.l.b16 %v1295
      %v1332 = vpack.c.b16 %v1317, %v1316
      %v1333 = vpack.c.b16 %v1319, %v1318
      %v1334 = vpack.c.b16 %v1321, %v1320
      %v1335 = vpack.c.b16 %v1323, %v1322
      %v1336 = vpack.c.b16 %v1325, %v1324
      %v1337 = vpack.c.b16 %v1327, %v1326
      %v1338 = vpack.c.b16 %v1329, %v1328
      %v1339 = vpack.c.b16 %v1331, %v1330
      %1348 = vmatpush.bf16.msra.mxu0 %v1339
      %1349 = vmatpush.bf16.msra.mxu0 %v1338
      %1350 = vmatpush.bf16.msra.mxu0 %v1337
      %1351 = vmatpush.bf16.msra.mxu0 %v1336
      %1352 = vmatpush.bf16.msra.mxu0 %v1335
      %1353 = vmatpush.bf16.msra.mxu0 %v1334
      %1354 = vmatpush.bf16.msra.mxu0 %v1333
      %1355 = vmatpush.bf16.msra.mxu0 %v1332
      %1356 = vmatmul.bf16.gmra.mxu0 %v1279
      %v1357 = vpop.f32.mrf.mxu0
      %v1358 = vadd.f32 %v1298, %v1357
      %v1359 = vpop.f32.mrf.mxu0
      %v1360 = vadd.f32 %v1298, %v1359
      %1361 = vdwg.mxu0
      %v1362 = vmax.f32 %v1358, 0.0
      %v1363 = vmax.f32 %v1360, 0.0
      %v1364 = vpack.c.bf16 %v1363, %v1362
      %v1365 = vld [vmem:[%s13] sm:$0xf]
      %v1366 = vld [vmem:[%s13 + $0x4] sm:$0xf]
      %v1367 = vld [vmem:[%s13 + $0x8] sm:$0xf]
      %v1368 = vld [vmem:[%s13 + $0xc] sm:$0xf]
      %v1369 = vld [vmem:[%s13 + $0x10] sm:$0xf]
      %v1370 = vld [vmem:[%s13 + $0x14] sm:$0xf]
      %v1371 = vld [vmem:[%s13 + $0x18] sm:$0xf]
      %v1372 = vld [vmem:[%s13 + $0x1c] sm:$0xf]
      %v1373 = vld [vmem:[%s13 + $0x20] sm:$0xf]
      %v1374 = vld [vmem:[%s13 + $0x24] sm:$0xf]
      %v1375 = vld [vmem:[%s13 + $0x28] sm:$0xf]
      %v1376 = vld [vmem:[%s13 + $0x2c] sm:$0xf]
      %v1377 = vld [vmem:[%s13 + $0x30] sm:$0xf]
      %v1378 = vld [vmem:[%s13 + $0x34] sm:$0xf]
      %v1379 = vld [vmem:[%s13 + $0x38] sm:$0xf]
      %v1380 = vld [vmem:[%s13 + $0x3c] sm:$0xf]
      %v1397 = vunpack.c.l.b16 %v1365
      %v1398 = vunpack.c.l.b16 %v1366
      %v1399 = vunpack.c.l.b16 %v1367
      %v1400 = vunpack.c.l.b16 %v1368
      %v1401 = vunpack.c.l.b16 %v1369
      %v1402 = vunpack.c.l.b16 %v1370
      %v1403 = vunpack.c.l.b16 %v1371
      %v1404 = vunpack.c.l.b16 %v1372
      %v1405 = vunpack.c.l.b16 %v1373
      %v1406 = vunpack.c.l.b16 %v1374
      %v1407 = vunpack.c.l.b16 %v1375
      %v1408 = vunpack.c.l.b16 %v1376
      %v1409 = vunpack.c.l.b16 %v1377
      %v1410 = vunpack.c.l.b16 %v1378
      %v1411 = vunpack.c.l.b16 %v1379
      %v1412 = vunpack.c.l.b16 %v1380
      %v1413 = vpack.c.b16 %v1398, %v1397
      %v1414 = vpack.c.b16 %v1400, %v1399
      %v1415 = vpack.c.b16 %v1402, %v1401
      %v1416 = vpack.c.b16 %v1404, %v1403
      %v1417 = vpack.c.b16 %v1406, %v1405
      %v1418 = vpack.c.b16 %v1408, %v1407
      %v1419 = vpack.c.b16 %v1410, %v1409
      %v1420 = vpack.c.b16 %v1412, %v1411
      %1429 = vmatpush.bf16.msra.mxu0 %v1420
      %1430 = vmatpush.bf16.msra.mxu0 %v1419
      %1431 = vmatpush.bf16.msra.mxu0 %v1418
      %1432 = vmatpush.bf16.msra.mxu0 %v1417
      %1433 = vmatpush.bf16.msra.mxu0 %v1416
      %1434 = vmatpush.bf16.msra.mxu0 %v1415
      %1435 = vmatpush.bf16.msra.mxu0 %v1414
      %1436 = vmatpush.bf16.msra.mxu0 %v1413
      %1437 = vmatmul.bf16.gmra.mxu0 %v1364
      %v1438 = vpop.f32.mrf.mxu0
      %v1439 = vadd.f32 0.0, %v1438
      %v1440 = vpop.f32.mrf.mxu0
      %v1441 = vadd.f32 0.0, %v1440
      %1442 = vdwg.mxu0
      %v1443 = vadd.f32 %v1277, %v1439
      %v1444 = vadd.f32 %v1278, %v1441
      %v1445 = vld [vmem:[%s14] sm:$0x1]
      %v1447 = vperm.slane %v1445, 0
      %v1449 = vadd.f32 %v1443, %v1447
      %v1450 = vadd.f32 %v1444, %v1447
      %v1451 = vpack.c.bf16 %v1450, %v1449
      %s1452 = scalar_lea.vmem %s11, 64
      %v1453 = vld [vmem:[%s1452] sm:$0xf]
      %v1454 = vld [vmem:[%s1452 + $0x4] sm:$0xf]
      %v1455 = vld [vmem:[%s1452 + $0x8] sm:$0xf]
      %v1456 = vld [vmem:[%s1452 + $0xc] sm:$0xf]
      %v1457 = vld [vmem:[%s1452 + $0x10] sm:$0xf]
      %v1458 = vld [vmem:[%s1452 + $0x14] sm:$0xf]
      %v1459 = vld [vmem:[%s1452 + $0x18] sm:$0xf]
      %v1460 = vld [vmem:[%s1452 + $0x1c] sm:$0xf]
      %v1461 = vld [vmem:[%s1452 + $0x20] sm:$0xf]
      %v1462 = vld [vmem:[%s1452 + $0x24] sm:$0xf]
      %v1463 = vld [vmem:[%s1452 + $0x28] sm:$0xf]
      %v1464 = vld [vmem:[%s1452 + $0x2c] sm:$0xf]
      %v1465 = vld [vmem:[%s1452 + $0x30] sm:$0xf]
      %v1466 = vld [vmem:[%s1452 + $0x34] sm:$0xf]
      %v1467 = vld [vmem:[%s1452 + $0x38] sm:$0xf]
      %v1468 = vld [vmem:[%s1452 + $0x3c] sm:$0xf]
      %s1469 = scalar_lea.vmem %s12, 1
      %v1470 = vld [vmem:[%s1469] sm:$0x1]
      %v1472 = vperm.slane %v1470, 0
      %v1490 = vunpack.c.l.b16 %v1453
      %v1491 = vunpack.c.l.b16 %v1454
      %v1492 = vunpack.c.l.b16 %v1455
      %v1493 = vunpack.c.l.b16 %v1456
      %v1494 = vunpack.c.l.b16 %v1457
      %v1495 = vunpack.c.l.b16 %v1458
      %v1496 = vunpack.c.l.b16 %v1459
      %v1497 = vunpack.c.l.b16 %v1460
      %v1498 = vunpack.c.l.b16 %v1461
      %v1499 = vunpack.c.l.b16 %v1462
      %v1500 = vunpack.c.l.b16 %v1463
      %v1501 = vunpack.c.l.b16 %v1464
      %v1502 = vunpack.c.l.b16 %v1465
      %v1503 = vunpack.c.l.b16 %v1466
      %v1504 = vunpack.c.l.b16 %v1467
      %v1505 = vunpack.c.l.b16 %v1468
      %v1506 = vpack.c.b16 %v1491, %v1490
      %v1507 = vpack.c.b16 %v1493, %v1492
      %v1508 = vpack.c.b16 %v1495, %v1494
      %v1509 = vpack.c.b16 %v1497, %v1496
      %v1510 = vpack.c.b16 %v1499, %v1498
      %v1511 = vpack.c.b16 %v1501, %v1500
      %v1512 = vpack.c.b16 %v1503, %v1502
      %v1513 = vpack.c.b16 %v1505, %v1504
      %1522 = vmatpush.bf16.msra.mxu0 %v1513
      %1523 = vmatpush.bf16.msra.mxu0 %v1512
      %1524 = vmatpush.bf16.msra.mxu0 %v1511
      %1525 = vmatpush.bf16.msra.mxu0 %v1510
      %1526 = vmatpush.bf16.msra.mxu0 %v1509
      %1527 = vmatpush.bf16.msra.mxu0 %v1508
      %1528 = vmatpush.bf16.msra.mxu0 %v1507
      %1529 = vmatpush.bf16.msra.mxu0 %v1506
      %1530 = vmatmul.bf16.gmra.mxu0 %v1451
      %v1531 = vpop.f32.mrf.mxu0
      %v1532 = vadd.f32 %v1472, %v1531
      %v1533 = vpop.f32.mrf.mxu0
      %v1534 = vadd.f32 %v1472, %v1533
      %1535 = vdwg.mxu0
      %v1536 = vmax.f32 %v1532, 0.0
      %v1537 = vmax.f32 %v1534, 0.0
      %v1538 = vpack.c.bf16 %v1537, %v1536
      %s1539 = scalar_lea.vmem %s13, 64
      %v1540 = vld [vmem:[%s1539] sm:$0xf]
      %v1541 = vld [vmem:[%s1539 + $0x4] sm:$0xf]
      %v1542 = vld [vmem:[%s1539 + $0x8] sm:$0xf]
      %v1543 = vld [vmem:[%s1539 + $0xc] sm:$0xf]
      %v1544 = vld [vmem:[%s1539 + $0x10] sm:$0xf]
      %v1545 = vld [vmem:[%s1539 + $0x14] sm:$0xf]
      %v1546 = vld [vmem:[%s1539 + $0x18] sm:$0xf]
      %v1547 = vld [vmem:[%s1539 + $0x1c] sm:$0xf]
      %v1548 = vld [vmem:[%s1539 + $0x20] sm:$0xf]
      %v1549 = vld [vmem:[%s1539 + $0x24] sm:$0xf]
      %v1550 = vld [vmem:[%s1539 + $0x28] sm:$0xf]
      %v1551 = vld [vmem:[%s1539 + $0x2c] sm:$0xf]
      %v1552 = vld [vmem:[%s1539 + $0x30] sm:$0xf]
      %v1553 = vld [vmem:[%s1539 + $0x34] sm:$0xf]
      %v1554 = vld [vmem:[%s1539 + $0x38] sm:$0xf]
      %v1555 = vld [vmem:[%s1539 + $0x3c] sm:$0xf]
      %v1572 = vunpack.c.l.b16 %v1540
      %v1573 = vunpack.c.l.b16 %v1541
      %v1574 = vunpack.c.l.b16 %v1542
      %v1575 = vunpack.c.l.b16 %v1543
      %v1576 = vunpack.c.l.b16 %v1544
      %v1577 = vunpack.c.l.b16 %v1545
      %v1578 = vunpack.c.l.b16 %v1546
      %v1579 = vunpack.c.l.b16 %v1547
      %v1580 = vunpack.c.l.b16 %v1548
      %v1581 = vunpack.c.l.b16 %v1549
      %v1582 = vunpack.c.l.b16 %v1550
      %v1583 = vunpack.c.l.b16 %v1551
      %v1584 = vunpack.c.l.b16 %v1552
      %v1585 = vunpack.c.l.b16 %v1553
      %v1586 = vunpack.c.l.b16 %v1554
      %v1587 = vunpack.c.l.b16 %v1555
      %v1588 = vpack.c.b16 %v1573, %v1572
      %v1589 = vpack.c.b16 %v1575, %v1574
      %v1590 = vpack.c.b16 %v1577, %v1576
      %v1591 = vpack.c.b16 %v1579, %v1578
      %v1592 = vpack.c.b16 %v1581, %v1580
      %v1593 = vpack.c.b16 %v1583, %v1582
      %v1594 = vpack.c.b16 %v1585, %v1584
      %v1595 = vpack.c.b16 %v1587, %v1586
      %1604 = vmatpush.bf16.msra.mxu0 %v1595
      %1605 = vmatpush.bf16.msra.mxu0 %v1594
      %1606 = vmatpush.bf16.msra.mxu0 %v1593
      %1607 = vmatpush.bf16.msra.mxu0 %v1592
      %1608 = vmatpush.bf16.msra.mxu0 %v1591
      %1609 = vmatpush.bf16.msra.mxu0 %v1590
      %1610 = vmatpush.bf16.msra.mxu0 %v1589
      %1611 = vmatpush.bf16.msra.mxu0 %v1588
      %1612 = vmatmul.bf16.gmra.mxu0 %v1538
      %v1613 = vpop.f32.mrf.mxu0
      %v1614 = vadd.f32 0.0, %v1613
      %v1615 = vpop.f32.mrf.mxu0
      %v1616 = vadd.f32 0.0, %v1615
      %1617 = vdwg.mxu0
      %v1618 = vadd.f32 %v1449, %v1614
      %v1619 = vadd.f32 %v1450, %v1616
      %s1620 = scalar_lea.vmem %s14, 1
      %v1621 = vld [vmem:[%s1620] sm:$0x1]
      %v1623 = vperm.slane %v1621, 0
      %v1625 = vadd.f32 %v1618, %v1623
      %v1626 = vadd.f32 %v1619, %v1623
      %v1627 = vpack.c.bf16 %v1626, %v1625
      %v1628 = vld [vmem:[%s15] sm:$0xf]
      %v1629 = vld [vmem:[%s15 + $0x4] sm:$0xf]
      %v1630 = vld [vmem:[%s15 + $0x8] sm:$0xf]
      %v1631 = vld [vmem:[%s15 + $0xc] sm:$0xf]
      %v1632 = vld [vmem:[%s15 + $0x10] sm:$0xf]
      %v1633 = vld [vmem:[%s15 + $0x14] sm:$0xf]
      %v1634 = vld [vmem:[%s15 + $0x18] sm:$0xf]
      %v1635 = vld [vmem:[%s15 + $0x1c] sm:$0xf]
      %v1636 = vld [vmem:[%s15 + $0x20] sm:$0xf]
      %v1637 = vld [vmem:[%s15 + $0x24] sm:$0xf]
      %v1638 = vld [vmem:[%s15 + $0x28] sm:$0xf]
      %v1639 = vld [vmem:[%s15 + $0x2c] sm:$0xf]
      %v1640 = vld [vmem:[%s15 + $0x30] sm:$0xf]
      %v1641 = vld [vmem:[%s15 + $0x34] sm:$0xf]
      %v1642 = vld [vmem:[%s15 + $0x38] sm:$0xf]
      %v1643 = vld [vmem:[%s15 + $0x3c] sm:$0xf]
      %v1644 = vld [vmem:[%s16] sm:$0x1]
      %v1646 = vperm.slane %v1644, 0
      %v1664 = vunpack.c.l.b16 %v1628
      %v1665 = vunpack.c.l.b16 %v1629
      %v1666 = vunpack.c.l.b16 %v1630
      %v1667 = vunpack.c.l.b16 %v1631
      %v1668 = vunpack.c.l.b16 %v1632
      %v1669 = vunpack.c.l.b16 %v1633
      %v1670 = vunpack.c.l.b16 %v1634
      %v1671 = vunpack.c.l.b16 %v1635
      %v1672 = vunpack.c.l.b16 %v1636
      %v1673 = vunpack.c.l.b16 %v1637
      %v1674 = vunpack.c.l.b16 %v1638
      %v1675 = vunpack.c.l.b16 %v1639
      %v1676 = vunpack.c.l.b16 %v1640
      %v1677 = vunpack.c.l.b16 %v1641
      %v1678 = vunpack.c.l.b16 %v1642
      %v1679 = vunpack.c.l.b16 %v1643
      %v1680 = vpack.c.b16 %v1665, %v1664
      %v1681 = vpack.c.b16 %v1667, %v1666
      %v1682 = vpack.c.b16 %v1669, %v1668
      %v1683 = vpack.c.b16 %v1671, %v1670
      %v1684 = vpack.c.b16 %v1673, %v1672
      %v1685 = vpack.c.b16 %v1675, %v1674
      %v1686 = vpack.c.b16 %v1677, %v1676
      %v1687 = vpack.c.b16 %v1679, %v1678
      %1696 = vmatpush.bf16.msra.mxu0 %v1687
      %1697 = vmatpush.bf16.msra.mxu0 %v1686
      %1698 = vmatpush.bf16.msra.mxu0 %v1685
      %1699 = vmatpush.bf16.msra.mxu0 %v1684
      %1700 = vmatpush.bf16.msra.mxu0 %v1683
      %1701 = vmatpush.bf16.msra.mxu0 %v1682
      %1702 = vmatpush.bf16.msra.mxu0 %v1681
      %1703 = vmatpush.bf16.msra.mxu0 %v1680
      %1704 = vmatmul.bf16.gmra.mxu0 %v1627
      %v1705 = vpop.f32.mrf.mxu0
      %v1706 = vadd.f32 %v1646, %v1705
      %v1707 = vpop.f32.mrf.mxu0
      %v1708 = vadd.f32 %v1646, %v1707
      %1709 = vdwg.mxu0
      %v1710 = vld [vmem:[%s4] sm:$0xff]
      %v1711 = vld [vmem:[%s4 + $0x8] sm:$0xff]
      %v1712 = vld [vmem:[%s4 + $0x10] sm:$0xff]
      %v1713 = vld [vmem:[%s4 + $0x18] sm:$0xff]
      %v1714 = vld [vmem:[%s4 + $0x20] sm:$0xff]
      %v1715 = vld [vmem:[%s4 + $0x28] sm:$0xff]
      %v1716 = vld [vmem:[%s4 + $0x30] sm:$0xff]
      %v1717 = vld [vmem:[%s4 + $0x38] sm:$0xff]
      %v1718 = vld [vmem:[%s4 + $0x40] sm:$0xff]
      %v1719 = vld [vmem:[%s4 + $0x48] sm:$0xff]
      %v1720 = vld [vmem:[%s4 + $0x50] sm:$0xff]
      %v1721 = vld [vmem:[%s4 + $0x58] sm:$0xff]
      %v1722 = vld [vmem:[%s4 + $0x60] sm:$0xff]
      %v1723 = vld [vmem:[%s4 + $0x68] sm:$0xff]
      %v1724 = vld [vmem:[%s4 + $0x70] sm:$0xff]
      %v1725 = vld [vmem:[%s4 + $0x78] sm:$0xff]
      %1726 = vmatpush.msra.mxu0 %v1725
      %1727 = vmatpush.msra.mxu0 %v1724
      %1728 = vmatpush.msra.mxu0 %v1723
      %1729 = vmatpush.msra.mxu0 %v1722
      %1730 = vmatpush.msra.mxu0 %v1721
      %1731 = vmatpush.msra.mxu0 %v1720
      %1732 = vmatpush.msra.mxu0 %v1719
      %1733 = vmatpush.msra.mxu0 %v1718
      %1734 = vmatpush.msra.mxu0 %v1717
      %1735 = vmatpush.msra.mxu0 %v1716
      %1736 = vmatpush.msra.mxu0 %v1715
      %1737 = vmatpush.msra.mxu0 %v1714
      %1738 = vmatpush.msra.mxu0 %v1713
      %1739 = vmatpush.msra.mxu0 %v1712
      %1740 = vmatpush.msra.mxu0 %v1711
      %1741 = vmatpush.msra.mxu0 %v1710
      %1742 = vmatmul.f32.gmra.mxu0 %v1706
      %v1743 = vpop.f32.mrf.mxu0
      %v1744 = vadd.f32 0.0, %v1743
      %1745 = vmatmul.f32.gmra.mxu0 %v1708
      %v1746 = vpop.f32.mrf.mxu0
      %v1747 = vadd.f32 0.0, %v1746
      %1748 = vdwg.mxu0
      %v1749 = vadd.f32 %v1234, %v1744
      %v1750 = vadd.f32 %v1236, %v1747
      %v1751 = vpack.c.bf16 %v1750, %v1749
      %v1752 = vld [vmem:[%s17] sm:$0xf]
      %v1753 = vld [vmem:[%s17 + $0x4] sm:$0xf]
      %v1754 = vld [vmem:[%s17 + $0x8] sm:$0xf]
      %v1755 = vld [vmem:[%s17 + $0xc] sm:$0xf]
      %v1756 = vld [vmem:[%s17 + $0x10] sm:$0xf]
      %v1757 = vld [vmem:[%s17 + $0x14] sm:$0xf]
      %v1758 = vld [vmem:[%s17 + $0x18] sm:$0xf]
      %v1759 = vld [vmem:[%s17 + $0x1c] sm:$0xf]
      %v1760 = vld [vmem:[%s17 + $0x20] sm:$0xf]
      %v1761 = vld [vmem:[%s17 + $0x24] sm:$0xf]
      %v1762 = vld [vmem:[%s17 + $0x28] sm:$0xf]
      %v1763 = vld [vmem:[%s17 + $0x2c] sm:$0xf]
      %v1764 = vld [vmem:[%s17 + $0x30] sm:$0xf]
      %v1765 = vld [vmem:[%s17 + $0x34] sm:$0xf]
      %v1766 = vld [vmem:[%s17 + $0x38] sm:$0xf]
      %v1767 = vld [vmem:[%s17 + $0x3c] sm:$0xf]
      %v1768 = vld [vmem:[%s18] sm:$0x1]
      %v1770 = vperm.slane %v1768, 0
      %v1788 = vunpack.c.l.b16 %v1752
      %v1789 = vunpack.c.l.b16 %v1753
      %v1790 = vunpack.c.l.b16 %v1754
      %v1791 = vunpack.c.l.b16 %v1755
      %v1792 = vunpack.c.l.b16 %v1756
      %v1793 = vunpack.c.l.b16 %v1757
      %v1794 = vunpack.c.l.b16 %v1758
      %v1795 = vunpack.c.l.b16 %v1759
      %v1796 = vunpack.c.l.b16 %v1760
      %v1797 = vunpack.c.l.b16 %v1761
      %v1798 = vunpack.c.l.b16 %v1762
      %v1799 = vunpack.c.l.b16 %v1763
      %v1800 = vunpack.c.l.b16 %v1764
      %v1801 = vunpack.c.l.b16 %v1765
      %v1802 = vunpack.c.l.b16 %v1766
      %v1803 = vunpack.c.l.b16 %v1767
      %v1804 = vpack.c.b16 %v1789, %v1788
      %v1805 = vpack.c.b16 %v1791, %v1790
      %v1806 = vpack.c.b16 %v1793, %v1792
      %v1807 = vpack.c.b16 %v1795, %v1794
      %v1808 = vpack.c.b16 %v1797, %v1796
      %v1809 = vpack.c.b16 %v1799, %v1798
      %v1810 = vpack.c.b16 %v1801, %v1800
      %v1811 = vpack.c.b16 %v1803, %v1802
      %1820 = vmatpush.bf16.msra.mxu0 %v1811
      %1821 = vmatpush.bf16.msra.mxu0 %v1810
      %1822 = vmatpush.bf16.msra.mxu0 %v1809
      %1823 = vmatpush.bf16.msra.mxu0 %v1808
      %1824 = vmatpush.bf16.msra.mxu0 %v1807
      %1825 = vmatpush.bf16.msra.mxu0 %v1806
      %1826 = vmatpush.bf16.msra.mxu0 %v1805
      %1827 = vmatpush.bf16.msra.mxu0 %v1804
      %1828 = vmatmul.bf16.gmra.mxu0 %v1751
      %v1829 = vpop.f32.mrf.mxu0
      %v1830 = vadd.f32 %v1770, %v1829
      %v1831 = vpop.f32.mrf.mxu0
      %v1832 = vadd.f32 %v1770, %v1831
      %1833 = vdwg.mxu0
      %v1834 = vmax.f32 %v1830, 0.0
      %v1835 = vmax.f32 %v1832, 0.0
      %v1836 = vpack.c.bf16 %v1835, %v1834
      %v1837 = vld [vmem:[%s19] sm:$0xf]
      %v1838 = vld [vmem:[%s19 + $0x4] sm:$0xf]
      %v1839 = vld [vmem:[%s19 + $0x8] sm:$0xf]
      %v1840 = vld [vmem:[%s19 + $0xc] sm:$0xf]
      %v1841 = vld [vmem:[%s19 + $0x10] sm:$0xf]
      %v1842 = vld [vmem:[%s19 + $0x14] sm:$0xf]
      %v1843 = vld [vmem:[%s19 + $0x18] sm:$0xf]
      %v1844 = vld [vmem:[%s19 + $0x1c] sm:$0xf]
      %v1845 = vld [vmem:[%s19 + $0x20] sm:$0xf]
      %v1846 = vld [vmem:[%s19 + $0x24] sm:$0xf]
      %v1847 = vld [vmem:[%s19 + $0x28] sm:$0xf]
      %v1848 = vld [vmem:[%s19 + $0x2c] sm:$0xf]
      %v1849 = vld [vmem:[%s19 + $0x30] sm:$0xf]
      %v1850 = vld [vmem:[%s19 + $0x34] sm:$0xf]
      %v1851 = vld [vmem:[%s19 + $0x38] sm:$0xf]
      %v1852 = vld [vmem:[%s19 + $0x3c] sm:$0xf]
      %v1869 = vunpack.c.l.b16 %v1837
      %v1870 = vunpack.c.l.b16 %v1838
      %v1871 = vunpack.c.l.b16 %v1839
      %v1872 = vunpack.c.l.b16 %v1840
      %v1873 = vunpack.c.l.b16 %v1841
      %v1874 = vunpack.c.l.b16 %v1842
      %v1875 = vunpack.c.l.b16 %v1843
      %v1876 = vunpack.c.l.b16 %v1844
      %v1877 = vunpack.c.l.b16 %v1845
      %v1878 = vunpack.c.l.b16 %v1846
      %v1879 = vunpack.c.l.b16 %v1847
      %v1880 = vunpack.c.l.b16 %v1848
      %v1881 = vunpack.c.l.b16 %v1849
      %v1882 = vunpack.c.l.b16 %v1850
      %v1883 = vunpack.c.l.b16 %v1851
      %v1884 = vunpack.c.l.b16 %v1852
      %v1885 = vpack.c.b16 %v1870, %v1869
      %v1886 = vpack.c.b16 %v1872, %v1871
      %v1887 = vpack.c.b16 %v1874, %v1873
      %v1888 = vpack.c.b16 %v1876, %v1875
      %v1889 = vpack.c.b16 %v1878, %v1877
      %v1890 = vpack.c.b16 %v1880, %v1879
      %v1891 = vpack.c.b16 %v1882, %v1881
      %v1892 = vpack.c.b16 %v1884, %v1883
      %1901 = vmatpush.bf16.msra.mxu0 %v1892
      %1902 = vmatpush.bf16.msra.mxu0 %v1891
      %1903 = vmatpush.bf16.msra.mxu0 %v1890
      %1904 = vmatpush.bf16.msra.mxu0 %v1889
      %1905 = vmatpush.bf16.msra.mxu0 %v1888
      %1906 = vmatpush.bf16.msra.mxu0 %v1887
      %1907 = vmatpush.bf16.msra.mxu0 %v1886
      %1908 = vmatpush.bf16.msra.mxu0 %v1885
      %1909 = vmatmul.bf16.gmra.mxu0 %v1836
      %v1910 = vpop.f32.mrf.mxu0
      %v1911 = vadd.f32 0.0, %v1910
      %v1912 = vpop.f32.mrf.mxu0
      %v1913 = vadd.f32 0.0, %v1912
      %1914 = vdwg.mxu0
      %v1915 = vadd.f32 %v1749, %v1911
      %v1916 = vadd.f32 %v1750, %v1913
      %v1917 = vld [vmem:[%s20] sm:$0x1]
      %v1919 = vperm.slane %v1917, 0
      %v1921 = vadd.f32 %v1915, %v1919
      %v1922 = vadd.f32 %v1916, %v1919
      %v1923 = vpack.c.bf16 %v1922, %v1921
      %s1924 = scalar_lea.vmem %s17, 64
      %v1925 = vld [vmem:[%s1924] sm:$0xf]
      %v1926 = vld [vmem:[%s1924 + $0x4] sm:$0xf]
      %v1927 = vld [vmem:[%s1924 + $0x8] sm:$0xf]
      %v1928 = vld [vmem:[%s1924 + $0xc] sm:$0xf]
      %v1929 = vld [vmem:[%s1924 + $0x10] sm:$0xf]
      %v1930 = vld [vmem:[%s1924 + $0x14] sm:$0xf]
      %v1931 = vld [vmem:[%s1924 + $0x18] sm:$0xf]
      %v1932 = vld [vmem:[%s1924 + $0x1c] sm:$0xf]
      %v1933 = vld [vmem:[%s1924 + $0x20] sm:$0xf]
      %v1934 = vld [vmem:[%s1924 + $0x24] sm:$0xf]
      %v1935 = vld [vmem:[%s1924 + $0x28] sm:$0xf]
      %v1936 = vld [vmem:[%s1924 + $0x2c] sm:$0xf]
      %v1937 = vld [vmem:[%s1924 + $0x30] sm:$0xf]
      %v1938 = vld [vmem:[%s1924 + $0x34] sm:$0xf]
      %v1939 = vld [vmem:[%s1924 + $0x38] sm:$0xf]
      %v1940 = vld [vmem:[%s1924 + $0x3c] sm:$0xf]
      %s1941 = scalar_lea.vmem %s18, 1
      %v1942 = vld [vmem:[%s1941] sm:$0x1]
      %v1944 = vperm.slane %v1942, 0
      %v1962 = vunpack.c.l.b16 %v1925
      %v1963 = vunpack.c.l.b16 %v1926
      %v1964 = vunpack.c.l.b16 %v1927
      %v1965 = vunpack.c.l.b16 %v1928
      %v1966 = vunpack.c.l.b16 %v1929
      %v1967 = vunpack.c.l.b16 %v1930
      %v1968 = vunpack.c.l.b16 %v1931
      %v1969 = vunpack.c.l.b16 %v1932
      %v1970 = vunpack.c.l.b16 %v1933
      %v1971 = vunpack.c.l.b16 %v1934
      %v1972 = vunpack.c.l.b16 %v1935
      %v1973 = vunpack.c.l.b16 %v1936
      %v1974 = vunpack.c.l.b16 %v1937
      %v1975 = vunpack.c.l.b16 %v1938
      %v1976 = vunpack.c.l.b16 %v1939
      %v1977 = vunpack.c.l.b16 %v1940
      %v1978 = vpack.c.b16 %v1963, %v1962
      %v1979 = vpack.c.b16 %v1965, %v1964
      %v1980 = vpack.c.b16 %v1967, %v1966
      %v1981 = vpack.c.b16 %v1969, %v1968
      %v1982 = vpack.c.b16 %v1971, %v1970
      %v1983 = vpack.c.b16 %v1973, %v1972
      %v1984 = vpack.c.b16 %v1975, %v1974
      %v1985 = vpack.c.b16 %v1977, %v1976
      %1994 = vmatpush.bf16.msra.mxu0 %v1985
      %1995 = vmatpush.bf16.msra.mxu0 %v1984
      %1996 = vmatpush.bf16.msra.mxu0 %v1983
      %1997 = vmatpush.bf16.msra.mxu0 %v1982
      %1998 = vmatpush.bf16.msra.mxu0 %v1981
      %1999 = vmatpush.bf16.msra.mxu0 %v1980
      %2000 = vmatpush.bf16.msra.mxu0 %v1979
      %2001 = vmatpush.bf16.msra.mxu0 %v1978
      %2002 = vmatmul.bf16.gmra.mxu0 %v1923
      %v2003 = vpop.f32.mrf.mxu0
      %v2004 = vadd.f32 %v1944, %v2003
      %v2005 = vpop.f32.mrf.mxu0
      %v2006 = vadd.f32 %v1944, %v2005
      %2007 = vdwg.mxu0
      %v2008 = vmax.f32 %v2004, 0.0
      %v2009 = vmax.f32 %v2006, 0.0
      %v2010 = vpack.c.bf16 %v2009, %v2008
      %s2011 = scalar_lea.vmem %s19, 64
      %v2012 = vld [vmem:[%s2011] sm:$0xf]
      %v2013 = vld [vmem:[%s2011 + $0x4] sm:$0xf]
      %v2014 = vld [vmem:[%s2011 + $0x8] sm:$0xf]
      %v2015 = vld [vmem:[%s2011 + $0xc] sm:$0xf]
      %v2016 = vld [vmem:[%s2011 + $0x10] sm:$0xf]
      %v2017 = vld [vmem:[%s2011 + $0x14] sm:$0xf]
      %v2018 = vld [vmem:[%s2011 + $0x18] sm:$0xf]
      %v2019 = vld [vmem:[%s2011 + $0x1c] sm:$0xf]
      %v2020 = vld [vmem:[%s2011 + $0x20] sm:$0xf]
      %v2021 = vld [vmem:[%s2011 + $0x24] sm:$0xf]
      %v2022 = vld [vmem:[%s2011 + $0x28] sm:$0xf]
      %v2023 = vld [vmem:[%s2011 + $0x2c] sm:$0xf]
      %v2024 = vld [vmem:[%s2011 + $0x30] sm:$0xf]
      %v2025 = vld [vmem:[%s2011 + $0x34] sm:$0xf]
      %v2026 = vld [vmem:[%s2011 + $0x38] sm:$0xf]
      %v2027 = vld [vmem:[%s2011 + $0x3c] sm:$0xf]
      %v2044 = vunpack.c.l.b16 %v2012
      %v2045 = vunpack.c.l.b16 %v2013
      %v2046 = vunpack.c.l.b16 %v2014
      %v2047 = vunpack.c.l.b16 %v2015
      %v2048 = vunpack.c.l.b16 %v2016
      %v2049 = vunpack.c.l.b16 %v2017
      %v2050 = vunpack.c.l.b16 %v2018
      %v2051 = vunpack.c.l.b16 %v2019
      %v2052 = vunpack.c.l.b16 %v2020
      %v2053 = vunpack.c.l.b16 %v2021
      %v2054 = vunpack.c.l.b16 %v2022
      %v2055 = vunpack.c.l.b16 %v2023
      %v2056 = vunpack.c.l.b16 %v2024
      %v2057 = vunpack.c.l.b16 %v2025
      %v2058 = vunpack.c.l.b16 %v2026
      %v2059 = vunpack.c.l.b16 %v2027
      %v2060 = vpack.c.b16 %v2045, %v2044
      %v2061 = vpack.c.b16 %v2047, %v2046
      %v2062 = vpack.c.b16 %v2049, %v2048
      %v2063 = vpack.c.b16 %v2051, %v2050
      %v2064 = vpack.c.b16 %v2053, %v2052
      %v2065 = vpack.c.b16 %v2055, %v2054
      %v2066 = vpack.c.b16 %v2057, %v2056
      %v2067 = vpack.c.b16 %v2059, %v2058
      %2076 = vmatpush.bf16.msra.mxu0 %v2067
      %2077 = vmatpush.bf16.msra.mxu0 %v2066
      %2078 = vmatpush.bf16.msra.mxu0 %v2065
      %2079 = vmatpush.bf16.msra.mxu0 %v2064
      %2080 = vmatpush.bf16.msra.mxu0 %v2063
      %2081 = vmatpush.bf16.msra.mxu0 %v2062
      %2082 = vmatpush.bf16.msra.mxu0 %v2061
      %2083 = vmatpush.bf16.msra.mxu0 %v2060
      %2084 = vmatmul.bf16.gmra.mxu0 %v2010
      %v2085 = vpop.f32.mrf.mxu0
      %v2086 = vadd.f32 0.0, %v2085
      %v2087 = vpop.f32.mrf.mxu0
      %v2088 = vadd.f32 0.0, %v2087
      %2089 = vdwg.mxu0
      %v2090 = vadd.f32 %v1921, %v2086
      %v2091 = vadd.f32 %v1922, %v2088
      %s2092 = scalar_lea.vmem %s20, 1
      %v2093 = vld [vmem:[%s2092] sm:$0x1]
      %v2095 = vperm.slane %v2093, 0
      %v2097 = vadd.f32 %v2090, %v2095
      %v2098 = vadd.f32 %v2091, %v2095
      %v2099 = vpack.c.bf16 %v2098, %v2097
      %v2100 = vld [vmem:[%s21] sm:$0xf]
      %v2101 = vld [vmem:[%s21 + $0x4] sm:$0xf]
      %v2102 = vld [vmem:[%s21 + $0x8] sm:$0xf]
      %v2103 = vld [vmem:[%s21 + $0xc] sm:$0xf]
      %v2104 = vld [vmem:[%s21 + $0x10] sm:$0xf]
      %v2105 = vld [vmem:[%s21 + $0x14] sm:$0xf]
      %v2106 = vld [vmem:[%s21 + $0x18] sm:$0xf]
      %v2107 = vld [vmem:[%s21 + $0x1c] sm:$0xf]
      %v2108 = vld [vmem:[%s21 + $0x20] sm:$0xf]
      %v2109 = vld [vmem:[%s21 + $0x24] sm:$0xf]
      %v2110 = vld [vmem:[%s21 + $0x28] sm:$0xf]
      %v2111 = vld [vmem:[%s21 + $0x2c] sm:$0xf]
      %v2112 = vld [vmem:[%s21 + $0x30] sm:$0xf]
      %v2113 = vld [vmem:[%s21 + $0x34] sm:$0xf]
      %v2114 = vld [vmem:[%s21 + $0x38] sm:$0xf]
      %v2115 = vld [vmem:[%s21 + $0x3c] sm:$0xf]
      %v2116 = vld [vmem:[%s22] sm:$0x1]
      %v2118 = vperm.slane %v2116, 0
      %v2136 = vunpack.c.l.b16 %v2100
      %v2137 = vunpack.c.l.b16 %v2101
      %v2138 = vunpack.c.l.b16 %v2102
      %v2139 = vunpack.c.l.b16 %v2103
      %v2140 = vunpack.c.l.b16 %v2104
      %v2141 = vunpack.c.l.b16 %v2105
      %v2142 = vunpack.c.l.b16 %v2106
      %v2143 = vunpack.c.l.b16 %v2107
      %v2144 = vunpack.c.l.b16 %v2108
      %v2145 = vunpack.c.l.b16 %v2109
      %v2146 = vunpack.c.l.b16 %v2110
      %v2147 = vunpack.c.l.b16 %v2111
      %v2148 = vunpack.c.l.b16 %v2112
      %v2149 = vunpack.c.l.b16 %v2113
      %v2150 = vunpack.c.l.b16 %v2114
      %v2151 = vunpack.c.l.b16 %v2115
      %v2152 = vpack.c.b16 %v2137, %v2136
      %v2153 = vpack.c.b16 %v2139, %v2138
      %v2154 = vpack.c.b16 %v2141, %v2140
      %v2155 = vpack.c.b16 %v2143, %v2142
      %v2156 = vpack.c.b16 %v2145, %v2144
      %v2157 = vpack.c.b16 %v2147, %v2146
      %v2158 = vpack.c.b16 %v2149, %v2148
      %v2159 = vpack.c.b16 %v2151, %v2150
      %2168 = vmatpush.bf16.msra.mxu0 %v2159
      %2169 = vmatpush.bf16.msra.mxu0 %v2158
      %2170 = vmatpush.bf16.msra.mxu0 %v2157
      %2171 = vmatpush.bf16.msra.mxu0 %v2156
      %2172 = vmatpush.bf16.msra.mxu0 %v2155
      %2173 = vmatpush.bf16.msra.mxu0 %v2154
      %2174 = vmatpush.bf16.msra.mxu0 %v2153
      %2175 = vmatpush.bf16.msra.mxu0 %v2152
      %2176 = vmatmul.bf16.gmra.mxu0 %v2099
      %v2177 = vpop.f32.mrf.mxu0
      %v2178 = vadd.f32 %v2118, %v2177
      %v2179 = vpop.f32.mrf.mxu0
      %v2180 = vadd.f32 %v2118, %v2179
      %2181 = vdwg.mxu0
      %2182 = vst.msk [vmem:[%s770] sm:$0xff] %vm777, %v2178
      %2183 = vst.msk [vmem:[%s770 + $0x8] sm:$0xff] %vm777, %v2180
      %s2184 = smul.u32 2, %s39
      %p2185 = scmp.lt.s32.totalorder %s38, 1
      %s2186 = scalar_select %p2185, %s38, 1
      %p2187 = scmp.lt.s32.totalorder %s2184, 1
      %s2188 = scalar_select %p2187, %s2184, 1
      %s2189 = smul.addr %s2186, 2
      %s2190 = sadd.s32 %s2188, %s2189
      %s2191 = smul.addr %s2190, 8
      %s2192 = scalar_lea.vmem %s23, %s2191
      // Predicated region
      $region113: #{blstf_forward.1} parent=111 // pred_check
        %p2193 = pneg %p561
      $region114: #{blstf_forward.1} parent=111 // pred_check_branch
        %2195 = sbr.rel (%p2193) target = $region116
      $region115: #{blstf_forward.1} parent=111 // pred_region
        %s2196 = smul.u32 2, %s39
      $region116: #{blstf_forward.1} parent=111 // pred_fallthru
        _
    $region112: #{blstf_forward.1} parent=5 // pred_fallthru
      _
    %p2197 = scmp.le.s32.totalorder 2, %s29
    // Predicated region
    $region117: #{blstf_forward.1} parent=5 // pred_check
      %p2198 = pneg %p2197
    $region118: #{blstf_forward.1} parent=5 // pred_check_branch
      %2200 = sbr.rel (%p2198) target = $region120
    $region119: #{blstf_forward.1} parent=5 // pred_region
      %s2201 = ssub.s32 %s29, 2
      // Predicated region
      $region121: #{blstf_forward.1} parent=119 // pred_check
        %p2202 = pneg %p567
      $region122: #{blstf_forward.1} parent=119 // pred_check_branch
        %2204 = sbr.rel (%p2202) target = $region124
      $region123: #{blstf_forward.1} parent=119 // pred_region
        %s2205 = smul.u32 2, %s41
        %p2206 = scmp.lt.s32.totalorder %s40, 1
        %s2207 = scalar_select %p2206, %s40, 1
        %p2208 = scmp.lt.s32.totalorder %s2205, 1
        %s2209 = scalar_select %p2208, %s2205, 1
        %s2210 = smul.addr %s2207, 2
        %s2211 = sadd.s32 %s2209, %s2210
        %s2212 = smul.addr %s2211, 8
        %s2213 = scalar_lea.vmem %s23, %s2212
      $region124: #{blstf_forward.1} parent=119 // pred_fallthru
        _
    $region120: #{blstf_forward.1} parent=5 // pred_fallthru
      _
  $region6: #{blstf_forward.1} parent=0 // loop_footer
    %s33 = sadd.s32 1, %s29
  $region7: #{blstf_forward.1} parent=0 // loop_footer_branch
    %28 = sbr.rel target = $region3
  $region8: #{blstf_forward.1} parent=0 // loop_exit
    _

// kernel: blstf_forward.1
$region0: #{blstf_forward.1}
  #allocation0 [shape = 'u32[]', space=smem, size = 0x4, offset = 0x4, fixed_abs, tag = 'smem constant byte address 0x4 - core index']
  #allocation1 [shape = 'u32[72,128]{1,0:T(1,128)}', space=vmem, size = 0x9000, scoped, tag = 'internal scratch']
  %s0 = inlined_call_operand.vmem [shape: f32[2,16,8], index: 0, kind: input, shape index: {}]
  %s1 = inlined_call_operand.vmem [shape: f32[16,128], index: 1, kind: input, shape index: {}]
  %s2 = inlined_call_operand.vmem [shape: f32[8,128], index: 2, kind: input, shape index: {}]
  %s3 = inlined_call_operand.vmem [shape: f32[128,128], index: 3, kind: input, shape index: {}]
  %s4 = inlined_call_operand.vmem [shape: f32[128,128], index: 4, kind: input, shape index: {}]
  %s5 = inlined_call_operand.vmem [shape: bf16[2,128,128], index: 5, kind: input, shape index: {}]
  %s6 = inlined_call_operand.vmem [shape: f32[2,1,128], index: 6, kind: input, shape index: {}]
  %s7 = inlined_call_operand.vmem [shape: bf16[2,128,128], index: 7, kind: input, shape index: {}]
  %s8 = inlined_call_operand.vmem [shape: f32[2,1,128], index: 8, kind: input, shape index: {}]
  %s9 = inlined_call_operand.vmem [shape: bf16[128,128], index: 9, kind: input, shape index: {}]
  %s10 = inlined_call_operand.vmem [shape: f32[1,128], index: 10, kind: input, shape index: {}]
  %s11 = inlined_call_operand.vmem [shape: bf16[2,128,128], index: 11, kind: input, shape index: {}]
  %s12 = inlined_call_operand.vmem [shape: f32[2,1,128], index: 12, kind: input, shape index: {}]
  %s13 = inlined_call_operand.vmem [shape: bf16[2,128,128], index: 13, kind: input, shape index: {}]
  %s14 = inlined_call_operand.vmem [shape: f32[2,1,128], index: 14, kind: input, shape index: {}]
  %s15 = inlined_call_operand.vmem [shape: bf16[128,128], index: 15, kind: input, shape index: {}]
  %s16 = inlined_call_operand.vmem [shape: f32[1,128], index: 16, kind: input, shape index: {}]
  %s17 = inlined_call_operand.vmem [shape: bf16[2,128,128], index: 17, kind: input, shape index: {}]
  %s18 = inlined_call_operand.vmem [shape: f32[2,1,128], index: 18, kind: input, shape index: {}]
  %s19 = inlined_call_operand.vmem [shape: bf16[2,128,128], index: 19, kind: input, shape index: {}]
  %s20 = inlined_call_operand.vmem [shape: f32[2,1,128], index: 20, kind: input, shape index: {}]
  %s21 = inlined_call_operand.vmem [shape: bf16[128,128], index: 21, kind: input, shape index: {}]
  %s22 = inlined_call_operand.vmem [shape: f32[1,128], index: 22, kind: input, shape index: {}]
  %s23 = inlined_call_operand.vmem [shape: f32[2,16,8], index: 23, kind: output, shape index: {}]
  %s24 = sld [smem:[#allocation0]]
  $region125: #{blstf_forward.1} parent=0
    _
  %s26 = ssub.s32 1, %s24
  %s27 = scalar_select 0, %s26, %s24
  loop: start=0, step=1, limit=4
  $region2: #{blstf_forward.1} parent=0 // loop_pre_header
    _
  $region3: #{blstf_forward.1} parent=0 // loop_header
    %s29 = sphi 0, %s33
    %p30 = scmp.ge.s32.totalorder %s29, 4
    %s36 = sphi 0, %s48
    %s37 = sphi 0, %s44
    %s38 = sphi 0, %s36
    %s39 = sphi 0, %s37
    %s40 = sphi 0, %s38
    %s41 = sphi 0, %s39
    %s53 = sphi 0, %s55
    %s56 = sphi 0, %s53
    %s57 = sphi 0, %s56
    %s73 = sphi 0, %s57
    %s79 = sphi 0, %s81
    %s82 = sphi 0, %s79
    %s83 = sphi 0, %s82
    %s99 = sphi 0, %s83
    %s103 = sphi 0, %s103
    %s105 = sphi 0, %s103
    %s106 = sphi 0, %s105
    %s120 = sphi 0, %s106
    %s124 = sphi 0, %s124
    %s126 = sphi 0, %s124
    %s127 = sphi 0, %s126
    %s141 = sphi 0, %s127
    %s145 = sphi 0, %s145
    %s147 = sphi 0, %s145
    %s148 = sphi 0, %s147
    %s162 = sphi 0, %s148
    %s166 = sphi 0, %s166
    %s168 = sphi 0, %s166
    %s169 = sphi 0, %s168
    %s183 = sphi 0, %s169
    %s187 = sphi 0, %s187
    %s189 = sphi 0, %s187
    %s190 = sphi 0, %s189
    %s204 = sphi 0, %s190
    %s208 = sphi 0, %s208
    %s210 = sphi 0, %s208
    %s211 = sphi 0, %s210
    %s225 = sphi 0, %s211
    %s229 = sphi 0, %s229
    %s231 = sphi 0, %s229
    %s232 = sphi 0, %s231
    %s246 = sphi 0, %s232
    %s250 = sphi 0, %s250
    %s252 = sphi 0, %s250
    %s253 = sphi 0, %s252
    %s267 = sphi 0, %s253
    %s271 = sphi 0, %s271
    %s273 = sphi 0, %s271
    %s274 = sphi 0, %s273
    %s288 = sphi 0, %s274
    %s292 = sphi 0, %s292
    %s294 = sphi 0, %s292
    %s295 = sphi 0, %s294
    %s309 = sphi 0, %s295
    %s313 = sphi 0, %s313
    %s315 = sphi 0, %s313
    %s316 = sphi 0, %s315
    %s330 = sphi 0, %s316
    %s334 = sphi 0, %s334
    %s336 = sphi 0, %s334
    %s337 = sphi 0, %s336
    %s351 = sphi 0, %s337
    %s355 = sphi 0, %s355
    %s357 = sphi 0, %s355
    %s358 = sphi 0, %s357
    %s372 = sphi 0, %s358
    %s376 = sphi 0, %s376
    %s378 = sphi 0, %s376
    %s379 = sphi 0, %s378
    %s393 = sphi 0, %s379
    %s397 = sphi 0, %s397
    %s399 = sphi 0, %s397
    %s400 = sphi 0, %s399
    %s414 = sphi 0, %s400
    %s418 = sphi 0, %s418
    %s420 = sphi 0, %s418
    %s421 = sphi 0, %s420
    %s435 = sphi 0, %s421
    %s439 = sphi 0, %s439
    %s441 = sphi 0, %s439
    %s442 = sphi 0, %s441
    %s456 = sphi 0, %s442
    %s460 = sphi 0, %s460
    %s462 = sphi 0, %s460
    %s463 = sphi 0, %s462
    %s477 = sphi 0, %s463
    %s481 = sphi 0, %s481
    %s483 = sphi 0, %s481
    %s484 = sphi 0, %s483
    %s498 = sphi 0, %s484
    %s502 = sphi 0, %s502
    %s504 = sphi 0, %s502
    %s505 = sphi 0, %s504
    %s519 = sphi 0, %s505
    %s523 = sphi 0, %s523
    %s525 = sphi 0, %s523
    %s526 = sphi 0, %s525
    %s540 = sphi 0, %s526
    %s548 = sphi 0, %s550
    %s551 = sphi 0, %s548
    %s552 = sphi 0, %s551
    %s568 = sphi 0, %s552
  $region4: #{blstf_forward.1} parent=0 // loop_header_branch
    %32 = sbr.rel (%p30) target = $region8
  $region5: #{blstf_forward.1} parent=0 // loop_body
    %s34 = ssub.s32 %s29, 1
    %s35 = ssub.s32 %s29, 2
    %s42 = sadd.s32 1, %s37
    %p43 = scmp.ge.s32.totalorder %s42, 1
    %s44 = scalar_select %p43, 0, %s42
    %s45 = sadd.s32 1, %s36
    %s46 = scalar_select %p43, %s45, %s36
    %p47 = scmp.ge.s32.totalorder %s46, 2
    %s48 = scalar_select %p47, 0, %s46
    %s49 = ssub.s32 %s36, %s48
    %s50 = ssub.s32 %s37, %s44
    %s51 = sor.u32 %s49, %s50
    %p52 = scmp.eq.s32.totalorder %s51, 0
    %s54 = sadd.s32 %s53, 1
    %s55 = scalar_select %p52, %s53, %s54
    %p58 = pneg %p52
    %p59 = scmp.eq.s32.totalorder %s29, 1
    %p60 = por %p58, %p59
    %p61 = scmp.ne.s32.totalorder %s53, %s56
    %p62 = scmp.eq.s32.totalorder %s29, 0
    %p63 = por %p61, %p62
    %p64 = scmp.ne.s32.totalorder %s53, %s56
    %p65 = scmp.eq.s32.totalorder %s34, 1
    %p66 = por %p64, %p65
    %p67 = scmp.ne.s32.totalorder %s56, %s57
    %p68 = scmp.eq.s32.totalorder %s34, 0
    %p69 = por %p67, %p68
    %p70 = scmp.ne.s32.totalorder %s56, %s57
    %p71 = scmp.eq.s32.totalorder %s35, 1
    %p72 = por %p70, %p71
    %p74 = scmp.ne.s32.totalorder %s57, %s73
    %p75 = scmp.eq.s32.totalorder %s35, 0
    %p76 = por %p74, %p75
    %s77 = ssub.s32 %s37, %s44
    %p78 = scmp.eq.s32.totalorder %s77, 0
    %s80 = sadd.s32 %s79, 1
    %s81 = scalar_select %p78, %s79, %s80
    %p84 = pneg %p78
    %p85 = scmp.eq.s32.totalorder %s29, 1
    %p86 = por %p84, %p85
    %p87 = scmp.ne.s32.totalorder %s79, %s82
    %p88 = scmp.eq.s32.totalorder %s29, 0
    %p89 = por %p87, %p88
    %p90 = scmp.ne.s32.totalorder %s79, %s82
    %p91 = scmp.eq.s32.totalorder %s34, 1
    %p92 = por %p90, %p91
    %p93 = scmp.ne.s32.totalorder %s82, %s83
    %p94 = scmp.eq.s32.totalorder %s34, 0
    %p95 = por %p93, %p94
    %p96 = scmp.ne.s32.totalorder %s82, %s83
    %p97 = scmp.eq.s32.totalorder %s35, 1
    %p98 = por %p96, %p97
    %p100 = scmp.ne.s32.totalorder %s83, %s99
    %p101 = scmp.eq.s32.totalorder %s35, 0
    %p102 = por %p100, %p101
    %s104 = sadd.s32 %s103, 1
    %p107 = scmp.eq.s32.totalorder %s29, 1
    %p108 = scmp.ne.s32.totalorder %s103, %s105
    %p109 = scmp.eq.s32.totalorder %s29, 0
    %p110 = por %p108, %p109
    %p111 = scmp.ne.s32.totalorder %s103, %s105
    %p112 = scmp.eq.s32.totalorder %s34, 1
    %p113 = por %p111, %p112
    %p114 = scmp.ne.s32.totalorder %s105, %s106
    %p115 = scmp.eq.s32.totalorder %s34, 0
    %p116 = por %p114, %p115
    %p117 = scmp.ne.s32.totalorder %s105, %s106
    %p118 = scmp.eq.s32.totalorder %s35, 1
    %p119 = por %p117, %p118
    %p121 = scmp.ne.s32.totalorder %s106, %s120
    %p122 = scmp.eq.s32.totalorder %s35, 0
    %p123 = por %p121, %p122
    %s125 = sadd.s32 %s124, 1
    %p128 = scmp.eq.s32.totalorder %s29, 1
    %p129 = scmp.ne.s32.totalorder %s124, %s126
    %p130 = scmp.eq.s32.totalorder %s29, 0
    %p131 = por %p129, %p130
    %p132 = scmp.ne.s32.totalorder %s124, %s126
    %p133 = scmp.eq.s32.totalorder %s34, 1
    %p134 = por %p132, %p133
    %p135 = scmp.ne.s32.totalorder %s126, %s127
    %p136 = scmp.eq.s32.totalorder %s34, 0
    %p137 = por %p135, %p136
    %p138 = scmp.ne.s32.totalorder %s126, %s127
    %p139 = scmp.eq.s32.totalorder %s35, 1
    %p140 = por %p138, %p139
    %p142 = scmp.ne.s32.totalorder %s127, %s141
    %p143 = scmp.eq.s32.totalorder %s35, 0
    %p144 = por %p142, %p143
    %s146 = sadd.s32 %s145, 1
    %p149 = scmp.eq.s32.totalorder %s29, 1
    %p150 = scmp.ne.s32.totalorder %s145, %s147
    %p151 = scmp.eq.s32.totalorder %s29, 0
    %p152 = por %p150, %p151
    %p153 = scmp.ne.s32.totalorder %s145, %s147
    %p154 = scmp.eq.s32.totalorder %s34, 1
    %p155 = por %p153, %p154
    %p156 = scmp.ne.s32.totalorder %s147, %s148
    %p157 = scmp.eq.s32.totalorder %s34, 0
    %p158 = por %p156, %p157
    %p159 = scmp.ne.s32.totalorder %s147, %s148
    %p160 = scmp.eq.s32.totalorder %s35, 1
    %p161 = por %p159, %p160
    %p163 = scmp.ne.s32.totalorder %s148, %s162
    %p164 = scmp.eq.s32.totalorder %s35, 0
    %p165 = por %p163, %p164
    %s167 = sadd.s32 %s166, 1
    %p170 = scmp.eq.s32.totalorder %s29, 1
    %p171 = scmp.ne.s32.totalorder %s166, %s168
    %p172 = scmp.eq.s32.totalorder %s29, 0
    %p173 = por %p171, %p172
    %p174 = scmp.ne.s32.totalorder %s166, %s168
    %p175 = scmp.eq.s32.totalorder %s34, 1
    %p176 = por %p174, %p175
    %p177 = scmp.ne.s32.totalorder %s168, %s169
    %p178 = scmp.eq.s32.totalorder %s34, 0
    %p179 = por %p177, %p178
    %p180 = scmp.ne.s32.totalorder %s168, %s169
    %p181 = scmp.eq.s32.totalorder %s35, 1
    %p182 = por %p180, %p181
    %p184 = scmp.ne.s32.totalorder %s169, %s183
    %p185 = scmp.eq.s32.totalorder %s35, 0
    %p186 = por %p184, %p185
    %s188 = sadd.s32 %s187, 1
    %p191 = scmp.eq.s32.totalorder %s29, 1
    %p192 = scmp.ne.s32.totalorder %s187, %s189
    %p193 = scmp.eq.s32.totalorder %s29, 0
    %p194 = por %p192, %p193
    %p195 = scmp.ne.s32.totalorder %s187, %s189
    %p196 = scmp.eq.s32.totalorder %s34, 1
    %p197 = por %p195, %p196
    %p198 = scmp.ne.s32.totalorder %s189, %s190
    %p199 = scmp.eq.s32.totalorder %s34, 0
    %p200 = por %p198, %p199
    %p201 = scmp.ne.s32.totalorder %s189, %s190
    %p202 = scmp.eq.s32.totalorder %s35, 1
    %p203 = por %p201, %p202
    %p205 = scmp.ne.s32.totalorder %s190, %s204
    %p206 = scmp.eq.s32.totalorder %s35, 0
    %p207 = por %p205, %p206
    %s209 = sadd.s32 %s208, 1
    %p212 = scmp.eq.s32.totalorder %s29, 1
    %p213 = scmp.ne.s32.totalorder %s208, %s210
    %p214 = scmp.eq.s32.totalorder %s29, 0
    %p215 = por %p213, %p214
    %p216 = scmp.ne.s32.totalorder %s208, %s210
    %p217 = scmp.eq.s32.totalorder %s34, 1
    %p218 = por %p216, %p217
    %p219 = scmp.ne.s32.totalorder %s210, %s211
    %p220 = scmp.eq.s32.totalorder %s34, 0
    %p221 = por %p219, %p220
    %p222 = scmp.ne.s32.totalorder %s210, %s211
    %p223 = scmp.eq.s32.totalorder %s35, 1
    %p224 = por %p222, %p223
    %p226 = scmp.ne.s32.totalorder %s211, %s225
    %p227 = scmp.eq.s32.totalorder %s35, 0
    %p228 = por %p226, %p227
    %s230 = sadd.s32 %s229, 1
    %p233 = scmp.eq.s32.totalorder %s29, 1
    %p234 = scmp.ne.s32.totalorder %s229, %s231
    %p235 = scmp.eq.s32.totalorder %s29, 0
    %p236 = por %p234, %p235
    %p237 = scmp.ne.s32.totalorder %s229, %s231
    %p238 = scmp.eq.s32.totalorder %s34, 1
    %p239 = por %p237, %p238
    %p240 = scmp.ne.s32.totalorder %s231, %s232
    %p241 = scmp.eq.s32.totalorder %s34, 0
    %p242 = por %p240, %p241
    %p243 = scmp.ne.s32.totalorder %s231, %s232
    %p244 = scmp.eq.s32.totalorder %s35, 1
    %p245 = por %p243, %p244
    %p247 = scmp.ne.s32.totalorder %s232, %s246
    %p248 = scmp.eq.s32.totalorder %s35, 0
    %p249 = por %p247, %p248
    %s251 = sadd.s32 %s250, 1
    %p254 = scmp.eq.s32.totalorder %s29, 1
    %p255 = scmp.ne.s32.totalorder %s250, %s252
    %p256 = scmp.eq.s32.totalorder %s29, 0
    %p257 = por %p255, %p256
    %p258 = scmp.ne.s32.totalorder %s250, %s252
    %p259 = scmp.eq.s32.totalorder %s34, 1
    %p260 = por %p258, %p259
    %p261 = scmp.ne.s32.totalorder %s252, %s253
    %p262 = scmp.eq.s32.totalorder %s34, 0
    %p263 = por %p261, %p262
    %p264 = scmp.ne.s32.totalorder %s252, %s253
    %p265 = scmp.eq.s32.totalorder %s35, 1
    %p266 = por %p264, %p265
    %p268 = scmp.ne.s32.totalorder %s253, %s267
    %p269 = scmp.eq.s32.totalorder %s35, 0
    %p270 = por %p268, %p269
    %s272 = sadd.s32 %s271, 1
    %p275 = scmp.eq.s32.totalorder %s29, 1
    %p276 = scmp.ne.s32.totalorder %s271, %s273
    %p277 = scmp.eq.s32.totalorder %s29, 0
    %p278 = por %p276, %p277
    %p279 = scmp.ne.s32.totalorder %s271, %s273
    %p280 = scmp.eq.s32.totalorder %s34, 1
    %p281 = por %p279, %p280
    %p282 = scmp.ne.s32.totalorder %s273, %s274
    %p283 = scmp.eq.s32.totalorder %s34, 0
    %p284 = por %p282, %p283
    %p285 = scmp.ne.s32.totalorder %s273, %s274
    %p286 = scmp.eq.s32.totalorder %s35, 1
    %p287 = por %p285, %p286
    %p289 = scmp.ne.s32.totalorder %s274, %s288
    %p290 = scmp.eq.s32.totalorder %s35, 0
    %p291 = por %p289, %p290
    %s293 = sadd.s32 %s292, 1
    %p296 = scmp.eq.s32.totalorder %s29, 1
    %p297 = scmp.ne.s32.totalorder %s292, %s294
    %p298 = scmp.eq.s32.totalorder %s29, 0
    %p299 = por %p297, %p298
    %p300 = scmp.ne.s32.totalorder %s292, %s294
    %p301 = scmp.eq.s32.totalorder %s34, 1
    %p302 = por %p300, %p301
    %p303 = scmp.ne.s32.totalorder %s294, %s295
    %p304 = scmp.eq.s32.totalorder %s34, 0
    %p305 = por %p303, %p304
    %p306 = scmp.ne.s32.totalorder %s294, %s295
    %p307 = scmp.eq.s32.totalorder %s35, 1
    %p308 = por %p306, %p307
    %p310 = scmp.ne.s32.totalorder %s295, %s309
    %p311 = scmp.eq.s32.totalorder %s35, 0
    %p312 = por %p310, %p311
    %s314 = sadd.s32 %s313, 1
    %p317 = scmp.eq.s32.totalorder %s29, 1
    %p318 = scmp.ne.s32.totalorder %s313, %s315
    %p319 = scmp.eq.s32.totalorder %s29, 0
    %p320 = por %p318, %p319
    %p321 = scmp.ne.s32.totalorder %s313, %s315
    %p322 = scmp.eq.s32.totalorder %s34, 1
    %p323 = por %p321, %p322
    %p324 = scmp.ne.s32.totalorder %s315, %s316
    %p325 = scmp.eq.s32.totalorder %s34, 0
    %p326 = por %p324, %p325
    %p327 = scmp.ne.s32.totalorder %s315, %s316
    %p328 = scmp.eq.s32.totalorder %s35, 1
    %p329 = por %p327, %p328
    %p331 = scmp.ne.s32.totalorder %s316, %s330
    %p332 = scmp.eq.s32.totalorder %s35, 0
    %p333 = por %p331, %p332
    %s335 = sadd.s32 %s334, 1
    %p338 = scmp.eq.s32.totalorder %s29, 1
    %p339 = scmp.ne.s32.totalorder %s334, %s336
    %p340 = scmp.eq.s32.totalorder %s29, 0
    %p341 = por %p339, %p340
    %p342 = scmp.ne.s32.totalorder %s334, %s336
    %p343 = scmp.eq.s32.totalorder %s34, 1
    %p344 = por %p342, %p343
    %p345 = scmp.ne.s32.totalorder %s336, %s337
    %p346 = scmp.eq.s32.totalorder %s34, 0
    %p347 = por %p345, %p346
    %p348 = scmp.ne.s32.totalorder %s336, %s337
    %p349 = scmp.eq.s32.totalorder %s35, 1
    %p350 = por %p348, %p349
    %p352 = scmp.ne.s32.totalorder %s337, %s351
    %p353 = scmp.eq.s32.totalorder %s35, 0
    %p354 = por %p352, %p353
    %s356 = sadd.s32 %s355, 1
    %p359 = scmp.eq.s32.totalorder %s29, 1
    %p360 = scmp.ne.s32.totalorder %s355, %s357
    %p361 = scmp.eq.s32.totalorder %s29, 0
    %p362 = por %p360, %p361
    %p363 = scmp.ne.s32.totalorder %s355, %s357
    %p364 = scmp.eq.s32.totalorder %s34, 1
    %p365 = por %p363, %p364
    %p366 = scmp.ne.s32.totalorder %s357, %s358
    %p367 = scmp.eq.s32.totalorder %s34, 0
    %p368 = por %p366, %p367
    %p369 = scmp.ne.s32.totalorder %s357, %s358
    %p370 = scmp.eq.s32.totalorder %s35, 1
    %p371 = por %p369, %p370
    %p373 = scmp.ne.s32.totalorder %s358, %s372
    %p374 = scmp.eq.s32.totalorder %s35, 0
    %p375 = por %p373, %p374
    %s377 = sadd.s32 %s376, 1
    %p380 = scmp.eq.s32.totalorder %s29, 1
    %p381 = scmp.ne.s32.totalorder %s376, %s378
    %p382 = scmp.eq.s32.totalorder %s29, 0
    %p383 = por %p381, %p382
    %p384 = scmp.ne.s32.totalorder %s376, %s378
    %p385 = scmp.eq.s32.totalorder %s34, 1
    %p386 = por %p384, %p385
    %p387 = scmp.ne.s32.totalorder %s378, %s379
    %p388 = scmp.eq.s32.totalorder %s34, 0
    %p389 = por %p387, %p388
    %p390 = scmp.ne.s32.totalorder %s378, %s379
    %p391 = scmp.eq.s32.totalorder %s35, 1
    %p392 = por %p390, %p391
    %p394 = scmp.ne.s32.totalorder %s379, %s393
    %p395 = scmp.eq.s32.totalorder %s35, 0
    %p396 = por %p394, %p395
    %s398 = sadd.s32 %s397, 1
    %p401 = scmp.eq.s32.totalorder %s29, 1
    %p402 = scmp.ne.s32.totalorder %s397, %s399
    %p403 = scmp.eq.s32.totalorder %s29, 0
    %p404 = por %p402, %p403
    %p405 = scmp.ne.s32.totalorder %s397, %s399
    %p406 = scmp.eq.s32.totalorder %s34, 1
    %p407 = por %p405, %p406
    %p408 = scmp.ne.s32.totalorder %s399, %s400
    %p409 = scmp.eq.s32.totalorder %s34, 0
    %p410 = por %p408, %p409
    %p411 = scmp.ne.s32.totalorder %s399, %s400
    %p412 = scmp.eq.s32.totalorder %s35, 1
    %p413 = por %p411, %p412
    %p415 = scmp.ne.s32.totalorder %s400, %s414
    %p416 = scmp.eq.s32.totalorder %s35, 0
    %p417 = por %p415, %p416
    %s419 = sadd.s32 %s418, 1
    %p422 = scmp.eq.s32.totalorder %s29, 1
    %p423 = scmp.ne.s32.totalorder %s418, %s420
    %p424 = scmp.eq.s32.totalorder %s29, 0
    %p425 = por %p423, %p424
    %p426 = scmp.ne.s32.totalorder %s418, %s420
    %p427 = scmp.eq.s32.totalorder %s34, 1
    %p428 = por %p426, %p427
    %p429 = scmp.ne.s32.totalorder %s420, %s421
    %p430 = scmp.eq.s32.totalorder %s34, 0
    %p431 = por %p429, %p430
    %p432 = scmp.ne.s32.totalorder %s420, %s421
    %p433 = scmp.eq.s32.totalorder %s35, 1
    %p434 = por %p432, %p433
    %p436 = scmp.ne.s32.totalorder %s421, %s435
    %p437 = scmp.eq.s32.totalorder %s35, 0
    %p438 = por %p436, %p437
    %s440 = sadd.s32 %s439, 1
    %p443 = scmp.eq.s32.totalorder %s29, 1
    %p444 = scmp.ne.s32.totalorder %s439, %s441
    %p445 = scmp.eq.s32.totalorder %s29, 0
    %p446 = por %p444, %p445
    %p447 = scmp.ne.s32.totalorder %s439, %s441
    %p448 = scmp.eq.s32.totalorder %s34, 1
    %p449 = por %p447, %p448
    %p450 = scmp.ne.s32.totalorder %s441, %s442
    %p451 = scmp.eq.s32.totalorder %s34, 0
    %p452 = por %p450, %p451
    %p453 = scmp.ne.s32.totalorder %s441, %s442
    %p454 = scmp.eq.s32.totalorder %s35, 1
    %p455 = por %p453, %p454
    %p457 = scmp.ne.s32.totalorder %s442, %s456
    %p458 = scmp.eq.s32.totalorder %s35, 0
    %p459 = por %p457, %p458
    %s461 = sadd.s32 %s460, 1
    %p464 = scmp.eq.s32.totalorder %s29, 1
    %p465 = scmp.ne.s32.totalorder %s460, %s462
    %p466 = scmp.eq.s32.totalorder %s29, 0
    %p467 = por %p465, %p466
    %p468 = scmp.ne.s32.totalorder %s460, %s462
    %p469 = scmp.eq.s32.totalorder %s34, 1
    %p470 = por %p468, %p469
    %p471 = scmp.ne.s32.totalorder %s462, %s463
    %p472 = scmp.eq.s32.totalorder %s34, 0
    %p473 = por %p471, %p472
    %p474 = scmp.ne.s32.totalorder %s462, %s463
    %p475 = scmp.eq.s32.totalorder %s35, 1
    %p476 = por %p474, %p475
    %p478 = scmp.ne.s32.totalorder %s463, %s477
    %p479 = scmp.eq.s32.totalorder %s35, 0
    %p480 = por %p478, %p479
    %s482 = sadd.s32 %s481, 1
    %p485 = scmp.eq.s32.totalorder %s29, 1
    %p486 = scmp.ne.s32.totalorder %s481, %s483
    %p487 = scmp.eq.s32.totalorder %s29, 0
    %p488 = por %p486, %p487
    %p489 = scmp.ne.s32.totalorder %s481, %s483
    %p490 = scmp.eq.s32.totalorder %s34, 1
    %p491 = por %p489, %p490
    %p492 = scmp.ne.s32.totalorder %s483, %s484
    %p493 = scmp.eq.s32.totalorder %s34, 0
    %p494 = por %p492, %p493
    %p495 = scmp.ne.s32.totalorder %s483, %s484
    %p496 = scmp.eq.s32.totalorder %s35, 1
    %p497 = por %p495, %p496
    %p499 = scmp.ne.s32.totalorder %s484, %s498
    %p500 = scmp.eq.s32.totalorder %s35, 0
    %p501 = por %p499, %p500
    %s503 = sadd.s32 %s502, 1
    %p506 = scmp.eq.s32.totalorder %s29, 1
    %p507 = scmp.ne.s32.totalorder %s502, %s504
    %p508 = scmp.eq.s32.totalorder %s29, 0
    %p509 = por %p507, %p508
    %p510 = scmp.ne.s32.totalorder %s502, %s504
    %p511 = scmp.eq.s32.totalorder %s34, 1
    %p512 = por %p510, %p511
    %p513 = scmp.ne.s32.totalorder %s504, %s505
    %p514 = scmp.eq.s32.totalorder %s34, 0
    %p515 = por %p513, %p514
    %p516 = scmp.ne.s32.totalorder %s504, %s505
    %p517 = scmp.eq.s32.totalorder %s35, 1
    %p518 = por %p516, %p517
    %p520 = scmp.ne.s32.totalorder %s505, %s519
    %p521 = scmp.eq.s32.totalorder %s35, 0
    %p522 = por %p520, %p521
    %s524 = sadd.s32 %s523, 1
    %p527 = scmp.eq.s32.totalorder %s29, 1
    %p528 = scmp.ne.s32.totalorder %s523, %s525
    %p529 = scmp.eq.s32.totalorder %s29, 0
    %p530 = por %p528, %p529
    %p531 = scmp.ne.s32.totalorder %s523, %s525
    %p532 = scmp.eq.s32.totalorder %s34, 1
    %p533 = por %p531, %p532
    %p534 = scmp.ne.s32.totalorder %s525, %s526
    %p535 = scmp.eq.s32.totalorder %s34, 0
    %p536 = por %p534, %p535
    %p537 = scmp.ne.s32.totalorder %s525, %s526
    %p538 = scmp.eq.s32.totalorder %s35, 1
    %p539 = por %p537, %p538
    %p541 = scmp.ne.s32.totalorder %s526, %s540
    %p542 = scmp.eq.s32.totalorder %s35, 0
    %p543 = por %p541, %p542
    %s544 = ssub.s32 %s36, %s48
    %s545 = ssub.s32 %s37, %s44
    %s546 = sor.u32 %s544, %s545
    %p547 = scmp.eq.s32.totalorder %s546, 0
    %s549 = sadd.s32 %s548, 1
    %s550 = scalar_select %p547, %s548, %s549
    %p553 = pneg %p547
    %p554 = scmp.eq.s32.totalorder %s29, 1
    %p555 = por %p553, %p554
    %p556 = scmp.ne.s32.totalorder %s548, %s551
    %p557 = scmp.eq.s32.totalorder %s29, 0
    %p558 = por %p556, %p557
    %p559 = scmp.ne.s32.totalorder %s548, %s551
    %p560 = scmp.eq.s32.totalorder %s34, 1
    %p561 = por %p559, %p560
    %p562 = scmp.ne.s32.totalorder %s551, %s552
    %p563 = scmp.eq.s32.totalorder %s34, 0
    %p564 = por %p562, %p563
    %p565 = scmp.ne.s32.totalorder %s551, %s552
    %p566 = scmp.eq.s32.totalorder %s35, 1
    %p567 = por %p565, %p566
    %p569 = scmp.ne.s32.totalorder %s552, %s568
    %p570 = scmp.eq.s32.totalorder %s35, 0
    %p571 = por %p569, %p570
    %p572 = scmp.le.s32.totalorder 1, %s29
    %p573 = scmp.lt.s32.totalorder %s29, 3
    %p574 = pnand %p572, %p573
    %p575 = pneg %p574
    // Predicated region
    $region9: #{blstf_forward.1} parent=5 // pred_check
      _
    $region10: #{blstf_forward.1} parent=5 // pred_check_branch
      %577 = sbr.rel (%p574) target = $region12
    $region11: #{blstf_forward.1} parent=5 // pred_region
      %s578 = ssub.s32 %s29, 1
      // Predicated region
      $region13: #{blstf_forward.1} parent=11 // pred_check
        %p579 = pneg %p95
      $region14: #{blstf_forward.1} parent=11 // pred_check_branch
        %581 = sbr.rel (%p579) target = $region16
      $region15: #{blstf_forward.1} parent=11 // pred_region
        %s582 = smul.u32 2, %s39
        %p583 = scmp.lt.s32.totalorder %s582, 1
        %s584 = scalar_select %p583, %s582, 1
        %s585 = smul.addr %s584, 8
        %s586 = scalar_lea.vmem %s1, %s585
        %s587 = smul.u32 2, %s39
      $region16: #{blstf_forward.1} parent=11 // pred_fallthru
        _
      // Predicated region
      $region17: #{blstf_forward.1} parent=11 // pred_check
        %p588 = pneg %p116
      $region18: #{blstf_forward.1} parent=11 // pred_check_branch
        %590 = sbr.rel (%p588) target = $region20
      $region19: #{blstf_forward.1} parent=11 // pred_region
        _
      $region20: #{blstf_forward.1} parent=11 // pred_fallthru
        _
      // Predicated region
      $region21: #{blstf_forward.1} parent=11 // pred_check
        %p591 = pneg %p137
      $region22: #{blstf_forward.1} parent=11 // pred_check_branch
        %593 = sbr.rel (%p591) target = $region24
      $region23: #{blstf_forward.1} parent=11 // pred_region
        _
      $region24: #{blstf_forward.1} parent=11 // pred_fallthru
        _
      // Predicated region
      $region25: #{blstf_forward.1} parent=11 // pred_check
        %p594 = pneg %p158
      $region26: #{blstf_forward.1} parent=11 // pred_check_branch
        %596 = sbr.rel (%p594) target = $region28
      $region27: #{blstf_forward.1} parent=11 // pred_region
        _
      $region28: #{blstf_forward.1} parent=11 // pred_fallthru
        _
      // Predicated region
      $region29: #{blstf_forward.1} parent=11 // pred_check
        %p597 = pneg %p179
      $region30: #{blstf_forward.1} parent=11 // pred_check_branch
        %599 = sbr.rel (%p597) target = $region32
      $region31: #{blstf_forward.1} parent=11 // pred_region
        _
      $region32: #{blstf_forward.1} parent=11 // pred_fallthru
        _
      // Predicated region
      $region33: #{blstf_forward.1} parent=11 // pred_check
        %p600 = pneg %p200
      $region34: #{blstf_forward.1} parent=11 // pred_check_branch
        %602 = sbr.rel (%p600) target = $region36
      $region35: #{blstf_forward.1} parent=11 // pred_region
        _
      $region36: #{blstf_forward.1} parent=11 // pred_fallthru
        _
      // Predicated region
      $region37: #{blstf_forward.1} parent=11 // pred_check
        %p603 = pneg %p221
      $region38: #{blstf_forward.1} parent=11 // pred_check_branch
        %605 = sbr.rel (%p603) target = $region40
      $region39: #{blstf_forward.1} parent=11 // pred_region
        _
      $region40: #{blstf_forward.1} parent=11 // pred_fallthru
        _
      // Predicated region
      $region41: #{blstf_forward.1} parent=11 // pred_check
        %p606 = pneg %p242
      $region42: #{blstf_forward.1} parent=11 // pred_check_branch
        %608 = sbr.rel (%p606) target = $region44
      $region43: #{blstf_forward.1} parent=11 // pred_region
        _
      $region44: #{blstf_forward.1} parent=11 // pred_fallthru
        _
      // Predicated region
      $region45: #{blstf_forward.1} parent=11 // pred_check
        %p609 = pneg %p263
      $region46: #{blstf_forward.1} parent=11 // pred_check_branch
        %611 = sbr.rel (%p609) target = $region48
      $region47: #{blstf_forward.1} parent=11 // pred_region
        _
      $region48: #{blstf_forward.1} parent=11 // pred_fallthru
        _
      // Predicated region
      $region49: #{blstf_forward.1} parent=11 // pred_check
        %p612 = pneg %p284
      $region50: #{blstf_forward.1} parent=11 // pred_check_branch
        %614 = sbr.rel (%p612) target = $region52
      $region51: #{blstf_forward.1} parent=11 // pred_region
        _
      $region52: #{blstf_forward.1} parent=11 // pred_fallthru
        _
      // Predicated region
      $region53: #{blstf_forward.1} parent=11 // pred_check
        %p615 = pneg %p305
      $region54: #{blstf_forward.1} parent=11 // pred_check_branch
        %617 = sbr.rel (%p615) target = $region56
      $region55: #{blstf_forward.1} parent=11 // pred_region
        _
      $region56: #{blstf_forward.1} parent=11 // pred_fallthru
        _
      // Predicated region
      $region57: #{blstf_forward.1} parent=11 // pred_check
        %p618 = pneg %p326
      $region58: #{blstf_forward.1} parent=11 // pred_check_branch
        %620 = sbr.rel (%p618) target = $region60
      $region59: #{blstf_forward.1} parent=11 // pred_region
        _
      $region60: #{blstf_forward.1} parent=11 // pred_fallthru
        _
      // Predicated region
      $region61: #{blstf_forward.1} parent=11 // pred_check
        %p621 = pneg %p347
      $region62: #{blstf_forward.1} parent=11 // pred_check_branch
        %623 = sbr.rel (%p621) target = $region64
      $region63: #{blstf_forward.1} parent=11 // pred_region
        _
      $region64: #{blstf_forward.1} parent=11 // pred_fallthru
        _
      // Predicated region
      $region65: #{blstf_forward.1} parent=11 // pred_check
        %p624 = pneg %p368
      $region66: #{blstf_forward.1} parent=11 // pred_check_branch
        %626 = sbr.rel (%p624) target = $region68
      $region67: #{blstf_forward.1} parent=11 // pred_region
        _
      $region68: #{blstf_forward.1} parent=11 // pred_fallthru
        _
      // Predicated region
      $region69: #{blstf_forward.1} parent=11 // pred_check
        %p627 = pneg %p389
      $region70: #{blstf_forward.1} parent=11 // pred_check_branch
        %629 = sbr.rel (%p627) target = $region72
      $region71: #{blstf_forward.1} parent=11 // pred_region
        _
      $region72: #{blstf_forward.1} parent=11 // pred_fallthru
        _
      // Predicated region
      $region73: #{blstf_forward.1} parent=11 // pred_check
        %p630 = pneg %p410
      $region74: #{blstf_forward.1} parent=11 // pred_check_branch
        %632 = sbr.rel (%p630) target = $region76
      $region75: #{blstf_forward.1} parent=11 // pred_region
        _
      $region76: #{blstf_forward.1} parent=11 // pred_fallthru
        _
      // Predicated region
      $region77: #{blstf_forward.1} parent=11 // pred_check
        %p633 = pneg %p431
      $region78: #{blstf_forward.1} parent=11 // pred_check_branch
        %635 = sbr.rel (%p633) target = $region80
      $region79: #{blstf_forward.1} parent=11 // pred_region
        _
      $region80: #{blstf_forward.1} parent=11 // pred_fallthru
        _
      // Predicated region
      $region81: #{blstf_forward.1} parent=11 // pred_check
        %p636 = pneg %p452
      $region82: #{blstf_forward.1} parent=11 // pred_check_branch
        %638 = sbr.rel (%p636) target = $region84
      $region83: #{blstf_forward.1} parent=11 // pred_region
        _
      $region84: #{blstf_forward.1} parent=11 // pred_fallthru
        _
      // Predicated region
      $region85: #{blstf_forward.1} parent=11 // pred_check
        %p639 = pneg %p473
      $region86: #{blstf_forward.1} parent=11 // pred_check_branch
        %641 = sbr.rel (%p639) target = $region88
      $region87: #{blstf_forward.1} parent=11 // pred_region
        _
      $region88: #{blstf_forward.1} parent=11 // pred_fallthru
        _
      // Predicated region
      $region89: #{blstf_forward.1} parent=11 // pred_check
        %p642 = pneg %p494
      $region90: #{blstf_forward.1} parent=11 // pred_check_branch
        %644 = sbr.rel (%p642) target = $region92
      $region91: #{blstf_forward.1} parent=11 // pred_region
        _
      $region92: #{blstf_forward.1} parent=11 // pred_fallthru
        _
      // Predicated region
      $region93: #{blstf_forward.1} parent=11 // pred_check
        %p645 = pneg %p515
      $region94: #{blstf_forward.1} parent=11 // pred_check_branch
        %647 = sbr.rel (%p645) target = $region96
      $region95: #{blstf_forward.1} parent=11 // pred_region
        _
      $region96: #{blstf_forward.1} parent=11 // pred_fallthru
        _
      // Predicated region
      $region97: #{blstf_forward.1} parent=11 // pred_check
        %p648 = pneg %p536
      $region98: #{blstf_forward.1} parent=11 // pred_check_branch
        %650 = sbr.rel (%p648) target = $region100
      $region99: #{blstf_forward.1} parent=11 // pred_region
        _
      $region100: #{blstf_forward.1} parent=11 // pred_fallthru
        _
    $region12: #{blstf_forward.1} parent=5 // pred_fallthru
      _
    %p651 = scmp.lt.s32.totalorder %s29, 2
    // Predicated region
    $region101: #{blstf_forward.1} parent=5 // pred_check
      %p652 = pneg %p651
    $region102: #{blstf_forward.1} parent=5 // pred_check_branch
      %654 = sbr.rel (%p652) target = $region104
    $region103: #{blstf_forward.1} parent=5 // pred_region
      // Predicated region
      $region105: #{blstf_forward.1} parent=103 // pred_check
        %p655 = pneg %p63
      $region106: #{blstf_forward.1} parent=103 // pred_check_branch
        %657 = sbr.rel (%p655) target = $region108
      $region107: #{blstf_forward.1} parent=103 // pred_region
        %s658 = smul.u32 2, %s37
        %p659 = scmp.lt.s32.totalorder %s36, 1
        %s660 = scalar_select %p659, %s36, 1
        %p661 = scmp.lt.s32.totalorder %s658, 1
        %s662 = scalar_select %p661, %s658, 1
        %s663 = smul.addr %s660, 2
        %s664 = sadd.s32 %s662, %s663
        %s665 = smul.addr %s664, 8
        %s666 = scalar_lea.vmem %s0, %s665
        %s667 = smul.u32 2, %s37
      $region108: #{blstf_forward.1} parent=103 // pred_fallthru
        _
    $region104: #{blstf_forward.1} parent=5 // pred_fallthru
      _
    %p668 = scmp.le.s32.totalorder 1, %s29
    %p669 = scmp.lt.s32.totalorder %s29, 3
    %p670 = pnand %p668, %p669
    %p671 = pneg %p670
    // Predicated region
    $region109: #{blstf_forward.1} parent=5 // pred_check
      _
    $region110: #{blstf_forward.1} parent=5 // pred_check_branch
      %673 = sbr.rel (%p670) target = $region112
    $region111: #{blstf_forward.1} parent=5 // pred_region
      %s674 = ssub.s32 %s29, 1
      %s675 = smul.u32 2, %s39
      %p676 = scmp.lt.s32.totalorder %s38, 1
      %s677 = scalar_select %p676, %s38, 1
      %p678 = scmp.lt.s32.totalorder %s675, 1
      %s679 = scalar_select %p678, %s675, 1
      %s680 = smul.addr %s677, 2
      %s681 = sadd.s32 %s679, %s680
      %s682 = smul.addr %s681, 8
      %s683 = scalar_lea.vmem %s0, %s682
      %p684 = pneg %p69
      %p685 = pneg %p66
      %s686 = smul.u32 2, %s39
      %p687 = scmp.lt.s32.totalorder %s686, 1
      %s688 = scalar_select %p687, %s686, 1
      %s689 = smul.addr %s688, 8
      %s690 = scalar_lea.vmem %s1, %s689
      %p691 = pneg %p95
      %p692 = pneg %p92
      %p693 = pneg %p116
      %p694 = pneg %p113
      %p695 = pneg %p137
      %p696 = pneg %p134
      %p697 = pneg %p158
      %p698 = pneg %p155
      %p699 = pneg %p179
      %p700 = pneg %p176
      %p701 = pneg %p200
      %p702 = pneg %p197
      %p703 = pneg %p221
      %p704 = pneg %p218
      %p705 = pneg %p242
      %p706 = pneg %p239
      %p707 = pneg %p263
      %p708 = pneg %p260
      %p709 = pneg %p284
      %p710 = pneg %p281
      %p711 = pneg %p305
      %p712 = pneg %p302
      %p713 = pneg %p326
      %p714 = pneg %p323
      %p715 = pneg %p347
      %p716 = pneg %p344
      %p717 = pneg %p368
      %p718 = pneg %p365
      %p719 = pneg %p389
      %p720 = pneg %p386
      %p721 = pneg %p410
      %p722 = pneg %p407
      %p723 = pneg %p431
      %p724 = pneg %p428
      %p725 = pneg %p452
      %p726 = pneg %p449
      %p727 = pneg %p473
      %p728 = pneg %p470
      %p729 = pneg %p494
      %p730 = pneg %p491
      %p731 = pneg %p515
      %p732 = pneg %p512
      %p733 = pneg %p536
      %p734 = pneg %p533
      %p735 = pneg %p564
      %p736 = pneg %p561
      %s737 = smul.u32 2, %s39
      %p738 = scmp.lt.s32.totalorder %s38, 1
      %s739 = scalar_select %p738, %s38, 1
      %p740 = scmp.lt.s32.totalorder %s737, 1
      %s741 = scalar_select %p740, %s737, 1
      %s742 = smul.addr %s739, 2
      %s743 = sadd.s32 %s741, %s742
      %s744 = smul.addr %s743, 8
      %s745 = scalar_lea.vmem %s23, %s744
      %s746 = smul.u32 2, %s39
      %p747 = scmp.lt.s32.totalorder %s38, 1
      %s748 = scalar_select %p747, %s38, 1
      %p749 = scmp.lt.s32.totalorder %s746, 1
      %s750 = scalar_select %p749, %s746, 1
      %s751 = smul.addr %s748, 2
      %s752 = sadd.s32 %s750, %s751
      %s753 = smul.addr %s752, 8
      %s754 = scalar_lea.vmem %s0, %s753
      %s755 = smul.u32 2, %s39
      %s756 = smul.u32 2, %s39
      %p757 = scmp.lt.s32.totalorder %s756, 1
      %s758 = scalar_select %p757, %s756, 1
      %s759 = smul.addr %s758, 8
      %s760 = scalar_lea.vmem %s1, %s759
      %s761 = smul.u32 2, %s39
      %s762 = smul.u32 2, %s39
      %p763 = scmp.lt.s32.totalorder %s38, 1
      %s764 = scalar_select %p763, %s38, 1
      %p765 = scmp.lt.s32.totalorder %s762, 1
      %s766 = scalar_select %p765, %s762, 1
      %s767 = smul.addr %s764, 2
      %s768 = sadd.s32 %s766, %s767
      %s769 = smul.addr %s768, 8
      %s770 = scalar_lea.vmem %s23, %s769
      %s771 = smul.u32 2, %s39
      %v772 = vld [vmem:[%s754] sm:$0xff]
      %v773 = vld [vmem:[%s754 + $0x8] sm:$0xff]
      %v774 = vld [vmem:[%s2] sm:$0xff]
      %v775 = vld [vmem:[%s760] sm:$0xff]
      %v776 = vld [vmem:[%s760 + $0x8] sm:$0xff]
      %vm777 = vcmask 64512
      %v779 = vsel %vm777, %v772, 0
      %v782 = vsel %vm777, %v773, 0
      %784 = vmatpush.msra.mxu0 0.0
      %785 = vmatpush.msra.mxu0 0.0
      %786 = vmatpush.msra.mxu0 0.0
      %787 = vmatpush.msra.mxu0 0.0
      %788 = vmatpush.msra.mxu0 0.0
      %789 = vmatpush.msra.mxu0 0.0
      %790 = vmatpush.msra.mxu0 0.0
      %791 = vmatpush.msra.mxu0 0.0
      %792 = vmatpush.msra.mxu0 0.0
      %793 = vmatpush.msra.mxu0 0.0
      %794 = vmatpush.msra.mxu0 0.0
      %795 = vmatpush.msra.mxu0 0.0
      %796 = vmatpush.msra.mxu0 0.0
      %797 = vmatpush.msra.mxu0 0.0
      %798 = vmatpush.msra.mxu0 0.0
      %799 = vmatpush.msra.mxu0 %v774
      %800 = vmatmul.f32.gmra.mxu0 %v779
      %v801 = vpop.f32.mrf.mxu0
      %v802 = vadd.f32 %v775, %v801
      %803 = vmatmul.f32.gmra.mxu0 %v782
      %v804 = vpop.f32.mrf.mxu0
      %v805 = vadd.f32 %v776, %v804
      %806 = vdwg.mxu0
      %v807 = vpack.c.bf16 %v805, %v802
      %v808 = vld [vmem:[%s5] sm:$0xf]
      %v809 = vld [vmem:[%s5 + $0x4] sm:$0xf]
      %v810 = vld [vmem:[%s5 + $0x8] sm:$0xf]
      %v811 = vld [vmem:[%s5 + $0xc] sm:$0xf]
      %v812 = vld [vmem:[%s5 + $0x10] sm:$0xf]
      %v813 = vld [vmem:[%s5 + $0x14] sm:$0xf]
      %v814 = vld [vmem:[%s5 + $0x18] sm:$0xf]
      %v815 = vld [vmem:[%s5 + $0x1c] sm:$0xf]
      %v816 = vld [vmem:[%s5 + $0x20] sm:$0xf]
      %v817 = vld [vmem:[%s5 + $0x24] sm:$0xf]
      %v818 = vld [vmem:[%s5 + $0x28] sm:$0xf]
      %v819 = vld [vmem:[%s5 + $0x2c] sm:$0xf]
      %v820 = vld [vmem:[%s5 + $0x30] sm:$0xf]
      %v821 = vld [vmem:[%s5 + $0x34] sm:$0xf]
      %v822 = vld [vmem:[%s5 + $0x38] sm:$0xf]
      %v823 = vld [vmem:[%s5 + $0x3c] sm:$0xf]
      %v824 = vld [vmem:[%s6] sm:$0x1]
      %v826 = vperm.slane %v824, 0
      %v844 = vunpack.c.l.b16 %v808
      %v845 = vunpack.c.l.b16 %v809
      %v846 = vunpack.c.l.b16 %v810
      %v847 = vunpack.c.l.b16 %v811
      %v848 = vunpack.c.l.b16 %v812
      %v849 = vunpack.c.l.b16 %v813
      %v850 = vunpack.c.l.b16 %v814
      %v851 = vunpack.c.l.b16 %v815
      %v852 = vunpack.c.l.b16 %v816
      %v853 = vunpack.c.l.b16 %v817
      %v854 = vunpack.c.l.b16 %v818
      %v855 = vunpack.c.l.b16 %v819
      %v856 = vunpack.c.l.b16 %v820
      %v857 = vunpack.c.l.b16 %v821
      %v858 = vunpack.c.l.b16 %v822
      %v859 = vunpack.c.l.b16 %v823
      %v860 = vpack.c.b16 %v845, %v844
      %v861 = vpack.c.b16 %v847, %v846
      %v862 = vpack.c.b16 %v849, %v848
      %v863 = vpack.c.b16 %v851, %v850
      %v864 = vpack.c.b16 %v853, %v852
      %v865 = vpack.c.b16 %v855, %v854
      %v866 = vpack.c.b16 %v857, %v856
      %v867 = vpack.c.b16 %v859, %v858
      %876 = vmatpush.bf16.msra.mxu0 %v867
      %877 = vmatpush.bf16.msra.mxu0 %v866
      %878 = vmatpush.bf16.msra.mxu0 %v865
      %879 = vmatpush.bf16.msra.mxu0 %v864
      %880 = vmatpush.bf16.msra.mxu0 %v863
      %881 = vmatpush.bf16.msra.mxu0 %v862
      %882 = vmatpush.bf16.msra.mxu0 %v861
      %883 = vmatpush.bf16.msra.mxu0 %v860
      %884 = vmatmul.bf16.gmra.mxu0 %v807
      %v885 = vpop.f32.mrf.mxu0
      %v886 = vadd.f32 %v826, %v885
      %v887 = vpop.f32.mrf.mxu0
      %v888 = vadd.f32 %v826, %v887
      %889 = vdwg.mxu0
      %v890 = vmax.f32 %v886, 0.0
      %v891 = vmax.f32 %v888, 0.0
      %v892 = vpack.c.bf16 %v891, %v890
      %v893 = vld [vmem:[%s7] sm:$0xf]
      %v894 = vld [vmem:[%s7 + $0x4] sm:$0xf]
      %v895 = vld [vmem:[%s7 + $0x8] sm:$0xf]
      %v896 = vld [vmem:[%s7 + $0xc] sm:$0xf]
      %v897 = vld [vmem:[%s7 + $0x10] sm:$0xf]
      %v898 = vld [vmem:[%s7 + $0x14] sm:$0xf]
      %v899 = vld [vmem:[%s7 + $0x18] sm:$0xf]
      %v900 = vld [vmem:[%s7 + $0x1c] sm:$0xf]
      %v901 = vld [vmem:[%s7 + $0x20] sm:$0xf]
      %v902 = vld [vmem:[%s7 + $0x24] sm:$0xf]
      %v903 = vld [vmem:[%s7 + $0x28] sm:$0xf]
      %v904 = vld [vmem:[%s7 + $0x2c] sm:$0xf]
      %v905 = vld [vmem:[%s7 + $0x30] sm:$0xf]
      %v906 = vld [vmem:[%s7 + $0x34] sm:$0xf]
      %v907 = vld [vmem:[%s7 + $0x38] sm:$0xf]
      %v908 = vld [vmem:[%s7 + $0x3c] sm:$0xf]
      %v925 = vunpack.c.l.b16 %v893
      %v926 = vunpack.c.l.b16 %v894
      %v927 = vunpack.c.l.b16 %v895
      %v928 = vunpack.c.l.b16 %v896
      %v929 = vunpack.c.l.b16 %v897
      %v930 = vunpack.c.l.b16 %v898
      %v931 = vunpack.c.l.b16 %v899
      %v932 = vunpack.c.l.b16 %v900
      %v933 = vunpack.c.l.b16 %v901
      %v934 = vunpack.c.l.b16 %v902
      %v935 = vunpack.c.l.b16 %v903
      %v936 = vunpack.c.l.b16 %v904
      %v937 = vunpack.c.l.b16 %v905
      %v938 = vunpack.c.l.b16 %v906
      %v939 = vunpack.c.l.b16 %v907
      %v940 = vunpack.c.l.b16 %v908
      %v941 = vpack.c.b16 %v926, %v925
      %v942 = vpack.c.b16 %v928, %v927
      %v943 = vpack.c.b16 %v930, %v929
      %v944 = vpack.c.b16 %v932, %v931
      %v945 = vpack.c.b16 %v934, %v933
      %v946 = vpack.c.b16 %v936, %v935
      %v947 = vpack.c.b16 %v938, %v937
      %v948 = vpack.c.b16 %v940, %v939
      %957 = vmatpush.bf16.msra.mxu0 %v948
      %958 = vmatpush.bf16.msra.mxu0 %v947
      %959 = vmatpush.bf16.msra.mxu0 %v946
      %960 = vmatpush.bf16.msra.mxu0 %v945
      %961 = vmatpush.bf16.msra.mxu0 %v944
      %962 = vmatpush.bf16.msra.mxu0 %v943
      %963 = vmatpush.bf16.msra.mxu0 %v942
      %964 = vmatpush.bf16.msra.mxu0 %v941
      %965 = vmatmul.bf16.gmra.mxu0 %v892
      %v966 = vpop.f32.mrf.mxu0
      %v967 = vadd.f32 0.0, %v966
      %v968 = vpop.f32.mrf.mxu0
      %v969 = vadd.f32 0.0, %v968
      %970 = vdwg.mxu0
      %v971 = vadd.f32 %v802, %v967
      %v972 = vadd.f32 %v805, %v969
      %v973 = vld [vmem:[%s8] sm:$0x1]
      %v975 = vperm.slane %v973, 0
      %v977 = vadd.f32 %v971, %v975
      %v978 = vadd.f32 %v972, %v975
      %v979 = vpack.c.bf16 %v978, %v977
      %s980 = scalar_lea.vmem %s5, 64
      %v981 = vld [vmem:[%s980] sm:$0xf]
      %v982 = vld [vmem:[%s980 + $0x4] sm:$0xf]
      %v983 = vld [vmem:[%s980 + $0x8] sm:$0xf]
      %v984 = vld [vmem:[%s980 + $0xc] sm:$0xf]
      %v985 = vld [vmem:[%s980 + $0x10] sm:$0xf]
      %v986 = vld [vmem:[%s980 + $0x14] sm:$0xf]
      %v987 = vld [vmem:[%s980 + $0x18] sm:$0xf]
      %v988 = vld [vmem:[%s980 + $0x1c] sm:$0xf]
      %v989 = vld [vmem:[%s980 + $0x20] sm:$0xf]
      %v990 = vld [vmem:[%s980 + $0x24] sm:$0xf]
      %v991 = vld [vmem:[%s980 + $0x28] sm:$0xf]
      %v992 = vld [vmem:[%s980 + $0x2c] sm:$0xf]
      %v993 = vld [vmem:[%s980 + $0x30] sm:$0xf]
      %v994 = vld [vmem:[%s980 + $0x34] sm:$0xf]
      %v995 = vld [vmem:[%s980 + $0x38] sm:$0xf]
      %v996 = vld [vmem:[%s980 + $0x3c] sm:$0xf]
      %s997 = scalar_lea.vmem %s6, 1
      %v998 = vld [vmem:[%s997] sm:$0x1]
      %v1000 = vperm.slane %v998, 0
      %v1018 = vunpack.c.l.b16 %v981
      %v1019 = vunpack.c.l.b16 %v982
      %v1020 = vunpack.c.l.b16 %v983
      %v1021 = vunpack.c.l.b16 %v984
      %v1022 = vunpack.c.l.b16 %v985
      %v1023 = vunpack.c.l.b16 %v986
      %v1024 = vunpack.c.l.b16 %v987
      %v1025 = vunpack.c.l.b16 %v988
      %v1026 = vunpack.c.l.b16 %v989
      %v1027 = vunpack.c.l.b16 %v990
      %v1028 = vunpack.c.l.b16 %v991
      %v1029 = vunpack.c.l.b16 %v992
      %v1030 = vunpack.c.l.b16 %v993
      %v1031 = vunpack.c.l.b16 %v994
      %v1032 = vunpack.c.l.b16 %v995
      %v1033 = vunpack.c.l.b16 %v996
      %v1034 = vpack.c.b16 %v1019, %v1018
      %v1035 = vpack.c.b16 %v1021, %v1020
      %v1036 = vpack.c.b16 %v1023, %v1022
      %v1037 = vpack.c.b16 %v1025, %v1024
      %v1038 = vpack.c.b16 %v1027, %v1026
      %v1039 = vpack.c.b16 %v1029, %v1028
      %v1040 = vpack.c.b16 %v1031, %v1030
      %v1041 = vpack.c.b16 %v1033, %v1032
      %1050 = vmatpush.bf16.msra.mxu0 %v1041
      %1051 = vmatpush.bf16.msra.mxu0 %v1040
      %1052 = vmatpush.bf16.msra.mxu0 %v1039
      %1053 = vmatpush.bf16.msra.mxu0 %v1038
      %1054 = vmatpush.bf16.msra.mxu0 %v1037
      %1055 = vmatpush.bf16.msra.mxu0 %v1036
      %1056 = vmatpush.bf16.msra.mxu0 %v1035
      %1057 = vmatpush.bf16.msra.mxu0 %v1034
      %1058 = vmatmul.bf16.gmra.mxu0 %v979
      %v1059 = vpop.f32.mrf.mxu0
      %v1060 = vadd.f32 %v1000, %v1059
      %v1061 = vpop.f32.mrf.mxu0
      %v1062 = vadd.f32 %v1000, %v1061
      %1063 = vdwg.mxu0
      %v1064 = vmax.f32 %v1060, 0.0
      %v1065 = vmax.f32 %v1062, 0.0
      %v1066 = vpack.c.bf16 %v1065, %v1064
      %s1067 = scalar_lea.vmem %s7, 64
      %v1068 = vld [vmem:[%s1067] sm:$0xf]
      %v1069 = vld [vmem:[%s1067 + $0x4] sm:$0xf]
      %v1070 = vld [vmem:[%s1067 + $0x8] sm:$0xf]
      %v1071 = vld [vmem:[%s1067 + $0xc] sm:$0xf]
      %v1072 = vld [vmem:[%s1067 + $0x10] sm:$0xf]
      %v1073 = vld [vmem:[%s1067 + $0x14] sm:$0xf]
      %v1074 = vld [vmem:[%s1067 + $0x18] sm:$0xf]
      %v1075 = vld [vmem:[%s1067 + $0x1c] sm:$0xf]
      %v1076 = vld [vmem:[%s1067 + $0x20] sm:$0xf]
      %v1077 = vld [vmem:[%s1067 + $0x24] sm:$0xf]
      %v1078 = vld [vmem:[%s1067 + $0x28] sm:$0xf]
      %v1079 = vld [vmem:[%s1067 + $0x2c] sm:$0xf]
      %v1080 = vld [vmem:[%s1067 + $0x30] sm:$0xf]
      %v1081 = vld [vmem:[%s1067 + $0x34] sm:$0xf]
      %v1082 = vld [vmem:[%s1067 + $0x38] sm:$0xf]
      %v1083 = vld [vmem:[%s1067 + $0x3c] sm:$0xf]
      %v1100 = vunpack.c.l.b16 %v1068
      %v1101 = vunpack.c.l.b16 %v1069
      %v1102 = vunpack.c.l.b16 %v1070
      %v1103 = vunpack.c.l.b16 %v1071
      %v1104 = vunpack.c.l.b16 %v1072
      %v1105 = vunpack.c.l.b16 %v1073
      %v1106 = vunpack.c.l.b16 %v1074
      %v1107 = vunpack.c.l.b16 %v1075
      %v1108 = vunpack.c.l.b16 %v1076
      %v1109 = vunpack.c.l.b16 %v1077
      %v1110 = vunpack.c.l.b16 %v1078
      %v1111 = vunpack.c.l.b16 %v1079
      %v1112 = vunpack.c.l.b16 %v1080
      %v1113 = vunpack.c.l.b16 %v1081
      %v1114 = vunpack.c.l.b16 %v1082
      %v1115 = vunpack.c.l.b16 %v1083
      %v1116 = vpack.c.b16 %v1101, %v1100
      %v1117 = vpack.c.b16 %v1103, %v1102
      %v1118 = vpack.c.b16 %v1105, %v1104
      %v1119 = vpack.c.b16 %v1107, %v1106
      %v1120 = vpack.c.b16 %v1109, %v1108
      %v1121 = vpack.c.b16 %v1111, %v1110
      %v1122 = vpack.c.b16 %v1113, %v1112
      %v1123 = vpack.c.b16 %v1115, %v1114
      %1132 = vmatpush.bf16.msra.mxu0 %v1123
      %1133 = vmatpush.bf16.msra.mxu0 %v1122
      %1134 = vmatpush.bf16.msra.mxu0 %v1121
      %1135 = vmatpush.bf16.msra.mxu0 %v1120
      %1136 = vmatpush.bf16.msra.mxu0 %v1119
      %1137 = vmatpush.bf16.msra.mxu0 %v1118
      %1138 = vmatpush.bf16.msra.mxu0 %v1117
      %1139 = vmatpush.bf16.msra.mxu0 %v1116
      %1140 = vmatmul.bf16.gmra.mxu0 %v1066
      %v1141 = vpop.f32.mrf.mxu0
      %v1142 = vadd.f32 0.0, %v1141
      %v1143 = vpop.f32.mrf.mxu0
      %v1144 = vadd.f32 0.0, %v1143
      %1145 = vdwg.mxu0
      %v1146 = vadd.f32 %v977, %v1142
      %v1147 = vadd.f32 %v978, %v1144
      %s1148 = scalar_lea.vmem %s8, 1
      %v1149 = vld [vmem:[%s1148] sm:$0x1]
      %v1151 = vperm.slane %v1149, 0
      %v1153 = vadd.f32 %v1146, %v1151
      %v1154 = vadd.f32 %v1147, %v1151
      %v1155 = vpack.c.bf16 %v1154, %v1153
      %v1156 = vld [vmem:[%s9] sm:$0xf]
      %v1157 = vld [vmem:[%s9 + $0x4] sm:$0xf]
      %v1158 = vld [vmem:[%s9 + $0x8] sm:$0xf]
      %v1159 = vld [vmem:[%s9 + $0xc] sm:$0xf]
      %v1160 = vld [vmem:[%s9 + $0x10] sm:$0xf]
      %v1161 = vld [vmem:[%s9 + $0x14] sm:$0xf]
      %v1162 = vld [vmem:[%s9 + $0x18] sm:$0xf]
      %v1163 = vld [vmem:[%s9 + $0x1c] sm:$0xf]
      %v1164 = vld [vmem:[%s9 + $0x20] sm:$0xf]
      %v1165 = vld [vmem:[%s9 + $0x24] sm:$0xf]
      %v1166 = vld [vmem:[%s9 + $0x28] sm:$0xf]
      %v1167 = vld [vmem:[%s9 + $0x2c] sm:$0xf]
      %v1168 = vld [vmem:[%s9 + $0x30] sm:$0xf]
      %v1169 = vld [vmem:[%s9 + $0x34] sm:$0xf]
      %v1170 = vld [vmem:[%s9 + $0x38] sm:$0xf]
      %v1171 = vld [vmem:[%s9 + $0x3c] sm:$0xf]
      %v1172 = vld [vmem:[%s10] sm:$0x1]
      %v1174 = vperm.slane %v1172, 0
      %v1192 = vunpack.c.l.b16 %v1156
      %v1193 = vunpack.c.l.b16 %v1157
      %v1194 = vunpack.c.l.b16 %v1158
      %v1195 = vunpack.c.l.b16 %v1159
      %v1196 = vunpack.c.l.b16 %v1160
      %v1197 = vunpack.c.l.b16 %v1161
      %v1198 = vunpack.c.l.b16 %v1162
      %v1199 = vunpack.c.l.b16 %v1163
      %v1200 = vunpack.c.l.b16 %v1164
      %v1201 = vunpack.c.l.b16 %v1165
      %v1202 = vunpack.c.l.b16 %v1166
      %v1203 = vunpack.c.l.b16 %v1167
      %v1204 = vunpack.c.l.b16 %v1168
      %v1205 = vunpack.c.l.b16 %v1169
      %v1206 = vunpack.c.l.b16 %v1170
      %v1207 = vunpack.c.l.b16 %v1171
      %v1208 = vpack.c.b16 %v1193, %v1192
      %v1209 = vpack.c.b16 %v1195, %v1194
      %v1210 = vpack.c.b16 %v1197, %v1196
      %v1211 = vpack.c.b16 %v1199, %v1198
      %v1212 = vpack.c.b16 %v1201, %v1200
      %v1213 = vpack.c.b16 %v1203, %v1202
      %v1214 = vpack.c.b16 %v1205, %v1204
      %v1215 = vpack.c.b16 %v1207, %v1206
      %1224 = vmatpush.bf16.msra.mxu0 %v1215
      %1225 = vmatpush.bf16.msra.mxu0 %v1214
      %1226 = vmatpush.bf16.msra.mxu0 %v1213
      %1227 = vmatpush.bf16.msra.mxu0 %v1212
      %1228 = vmatpush.bf16.msra.mxu0 %v1211
      %1229 = vmatpush.bf16.msra.mxu0 %v1210
      %1230 = vmatpush.bf16.msra.mxu0 %v1209
      %1231 = vmatpush.bf16.msra.mxu0 %v1208
      %1232 = vmatmul.bf16.gmra.mxu0 %v1155
      %v1233 = vpop.f32.mrf.mxu0
      %v1234 = vadd.f32 %v1174, %v1233
      %v1235 = vpop.f32.mrf.mxu0
      %v1236 = vadd.f32 %v1174, %v1235
      %1237 = vdwg.mxu0
      %v1238 = vld [vmem:[%s3] sm:$0xff]
      %v1239 = vld [vmem:[%s3 + $0x8] sm:$0xff]
      %v1240 = vld [vmem:[%s3 + $0x10] sm:$0xff]
      %v1241 = vld [vmem:[%s3 + $0x18] sm:$0xff]
      %v1242 = vld [vmem:[%s3 + $0x20] sm:$0xff]
      %v1243 = vld [vmem:[%s3 + $0x28] sm:$0xff]
      %v1244 = vld [vmem:[%s3 + $0x30] sm:$0xff]
      %v1245 = vld [vmem:[%s3 + $0x38] sm:$0xff]
      %v1246 = vld [vmem:[%s3 + $0x40] sm:$0xff]
      %v1247 = vld [vmem:[%s3 + $0x48] sm:$0xff]
      %v1248 = vld [vmem:[%s3 + $0x50] sm:$0xff]
      %v1249 = vld [vmem:[%s3 + $0x58] sm:$0xff]
      %v1250 = vld [vmem:[%s3 + $0x60] sm:$0xff]
      %v1251 = vld [vmem:[%s3 + $0x68] sm:$0xff]
      %v1252 = vld [vmem:[%s3 + $0x70] sm:$0xff]
      %v1253 = vld [vmem:[%s3 + $0x78] sm:$0xff]
      %1254 = vmatpush.msra.mxu0 %v1253
      %1255 = vmatpush.msra.mxu0 %v1252
      %1256 = vmatpush.msra.mxu0 %v1251
      %1257 = vmatpush.msra.mxu0 %v1250
      %1258 = vmatpush.msra.mxu0 %v1249
      %1259 = vmatpush.msra.mxu0 %v1248
      %1260 = vmatpush.msra.mxu0 %v1247
      %1261 = vmatpush.msra.mxu0 %v1246
      %1262 = vmatpush.msra.mxu0 %v1245
      %1263 = vmatpush.msra.mxu0 %v1244
      %1264 = vmatpush.msra.mxu0 %v1243
      %1265 = vmatpush.msra.mxu0 %v1242
      %1266 = vmatpush.msra.mxu0 %v1241
      %1267 = vmatpush.msra.mxu0 %v1240
      %1268 = vmatpush.msra.mxu0 %v1239
      %1269 = vmatpush.msra.mxu0 %v1238
      %1270 = vmatmul.f32.gmra.mxu0 %v1234
      %v1271 = vpop.f32.mrf.mxu0
      %v1272 = vadd.f32 0.0, %v1271
      %1273 = vmatmul.f32.gmra.mxu0 %v1236
      %v1274 = vpop.f32.mrf.mxu0
      %v1275 = vadd.f32 0.0, %v1274
      %1276 = vdwg.mxu0
      %v1277 = vadd.f32 %v802, %v1272
      %v1278 = vadd.f32 %v805, %v1275
      %v1279 = vpack.c.bf16 %v1278, %v1277
      %v1280 = vld [vmem:[%s11] sm:$0xf]
      %v1281 = vld [vmem:[%s11 + $0x4] sm:$0xf]
      %v1282 = vld [vmem:[%s11 + $0x8] sm:$0xf]
      %v1283 = vld [vmem:[%s11 + $0xc] sm:$0xf]
      %v1284 = vld [vmem:[%s11 + $0x10] sm:$0xf]
      %v1285 = vld [vmem:[%s11 + $0x14] sm:$0xf]
      %v1286 = vld [vmem:[%s11 + $0x18] sm:$0xf]
      %v1287 = vld [vmem:[%s11 + $0x1c] sm:$0xf]
      %v1288 = vld [vmem:[%s11 + $0x20] sm:$0xf]
      %v1289 = vld [vmem:[%s11 + $0x24] sm:$0xf]
      %v1290 = vld [vmem:[%s11 + $0x28] sm:$0xf]
      %v1291 = vld [vmem:[%s11 + $0x2c] sm:$0xf]
      %v1292 = vld [vmem:[%s11 + $0x30] sm:$0xf]
      %v1293 = vld [vmem:[%s11 + $0x34] sm:$0xf]
      %v1294 = vld [vmem:[%s11 + $0x38] sm:$0xf]
      %v1295 = vld [vmem:[%s11 + $0x3c] sm:$0xf]
      %v1296 = vld [vmem:[%s12] sm:$0x1]
      %v1298 = vperm.slane %v1296, 0
      %v1316 = vunpack.c.l.b16 %v1280
      %v1317 = vunpack.c.l.b16 %v1281
      %v1318 = vunpack.c.l.b16 %v1282
      %v1319 = vunpack.c.l.b16 %v1283
      %v1320 = vunpack.c.l.b16 %v1284
      %v1321 = vunpack.c.l.b16 %v1285
      %v1322 = vunpack.c.l.b16 %v1286
      %v1323 = vunpack.c.l.b16 %v1287
      %v1324 = vunpack.c.l.b16 %v1288
      %v1325 = vunpack.c.l.b16 %v1289
      %v1326 = vunpack.c.l.b16 %v1290
      %v1327 = vunpack.c.l.b16 %v1291
      %v1328 = vunpack.c.l.b16 %v1292
      %v1329 = vunpack.c.l.b16 %v1293
      %v1330 = vunpack.c.l.b16 %v1294
      %v1331 = vunpack.c.l.b16 %v1295
      %v1332 = vpack.c.b16 %v1317, %v1316
      %v1333 = vpack.c.b16 %v1319, %v1318
      %v1334 = vpack.c.b16 %v1321, %v1320
      %v1335 = vpack.c.b16 %v1323, %v1322
      %v1336 = vpack.c.b16 %v1325, %v1324
      %v1337 = vpack.c.b16 %v1327, %v1326
      %v1338 = vpack.c.b16 %v1329, %v1328
      %v1339 = vpack.c.b16 %v1331, %v1330
      %1348 = vmatpush.bf16.msra.mxu0 %v1339
      %1349 = vmatpush.bf16.msra.mxu0 %v1338
      %1350 = vmatpush.bf16.msra.mxu0 %v1337
      %1351 = vmatpush.bf16.msra.mxu0 %v1336
      %1352 = vmatpush.bf16.msra.mxu0 %v1335
      %1353 = vmatpush.bf16.msra.mxu0 %v1334
      %1354 = vmatpush.bf16.msra.mxu0 %v1333
      %1355 = vmatpush.bf16.msra.mxu0 %v1332
      %1356 = vmatmul.bf16.gmra.mxu0 %v1279
      %v1357 = vpop.f32.mrf.mxu0
      %v1358 = vadd.f32 %v1298, %v1357
      %v1359 = vpop.f32.mrf.mxu0
      %v1360 = vadd.f32 %v1298, %v1359
      %1361 = vdwg.mxu0
      %v1362 = vmax.f32 %v1358, 0.0
      %v1363 = vmax.f32 %v1360, 0.0
      %v1364 = vpack.c.bf16 %v1363, %v1362
      %v1365 = vld [vmem:[%s13] sm:$0xf]
      %v1366 = vld [vmem:[%s13 + $0x4] sm:$0xf]
      %v1367 = vld [vmem:[%s13 + $0x8] sm:$0xf]
      %v1368 = vld [vmem:[%s13 + $0xc] sm:$0xf]
      %v1369 = vld [vmem:[%s13 + $0x10] sm:$0xf]
      %v1370 = vld [vmem:[%s13 + $0x14] sm:$0xf]
      %v1371 = vld [vmem:[%s13 + $0x18] sm:$0xf]
      %v1372 = vld [vmem:[%s13 + $0x1c] sm:$0xf]
      %v1373 = vld [vmem:[%s13 + $0x20] sm:$0xf]
      %v1374 = vld [vmem:[%s13 + $0x24] sm:$0xf]
      %v1375 = vld [vmem:[%s13 + $0x28] sm:$0xf]
      %v1376 = vld [vmem:[%s13 + $0x2c] sm:$0xf]
      %v1377 = vld [vmem:[%s13 + $0x30] sm:$0xf]
      %v1378 = vld [vmem:[%s13 + $0x34] sm:$0xf]
      %v1379 = vld [vmem:[%s13 + $0x38] sm:$0xf]
      %v1380 = vld [vmem:[%s13 + $0x3c] sm:$0xf]
      %v1397 = vunpack.c.l.b16 %v1365
      %v1398 = vunpack.c.l.b16 %v1366
      %v1399 = vunpack.c.l.b16 %v1367
      %v1400 = vunpack.c.l.b16 %v1368
      %v1401 = vunpack.c.l.b16 %v1369
      %v1402 = vunpack.c.l.b16 %v1370
      %v1403 = vunpack.c.l.b16 %v1371
      %v1404 = vunpack.c.l.b16 %v1372
      %v1405 = vunpack.c.l.b16 %v1373
      %v1406 = vunpack.c.l.b16 %v1374
      %v1407 = vunpack.c.l.b16 %v1375
      %v1408 = vunpack.c.l.b16 %v1376
      %v1409 = vunpack.c.l.b16 %v1377
      %v1410 = vunpack.c.l.b16 %v1378
      %v1411 = vunpack.c.l.b16 %v1379
      %v1412 = vunpack.c.l.b16 %v1380
      %v1413 = vpack.c.b16 %v1398, %v1397
      %v1414 = vpack.c.b16 %v1400, %v1399
      %v1415 = vpack.c.b16 %v1402, %v1401
      %v1416 = vpack.c.b16 %v1404, %v1403
      %v1417 = vpack.c.b16 %v1406, %v1405
      %v1418 = vpack.c.b16 %v1408, %v1407
      %v1419 = vpack.c.b16 %v1410, %v1409
      %v1420 = vpack.c.b16 %v1412, %v1411
      %1429 = vmatpush.bf16.msra.mxu0 %v1420
      %1430 = vmatpush.bf16.msra.mxu0 %v1419
      %1431 = vmatpush.bf16.msra.mxu0 %v1418
      %1432 = vmatpush.bf16.msra.mxu0 %v1417
      %1433 = vmatpush.bf16.msra.mxu0 %v1416
      %1434 = vmatpush.bf16.msra.mxu0 %v1415
      %1435 = vmatpush.bf16.msra.mxu0 %v1414
      %1436 = vmatpush.bf16.msra.mxu0 %v1413
      %1437 = vmatmul.bf16.gmra.mxu0 %v1364
      %v1438 = vpop.f32.mrf.mxu0
      %v1439 = vadd.f32 0.0, %v1438
      %v1440 = vpop.f32.mrf.mxu0
      %v1441 = vadd.f32 0.0, %v1440
      %1442 = vdwg.mxu0
      %v1443 = vadd.f32 %v1277, %v1439
      %v1444 = vadd.f32 %v1278, %v1441
      %v1445 = vld [vmem:[%s14] sm:$0x1]
      %v1447 = vperm.slane %v1445, 0
      %v1449 = vadd.f32 %v1443, %v1447
      %v1450 = vadd.f32 %v1444, %v1447
      %v1451 = vpack.c.bf16 %v1450, %v1449
      %s1452 = scalar_lea.vmem %s11, 64
      %v1453 = vld [vmem:[%s1452] sm:$0xf]
      %v1454 = vld [vmem:[%s1452 + $0x4] sm:$0xf]
      %v1455 = vld [vmem:[%s1452 + $0x8] sm:$0xf]
      %v1456 = vld [vmem:[%s1452 + $0xc] sm:$0xf]
      %v1457 = vld [vmem:[%s1452 + $0x10] sm:$0xf]
      %v1458 = vld [vmem:[%s1452 + $0x14] sm:$0xf]
      %v1459 = vld [vmem:[%s1452 + $0x18] sm:$0xf]
      %v1460 = vld [vmem:[%s1452 + $0x1c] sm:$0xf]
      %v1461 = vld [vmem:[%s1452 + $0x20] sm:$0xf]
      %v1462 = vld [vmem:[%s1452 + $0x24] sm:$0xf]
      %v1463 = vld [vmem:[%s1452 + $0x28] sm:$0xf]
      %v1464 = vld [vmem:[%s1452 + $0x2c] sm:$0xf]
      %v1465 = vld [vmem:[%s1452 + $0x30] sm:$0xf]
      %v1466 = vld [vmem:[%s1452 + $0x34] sm:$0xf]
      %v1467 = vld [vmem:[%s1452 + $0x38] sm:$0xf]
      %v1468 = vld [vmem:[%s1452 + $0x3c] sm:$0xf]
      %s1469 = scalar_lea.vmem %s12, 1
      %v1470 = vld [vmem:[%s1469] sm:$0x1]
      %v1472 = vperm.slane %v1470, 0
      %v1490 = vunpack.c.l.b16 %v1453
      %v1491 = vunpack.c.l.b16 %v1454
      %v1492 = vunpack.c.l.b16 %v1455
      %v1493 = vunpack.c.l.b16 %v1456
      %v1494 = vunpack.c.l.b16 %v1457
      %v1495 = vunpack.c.l.b16 %v1458
      %v1496 = vunpack.c.l.b16 %v1459
      %v1497 = vunpack.c.l.b16 %v1460
      %v1498 = vunpack.c.l.b16 %v1461
      %v1499 = vunpack.c.l.b16 %v1462
      %v1500 = vunpack.c.l.b16 %v1463
      %v1501 = vunpack.c.l.b16 %v1464
      %v1502 = vunpack.c.l.b16 %v1465
      %v1503 = vunpack.c.l.b16 %v1466
      %v1504 = vunpack.c.l.b16 %v1467
      %v1505 = vunpack.c.l.b16 %v1468
      %v1506 = vpack.c.b16 %v1491, %v1490
      %v1507 = vpack.c.b16 %v1493, %v1492
      %v1508 = vpack.c.b16 %v1495, %v1494
      %v1509 = vpack.c.b16 %v1497, %v1496
      %v1510 = vpack.c.b16 %v1499, %v1498
      %v1511 = vpack.c.b16 %v1501, %v1500
      %v1512 = vpack.c.b16 %v1503, %v1502
      %v1513 = vpack.c.b16 %v1505, %v1504
      %1522 = vmatpush.bf16.msra.mxu0 %v1513
      %1523 = vmatpush.bf16.msra.mxu0 %v1512
      %1524 = vmatpush.bf16.msra.mxu0 %v1511
      %1525 = vmatpush.bf16.msra.mxu0 %v1510
      %1526 = vmatpush.bf16.msra.mxu0 %v1509
      %1527 = vmatpush.bf16.msra.mxu0 %v1508
      %1528 = vmatpush.bf16.msra.mxu0 %v1507
      %1529 = vmatpush.bf16.msra.mxu0 %v1506
      %1530 = vmatmul.bf16.gmra.mxu0 %v1451
      %v1531 = vpop.f32.mrf.mxu0
      %v1532 = vadd.f32 %v1472, %v1531
      %v1533 = vpop.f32.mrf.mxu0
      %v1534 = vadd.f32 %v1472, %v1533
      %1535 = vdwg.mxu0
      %v1536 = vmax.f32 %v1532, 0.0
      %v1537 = vmax.f32 %v1534, 0.0
      %v1538 = vpack.c.bf16 %v1537, %v1536
      %s1539 = scalar_lea.vmem %s13, 64
      %v1540 = vld [vmem:[%s1539] sm:$0xf]
      %v1541 = vld [vmem:[%s1539 + $0x4] sm:$0xf]
      %v1542 = vld [vmem:[%s1539 + $0x8] sm:$0xf]
      %v1543 = vld [vmem:[%s1539 + $0xc] sm:$0xf]
      %v1544 = vld [vmem:[%s1539 + $0x10] sm:$0xf]
      %v1545 = vld [vmem:[%s1539 + $0x14] sm:$0xf]
      %v1546 = vld [vmem:[%s1539 + $0x18] sm:$0xf]
      %v1547 = vld [vmem:[%s1539 + $0x1c] sm:$0xf]
      %v1548 = vld [vmem:[%s1539 + $0x20] sm:$0xf]
      %v1549 = vld [vmem:[%s1539 + $0x24] sm:$0xf]
      %v1550 = vld [vmem:[%s1539 + $0x28] sm:$0xf]
      %v1551 = vld [vmem:[%s1539 + $0x2c] sm:$0xf]
      %v1552 = vld [vmem:[%s1539 + $0x30] sm:$0xf]
      %v1553 = vld [vmem:[%s1539 + $0x34] sm:$0xf]
      %v1554 = vld [vmem:[%s1539 + $0x38] sm:$0xf]
      %v1555 = vld [vmem:[%s1539 + $0x3c] sm:$0xf]
      %v1572 = vunpack.c.l.b16 %v1540
      %v1573 = vunpack.c.l.b16 %v1541
      %v1574 = vunpack.c.l.b16 %v1542
      %v1575 = vunpack.c.l.b16 %v1543
      %v1576 = vunpack.c.l.b16 %v1544
      %v1577 = vunpack.c.l.b16 %v1545
      %v1578 = vunpack.c.l.b16 %v1546
      %v1579 = vunpack.c.l.b16 %v1547
      %v1580 = vunpack.c.l.b16 %v1548
      %v1581 = vunpack.c.l.b16 %v1549
      %v1582 = vunpack.c.l.b16 %v1550
      %v1583 = vunpack.c.l.b16 %v1551
      %v1584 = vunpack.c.l.b16 %v1552
      %v1585 = vunpack.c.l.b16 %v1553
      %v1586 = vunpack.c.l.b16 %v1554
      %v1587 = vunpack.c.l.b16 %v1555
      %v1588 = vpack.c.b16 %v1573, %v1572
      %v1589 = vpack.c.b16 %v1575, %v1574
      %v1590 = vpack.c.b16 %v1577, %v1576
      %v1591 = vpack.c.b16 %v1579, %v1578
      %v1592 = vpack.c.b16 %v1581, %v1580
      %v1593 = vpack.c.b16 %v1583, %v1582
      %v1594 = vpack.c.b16 %v1585, %v1584
      %v1595 = vpack.c.b16 %v1587, %v1586
      %1604 = vmatpush.bf16.msra.mxu0 %v1595
      %1605 = vmatpush.bf16.msra.mxu0 %v1594
      %1606 = vmatpush.bf16.msra.mxu0 %v1593
      %1607 = vmatpush.bf16.msra.mxu0 %v1592
      %1608 = vmatpush.bf16.msra.mxu0 %v1591
      %1609 = vmatpush.bf16.msra.mxu0 %v1590
      %1610 = vmatpush.bf16.msra.mxu0 %v1589
      %1611 = vmatpush.bf16.msra.mxu0 %v1588
      %1612 = vmatmul.bf16.gmra.mxu0 %v1538
      %v1613 = vpop.f32.mrf.mxu0
      %v1614 = vadd.f32 0.0, %v1613
      %v1615 = vpop.f32.mrf.mxu0
      %v1616 = vadd.f32 0.0, %v1615
      %1617 = vdwg.mxu0
      %v1618 = vadd.f32 %v1449, %v1614
      %v1619 = vadd.f32 %v1450, %v1616
      %s1620 = scalar_lea.vmem %s14, 1
      %v1621 = vld [vmem:[%s1620] sm:$0x1]
      %v1623 = vperm.slane %v1621, 0
      %v1625 = vadd.f32 %v1618, %v1623
      %v1626 = vadd.f32 %v1619, %v1623
      %v1627 = vpack.c.bf16 %v1626, %v1625
      %v1628 = vld [vmem:[%s15] sm:$0xf]
      %v1629 = vld [vmem:[%s15 + $0x4] sm:$0xf]
      %v1630 = vld [vmem:[%s15 + $0x8] sm:$0xf]
      %v1631 = vld [vmem:[%s15 + $0xc] sm:$0xf]
      %v1632 = vld [vmem:[%s15 + $0x10] sm:$0xf]
      %v1633 = vld [vmem:[%s15 + $0x14] sm:$0xf]
      %v1634 = vld [vmem:[%s15 + $0x18] sm:$0xf]
      %v1635 = vld [vmem:[%s15 + $0x1c] sm:$0xf]
      %v1636 = vld [vmem:[%s15 + $0x20] sm:$0xf]
      %v1637 = vld [vmem:[%s15 + $0x24] sm:$0xf]
      %v1638 = vld [vmem:[%s15 + $0x28] sm:$0xf]
      %v1639 = vld [vmem:[%s15 + $0x2c] sm:$0xf]
      %v1640 = vld [vmem:[%s15 + $0x30] sm:$0xf]
      %v1641 = vld [vmem:[%s15 + $0x34] sm:$0xf]
      %v1642 = vld [vmem:[%s15 + $0x38] sm:$0xf]
      %v1643 = vld [vmem:[%s15 + $0x3c] sm:$0xf]
      %v1644 = vld [vmem:[%s16] sm:$0x1]
      %v1646 = vperm.slane %v1644, 0
      %v1664 = vunpack.c.l.b16 %v1628
      %v1665 = vunpack.c.l.b16 %v1629
      %v1666 = vunpack.c.l.b16 %v1630
      %v1667 = vunpack.c.l.b16 %v1631
      %v1668 = vunpack.c.l.b16 %v1632
      %v1669 = vunpack.c.l.b16 %v1633
      %v1670 = vunpack.c.l.b16 %v1634
      %v1671 = vunpack.c.l.b16 %v1635
      %v1672 = vunpack.c.l.b16 %v1636
      %v1673 = vunpack.c.l.b16 %v1637
      %v1674 = vunpack.c.l.b16 %v1638
      %v1675 = vunpack.c.l.b16 %v1639
      %v1676 = vunpack.c.l.b16 %v1640
      %v1677 = vunpack.c.l.b16 %v1641
      %v1678 = vunpack.c.l.b16 %v1642
      %v1679 = vunpack.c.l.b16 %v1643
      %v1680 = vpack.c.b16 %v1665, %v1664
      %v1681 = vpack.c.b16 %v1667, %v1666
      %v1682 = vpack.c.b16 %v1669, %v1668
      %v1683 = vpack.c.b16 %v1671, %v1670
      %v1684 = vpack.c.b16 %v1673, %v1672
      %v1685 = vpack.c.b16 %v1675, %v1674
      %v1686 = vpack.c.b16 %v1677, %v1676
      %v1687 = vpack.c.b16 %v1679, %v1678
      %1696 = vmatpush.bf16.msra.mxu0 %v1687
      %1697 = vmatpush.bf16.msra.mxu0 %v1686
      %1698 = vmatpush.bf16.msra.mxu0 %v1685
      %1699 = vmatpush.bf16.msra.mxu0 %v1684
      %1700 = vmatpush.bf16.msra.mxu0 %v1683
      %1701 = vmatpush.bf16.msra.mxu0 %v1682
      %1702 = vmatpush.bf16.msra.mxu0 %v1681
      %1703 = vmatpush.bf16.msra.mxu0 %v1680
      %1704 = vmatmul.bf16.gmra.mxu0 %v1627
      %v1705 = vpop.f32.mrf.mxu0
      %v1706 = vadd.f32 %v1646, %v1705
      %v1707 = vpop.f32.mrf.mxu0
      %v1708 = vadd.f32 %v1646, %v1707
      %1709 = vdwg.mxu0
      %v1710 = vld [vmem:[%s4] sm:$0xff]
      %v1711 = vld [vmem:[%s4 + $0x8] sm:$0xff]
      %v1712 = vld [vmem:[%s4 + $0x10] sm:$0xff]
      %v1713 = vld [vmem:[%s4 + $0x18] sm:$0xff]
      %v1714 = vld [vmem:[%s4 + $0x20] sm:$0xff]
      %v1715 = vld [vmem:[%s4 + $0x28] sm:$0xff]
      %v1716 = vld [vmem:[%s4 + $0x30] sm:$0xff]
      %v1717 = vld [vmem:[%s4 + $0x38] sm:$0xff]
      %v1718 = vld [vmem:[%s4 + $0x40] sm:$0xff]
      %v1719 = vld [vmem:[%s4 + $0x48] sm:$0xff]
      %v1720 = vld [vmem:[%s4 + $0x50] sm:$0xff]
      %v1721 = vld [vmem:[%s4 + $0x58] sm:$0xff]
      %v1722 = vld [vmem:[%s4 + $0x60] sm:$0xff]
      %v1723 = vld [vmem:[%s4 + $0x68] sm:$0xff]
      %v1724 = vld [vmem:[%s4 + $0x70] sm:$0xff]
      %v1725 = vld [vmem:[%s4 + $0x78] sm:$0xff]
      %1726 = vmatpush.msra.mxu0 %v1725
      %1727 = vmatpush.msra.mxu0 %v1724
      %1728 = vmatpush.msra.mxu0 %v1723
      %1729 = vmatpush.msra.mxu0 %v1722
      %1730 = vmatpush.msra.mxu0 %v1721
      %1731 = vmatpush.msra.mxu0 %v1720
      %1732 = vmatpush.msra.mxu0 %v1719
      %1733 = vmatpush.msra.mxu0 %v1718
      %1734 = vmatpush.msra.mxu0 %v1717
      %1735 = vmatpush.msra.mxu0 %v1716
      %1736 = vmatpush.msra.mxu0 %v1715
      %1737 = vmatpush.msra.mxu0 %v1714
      %1738 = vmatpush.msra.mxu0 %v1713
      %1739 = vmatpush.msra.mxu0 %v1712
      %1740 = vmatpush.msra.mxu0 %v1711
      %1741 = vmatpush.msra.mxu0 %v1710
      %1742 = vmatmul.f32.gmra.mxu0 %v1706
      %v1743 = vpop.f32.mrf.mxu0
      %v1744 = vadd.f32 0.0, %v1743
      %1745 = vmatmul.f32.gmra.mxu0 %v1708
      %v1746 = vpop.f32.mrf.mxu0
      %v1747 = vadd.f32 0.0, %v1746
      %1748 = vdwg.mxu0
      %v1749 = vadd.f32 %v1234, %v1744
      %v1750 = vadd.f32 %v1236, %v1747
      %v1751 = vpack.c.bf16 %v1750, %v1749
      %v1752 = vld [vmem:[%s17] sm:$0xf]
      %v1753 = vld [vmem:[%s17 + $0x4] sm:$0xf]
      %v1754 = vld [vmem:[%s17 + $0x8] sm:$0xf]
      %v1755 = vld [vmem:[%s17 + $0xc] sm:$0xf]
      %v1756 = vld [vmem:[%s17 + $0x10] sm:$0xf]
      %v1757 = vld [vmem:[%s17 + $0x14] sm:$0xf]
      %v1758 = vld [vmem:[%s17 + $0x18] sm:$0xf]
      %v1759 = vld [vmem:[%s17 + $0x1c] sm:$0xf]
      %v1760 = vld [vmem:[%s17 + $0x20] sm:$0xf]
      %v1761 = vld [vmem:[%s17 + $0x24] sm:$0xf]
      %v1762 = vld [vmem:[%s17 + $0x28] sm:$0xf]
      %v1763 = vld [vmem:[%s17 + $0x2c] sm:$0xf]
      %v1764 = vld [vmem:[%s17 + $0x30] sm:$0xf]
      %v1765 = vld [vmem:[%s17 + $0x34] sm:$0xf]
      %v1766 = vld [vmem:[%s17 + $0x38] sm:$0xf]
      %v1767 = vld [vmem:[%s17 + $0x3c] sm:$0xf]
      %v1768 = vld [vmem:[%s18] sm:$0x1]
      %v1770 = vperm.slane %v1768, 0
      %v1788 = vunpack.c.l.b16 %v1752
      %v1789 = vunpack.c.l.b16 %v1753
      %v1790 = vunpack.c.l.b16 %v1754
      %v1791 = vunpack.c.l.b16 %v1755
      %v1792 = vunpack.c.l.b16 %v1756
      %v1793 = vunpack.c.l.b16 %v1757
      %v1794 = vunpack.c.l.b16 %v1758
      %v1795 = vunpack.c.l.b16 %v1759
      %v1796 = vunpack.c.l.b16 %v1760
      %v1797 = vunpack.c.l.b16 %v1761
      %v1798 = vunpack.c.l.b16 %v1762
      %v1799 = vunpack.c.l.b16 %v1763
      %v1800 = vunpack.c.l.b16 %v1764
      %v1801 = vunpack.c.l.b16 %v1765
      %v1802 = vunpack.c.l.b16 %v1766
      %v1803 = vunpack.c.l.b16 %v1767
      %v1804 = vpack.c.b16 %v1789, %v1788
      %v1805 = vpack.c.b16 %v1791, %v1790
      %v1806 = vpack.c.b16 %v1793, %v1792
      %v1807 = vpack.c.b16 %v1795, %v1794
      %v1808 = vpack.c.b16 %v1797, %v1796
      %v1809 = vpack.c.b16 %v1799, %v1798
      %v1810 = vpack.c.b16 %v1801, %v1800
      %v1811 = vpack.c.b16 %v1803, %v1802
      %1820 = vmatpush.bf16.msra.mxu0 %v1811
      %1821 = vmatpush.bf16.msra.mxu0 %v1810
      %1822 = vmatpush.bf16.msra.mxu0 %v1809
      %1823 = vmatpush.bf16.msra.mxu0 %v1808
      %1824 = vmatpush.bf16.msra.mxu0 %v1807
      %1825 = vmatpush.bf16.msra.mxu0 %v1806
      %1826 = vmatpush.bf16.msra.mxu0 %v1805
      %1827 = vmatpush.bf16.msra.mxu0 %v1804
      %1828 = vmatmul.bf16.gmra.mxu0 %v1751
      %v1829 = vpop.f32.mrf.mxu0
      %v1830 = vadd.f32 %v1770, %v1829
      %v1831 = vpop.f32.mrf.mxu0
      %v1832 = vadd.f32 %v1770, %v1831
      %1833 = vdwg.mxu0
      %v1834 = vmax.f32 %v1830, 0.0
      %v1835 = vmax.f32 %v1832, 0.0
      %v1836 = vpack.c.bf16 %v1835, %v1834
      %v1837 = vld [vmem:[%s19] sm:$0xf]
      %v1838 = vld [vmem:[%s19 + $0x4] sm:$0xf]
      %v1839 = vld [vmem:[%s19 + $0x8] sm:$0xf]
      %v1840 = vld [vmem:[%s19 + $0xc] sm:$0xf]
      %v1841 = vld [vmem:[%s19 + $0x10] sm:$0xf]
      %v1842 = vld [vmem:[%s19 + $0x14] sm:$0xf]
      %v1843 = vld [vmem:[%s19 + $0x18] sm:$0xf]
      %v1844 = vld [vmem:[%s19 + $0x1c] sm:$0xf]
      %v1845 = vld [vmem:[%s19 + $0x20] sm:$0xf]
      %v1846 = vld [vmem:[%s19 + $0x24] sm:$0xf]
      %v1847 = vld [vmem:[%s19 + $0x28] sm:$0xf]
      %v1848 = vld [vmem:[%s19 + $0x2c] sm:$0xf]
      %v1849 = vld [vmem:[%s19 + $0x30] sm:$0xf]
      %v1850 = vld [vmem:[%s19 + $0x34] sm:$0xf]
      %v1851 = vld [vmem:[%s19 + $0x38] sm:$0xf]
      %v1852 = vld [vmem:[%s19 + $0x3c] sm:$0xf]
      %v1869 = vunpack.c.l.b16 %v1837
      %v1870 = vunpack.c.l.b16 %v1838
      %v1871 = vunpack.c.l.b16 %v1839
      %v1872 = vunpack.c.l.b16 %v1840
      %v1873 = vunpack.c.l.b16 %v1841
      %v1874 = vunpack.c.l.b16 %v1842
      %v1875 = vunpack.c.l.b16 %v1843
      %v1876 = vunpack.c.l.b16 %v1844
      %v1877 = vunpack.c.l.b16 %v1845
      %v1878 = vunpack.c.l.b16 %v1846
      %v1879 = vunpack.c.l.b16 %v1847
      %v1880 = vunpack.c.l.b16 %v1848
      %v1881 = vunpack.c.l.b16 %v1849
      %v1882 = vunpack.c.l.b16 %v1850
      %v1883 = vunpack.c.l.b16 %v1851
      %v1884 = vunpack.c.l.b16 %v1852
      %v1885 = vpack.c.b16 %v1870, %v1869
      %v1886 = vpack.c.b16 %v1872, %v1871
      %v1887 = vpack.c.b16 %v1874, %v1873
      %v1888 = vpack.c.b16 %v1876, %v1875
      %v1889 = vpack.c.b16 %v1878, %v1877
      %v1890 = vpack.c.b16 %v1880, %v1879
      %v1891 = vpack.c.b16 %v1882, %v1881
      %v1892 = vpack.c.b16 %v1884, %v1883
      %1901 = vmatpush.bf16.msra.mxu0 %v1892
      %1902 = vmatpush.bf16.msra.mxu0 %v1891
      %1903 = vmatpush.bf16.msra.mxu0 %v1890
      %1904 = vmatpush.bf16.msra.mxu0 %v1889
      %1905 = vmatpush.bf16.msra.mxu0 %v1888
      %1906 = vmatpush.bf16.msra.mxu0 %v1887
      %1907 = vmatpush.bf16.msra.mxu0 %v1886
      %1908 = vmatpush.bf16.msra.mxu0 %v1885
      %1909 = vmatmul.bf16.gmra.mxu0 %v1836
      %v1910 = vpop.f32.mrf.mxu0
      %v1911 = vadd.f32 0.0, %v1910
      %v1912 = vpop.f32.mrf.mxu0
      %v1913 = vadd.f32 0.0, %v1912
      %1914 = vdwg.mxu0
      %v1915 = vadd.f32 %v1749, %v1911
      %v1916 = vadd.f32 %v1750, %v1913
      %v1917 = vld [vmem:[%s20] sm:$0x1]
      %v1919 = vperm.slane %v1917, 0
      %v1921 = vadd.f32 %v1915, %v1919
      %v1922 = vadd.f32 %v1916, %v1919
      %v1923 = vpack.c.bf16 %v1922, %v1921
      %s1924 = scalar_lea.vmem %s17, 64
      %v1925 = vld [vmem:[%s1924] sm:$0xf]
      %v1926 = vld [vmem:[%s1924 + $0x4] sm:$0xf]
      %v1927 = vld [vmem:[%s1924 + $0x8] sm:$0xf]
      %v1928 = vld [vmem:[%s1924 + $0xc] sm:$0xf]
      %v1929 = vld [vmem:[%s1924 + $0x10] sm:$0xf]
      %v1930 = vld [vmem:[%s1924 + $0x14] sm:$0xf]
      %v1931 = vld [vmem:[%s1924 + $0x18] sm:$0xf]
      %v1932 = vld [vmem:[%s1924 + $0x1c] sm:$0xf]
      %v1933 = vld [vmem:[%s1924 + $0x20] sm:$0xf]
      %v1934 = vld [vmem:[%s1924 + $0x24] sm:$0xf]
      %v1935 = vld [vmem:[%s1924 + $0x28] sm:$0xf]
      %v1936 = vld [vmem:[%s1924 + $0x2c] sm:$0xf]
      %v1937 = vld [vmem:[%s1924 + $0x30] sm:$0xf]
      %v1938 = vld [vmem:[%s1924 + $0x34] sm:$0xf]
      %v1939 = vld [vmem:[%s1924 + $0x38] sm:$0xf]
      %v1940 = vld [vmem:[%s1924 + $0x3c] sm:$0xf]
      %s1941 = scalar_lea.vmem %s18, 1
      %v1942 = vld [vmem:[%s1941] sm:$0x1]
      %v1944 = vperm.slane %v1942, 0
      %v1962 = vunpack.c.l.b16 %v1925
      %v1963 = vunpack.c.l.b16 %v1926
      %v1964 = vunpack.c.l.b16 %v1927
      %v1965 = vunpack.c.l.b16 %v1928
      %v1966 = vunpack.c.l.b16 %v1929
      %v1967 = vunpack.c.l.b16 %v1930
      %v1968 = vunpack.c.l.b16 %v1931
      %v1969 = vunpack.c.l.b16 %v1932
      %v1970 = vunpack.c.l.b16 %v1933
      %v1971 = vunpack.c.l.b16 %v1934
      %v1972 = vunpack.c.l.b16 %v1935
      %v1973 = vunpack.c.l.b16 %v1936
      %v1974 = vunpack.c.l.b16 %v1937
      %v1975 = vunpack.c.l.b16 %v1938
      %v1976 = vunpack.c.l.b16 %v1939
      %v1977 = vunpack.c.l.b16 %v1940
      %v1978 = vpack.c.b16 %v1963, %v1962
      %v1979 = vpack.c.b16 %v1965, %v1964
      %v1980 = vpack.c.b16 %v1967, %v1966
      %v1981 = vpack.c.b16 %v1969, %v1968
      %v1982 = vpack.c.b16 %v1971, %v1970
      %v1983 = vpack.c.b16 %v1973, %v1972
      %v1984 = vpack.c.b16 %v1975, %v1974
      %v1985 = vpack.c.b16 %v1977, %v1976
      %1994 = vmatpush.bf16.msra.mxu0 %v1985
      %1995 = vmatpush.bf16.msra.mxu0 %v1984
      %1996 = vmatpush.bf16.msra.mxu0 %v1983
      %1997 = vmatpush.bf16.msra.mxu0 %v1982
      %1998 = vmatpush.bf16.msra.mxu0 %v1981
      %1999 = vmatpush.bf16.msra.mxu0 %v1980
      %2000 = vmatpush.bf16.msra.mxu0 %v1979
      %2001 = vmatpush.bf16.msra.mxu0 %v1978
      %2002 = vmatmul.bf16.gmra.mxu0 %v1923
      %v2003 = vpop.f32.mrf.mxu0
      %v2004 = vadd.f32 %v1944, %v2003
      %v2005 = vpop.f32.mrf.mxu0
      %v2006 = vadd.f32 %v1944, %v2005
      %2007 = vdwg.mxu0
      %v2008 = vmax.f32 %v2004, 0.0
      %v2009 = vmax.f32 %v2006, 0.0
      %v2010 = vpack.c.bf16 %v2009, %v2008
      %s2011 = scalar_lea.vmem %s19, 64
      %v2012 = vld [vmem:[%s2011] sm:$0xf]
      %v2013 = vld [vmem:[%s2011 + $0x4] sm:$0xf]
      %v2014 = vld [vmem:[%s2011 + $0x8] sm:$0xf]
      %v2015 = vld [vmem:[%s2011 + $0xc] sm:$0xf]
      %v2016 = vld [vmem:[%s2011 + $0x10] sm:$0xf]
      %v2017 = vld [vmem:[%s2011 + $0x14] sm:$0xf]
      %v2018 = vld [vmem:[%s2011 + $0x18] sm:$0xf]
      %v2019 = vld [vmem:[%s2011 + $0x1c] sm:$0xf]
      %v2020 = vld [vmem:[%s2011 + $0x20] sm:$0xf]
      %v2021 = vld [vmem:[%s2011 + $0x24] sm:$0xf]
      %v2022 = vld [vmem:[%s2011 + $0x28] sm:$0xf]
      %v2023 = vld [vmem:[%s2011 + $0x2c] sm:$0xf]
      %v2024 = vld [vmem:[%s2011 + $0x30] sm:$0xf]
      %v2025 = vld [vmem:[%s2011 + $0x34] sm:$0xf]
      %v2026 = vld [vmem:[%s2011 + $0x38] sm:$0xf]
      %v2027 = vld [vmem:[%s2011 + $0x3c] sm:$0xf]
      %v2044 = vunpack.c.l.b16 %v2012
      %v2045 = vunpack.c.l.b16 %v2013
      %v2046 = vunpack.c.l.b16 %v2014
      %v2047 = vunpack.c.l.b16 %v2015
      %v2048 = vunpack.c.l.b16 %v2016
      %v2049 = vunpack.c.l.b16 %v2017
      %v2050 = vunpack.c.l.b16 %v2018
      %v2051 = vunpack.c.l.b16 %v2019
      %v2052 = vunpack.c.l.b16 %v2020
      %v2053 = vunpack.c.l.b16 %v2021
      %v2054 = vunpack.c.l.b16 %v2022
      %v2055 = vunpack.c.l.b16 %v2023
      %v2056 = vunpack.c.l.b16 %v2024
      %v2057 = vunpack.c.l.b16 %v2025
      %v2058 = vunpack.c.l.b16 %v2026
      %v2059 = vunpack.c.l.b16 %v2027
      %v2060 = vpack.c.b16 %v2045, %v2044
      %v2061 = vpack.c.b16 %v2047, %v2046
      %v2062 = vpack.c.b16 %v2049, %v2048
      %v2063 = vpack.c.b16 %v2051, %v2050
      %v2064 = vpack.c.b16 %v2053, %v2052
      %v2065 = vpack.c.b16 %v2055, %v2054
      %v2066 = vpack.c.b16 %v2057, %v2056
      %v2067 = vpack.c.b16 %v2059, %v2058
      %2076 = vmatpush.bf16.msra.mxu0 %v2067
      %2077 = vmatpush.bf16.msra.mxu0 %v2066
      %2078 = vmatpush.bf16.msra.mxu0 %v2065
      %2079 = vmatpush.bf16.msra.mxu0 %v2064
      %2080 = vmatpush.bf16.msra.mxu0 %v2063
      %2081 = vmatpush.bf16.msra.mxu0 %v2062
      %2082 = vmatpush.bf16.msra.mxu0 %v2061
      %2083 = vmatpush.bf16.msra.mxu0 %v2060
      %2084 = vmatmul.bf16.gmra.mxu0 %v2010
      %v2085 = vpop.f32.mrf.mxu0
      %v2086 = vadd.f32 0.0, %v2085
      %v2087 = vpop.f32.mrf.mxu0
      %v2088 = vadd.f32 0.0, %v2087
      %2089 = vdwg.mxu0
      %v2090 = vadd.f32 %v1921, %v2086
      %v2091 = vadd.f32 %v1922, %v2088
      %s2092 = scalar_lea.vmem %s20, 1
      %v2093 = vld [vmem:[%s2092] sm:$0x1]
      %v2095 = vperm.slane %v2093, 0
      %v2097 = vadd.f32 %v2090, %v2095
      %v2098 = vadd.f32 %v2091, %v2095
      %v2099 = vpack.c.bf16 %v2098, %v2097
      %v2100 = vld [vmem:[%s21] sm:$0xf]
      %v2101 = vld [vmem:[%s21 + $0x4] sm:$0xf]
      %v2102 = vld [vmem:[%s21 + $0x8] sm:$0xf]
      %v2103 = vld [vmem:[%s21 + $0xc] sm:$0xf]
      %v2104 = vld [vmem:[%s21 + $0x10] sm:$0xf]
      %v2105 = vld [vmem:[%s21 + $0x14] sm:$0xf]
      %v2106 = vld [vmem:[%s21 + $0x18] sm:$0xf]
      %v2107 = vld [vmem:[%s21 + $0x1c] sm:$0xf]
      %v2108 = vld [vmem:[%s21 + $0x20] sm:$0xf]
      %v2109 = vld [vmem:[%s21 + $0x24] sm:$0xf]
      %v2110 = vld [vmem:[%s21 + $0x28] sm:$0xf]
      %v2111 = vld [vmem:[%s21 + $0x2c] sm:$0xf]
      %v2112 = vld [vmem:[%s21 + $0x30] sm:$0xf]
      %v2113 = vld [vmem:[%s21 + $0x34] sm:$0xf]
      %v2114 = vld [vmem:[%s21 + $0x38] sm:$0xf]
      %v2115 = vld [vmem:[%s21 + $0x3c] sm:$0xf]
      %v2116 = vld [vmem:[%s22] sm:$0x1]
      %v2118 = vperm.slane %v2116, 0
      %v2136 = vunpack.c.l.b16 %v2100
      %v2137 = vunpack.c.l.b16 %v2101
      %v2138 = vunpack.c.l.b16 %v2102
      %v2139 = vunpack.c.l.b16 %v2103
      %v2140 = vunpack.c.l.b16 %v2104
      %v2141 = vunpack.c.l.b16 %v2105
      %v2142 = vunpack.c.l.b16 %v2106
      %v2143 = vunpack.c.l.b16 %v2107
      %v2144 = vunpack.c.l.b16 %v2108
      %v2145 = vunpack.c.l.b16 %v2109
      %v2146 = vunpack.c.l.b16 %v2110
      %v2147 = vunpack.c.l.b16 %v2111
      %v2148 = vunpack.c.l.b16 %v2112
      %v2149 = vunpack.c.l.b16 %v2113
      %v2150 = vunpack.c.l.b16 %v2114
      %v2151 = vunpack.c.l.b16 %v2115
      %v2152 = vpack.c.b16 %v2137, %v2136
      %v2153 = vpack.c.b16 %v2139, %v2138
      %v2154 = vpack.c.b16 %v2141, %v2140
      %v2155 = vpack.c.b16 %v2143, %v2142
      %v2156 = vpack.c.b16 %v2145, %v2144
      %v2157 = vpack.c.b16 %v2147, %v2146
      %v2158 = vpack.c.b16 %v2149, %v2148
      %v2159 = vpack.c.b16 %v2151, %v2150
      %2168 = vmatpush.bf16.msra.mxu0 %v2159
      %2169 = vmatpush.bf16.msra.mxu0 %v2158
      %2170 = vmatpush.bf16.msra.mxu0 %v2157
      %2171 = vmatpush.bf16.msra.mxu0 %v2156
      %2172 = vmatpush.bf16.msra.mxu0 %v2155
      %2173 = vmatpush.bf16.msra.mxu0 %v2154
      %2174 = vmatpush.bf16.msra.mxu0 %v2153
      %2175 = vmatpush.bf16.msra.mxu0 %v2152
      %2176 = vmatmul.bf16.gmra.mxu0 %v2099
      %v2177 = vpop.f32.mrf.mxu0
      %v2178 = vadd.f32 %v2118, %v2177
      %v2179 = vpop.f32.mrf.mxu0
      %v2180 = vadd.f32 %v2118, %v2179
      %2181 = vdwg.mxu0
      %2182 = vst.msk [vmem:[%s770] sm:$0xff] %vm777, %v2178
      %2183 = vst.msk [vmem:[%s770 + $0x8] sm:$0xff] %vm777, %v2180
      %s2184 = smul.u32 2, %s39
      %p2185 = scmp.lt.s32.totalorder %s38, 1
      %s2186 = scalar_select %p2185, %s38, 1
      %p2187 = scmp.lt.s32.totalorder %s2184, 1
      %s2188 = scalar_select %p2187, %s2184, 1
      %s2189 = smul.addr %s2186, 2
      %s2190 = sadd.s32 %s2188, %s2189
      %s2191 = smul.addr %s2190, 8
      %s2192 = scalar_lea.vmem %s23, %s2191
      // Predicated region
      $region113: #{blstf_forward.1} parent=111 // pred_check
        %p2193 = pneg %p561
      $region114: #{blstf_forward.1} parent=111 // pred_check_branch
        %2195 = sbr.rel (%p2193) target = $region116
      $region115: #{blstf_forward.1} parent=111 // pred_region
        %s2196 = smul.u32 2, %s39
      $region116: #{blstf_forward.1} parent=111 // pred_fallthru
        _
    $region112: #{blstf_forward.1} parent=5 // pred_fallthru
      _
    %p2197 = scmp.le.s32.totalorder 2, %s29
    // Predicated region
    $region117: #{blstf_forward.1} parent=5 // pred_check
      %p2198 = pneg %p2197
    $region118: #{blstf_forward.1} parent=5 // pred_check_branch
      %2200 = sbr.rel (%p2198) target = $region120
    $region119: #{blstf_forward.1} parent=5 // pred_region
      %s2201 = ssub.s32 %s29, 2
      // Predicated region
      $region121: #{blstf_forward.1} parent=119 // pred_check
        %p2202 = pneg %p567
      $region122: #{blstf_forward.1} parent=119 // pred_check_branch
        %2204 = sbr.rel (%p2202) target = $region124
      $region123: #{blstf_forward.1} parent=119 // pred_region
        %s2205 = smul.u32 2, %s41
        %p2206 = scmp.lt.s32.totalorder %s40, 1
        %s2207 = scalar_select %p2206, %s40, 1
        %p2208 = scmp.lt.s32.totalorder %s2205, 1
        %s2209 = scalar_select %p2208, %s2205, 1
        %s2210 = smul.addr %s2207, 2
        %s2211 = sadd.s32 %s2209, %s2210
        %s2212 = smul.addr %s2211, 8
        %s2213 = scalar_lea.vmem %s23, %s2212
      $region124: #{blstf_forward.1} parent=119 // pred_fallthru
        _
    $region120: #{blstf_forward.1} parent=5 // pred_fallthru
      _
  $region6: #{blstf_forward.1} parent=0 // loop_footer
    %s33 = sadd.s32 1, %s29
  $region7: #{blstf_forward.1} parent=0 // loop_footer_branch
    %28 = sbr.rel target = $region3
  $region8: #{blstf_forward.1} parent=0 // loop_exit
    _

</llo_original>
